<compile_context>
chip_gen: v7x
topology: tpu7x:2x2x1
jax: 0.10.0
libtpu: 0.0.40
codegen_flags: <defaults>
</compile_context>

<pallas_src>
import jax
import jax.numpy as jnp
from jax.experimental import pallas as pl
from jax.experimental.pallas import tpu as pltpu


# ----------------------------------------------------------------------------
# Fused neck kernel: conv3x3+BN (stacked branches) on z and x, then depthwise xcorr
# ----------------------------------------------------------------------------
def _neck_kernel(z_ref, x_ref, wz_ref, wx_ref, sz_ref, bz_ref, sx_ref, bx_ref, o_ref):
    # z_ref: (1, Hz, Wz, C)  f32     x_ref: (1, Hx, Wx, C) f32
    # wz_ref/wx_ref: (3, 3, C, 2C)   bf16  stacked [c-branch | r-branch] weights
    # sz/bz/sx/bx:   (1, 2C)         f32   folded BN scale / shift (conv bias included)
    # o_ref: (1, Ho, Wo, 2C) f32     channels [0:C] = c_out, [C:2C] = r_out

    def conv3x3_bn(x, w_ref, scale, shift):
        # x: (H, W, Cin) f32 value; w_ref: (3, 3, Cin, Cout) bf16 Ref
        H, W, Cin = x.shape
        Cout = w_ref.shape[3]
        Ho, Wo = H - 2, W - 2
        # Flatten spatial dims (tile-aligned since W % 8 == 0 for f32).
        x_flat = x.reshape(H * W, Cin)

        # dy = 0 initializes the per-dx accumulators; dy = 1, 2 accumulate.
        xs0 = x_flat[0:Ho * W, :].astype(jnp.bfloat16)
        taps = [jnp.dot(xs0, w_ref[0, dx], preferred_element_type=jnp.float32)
                for dx in range(3)]
        for dy in range(1, 3):
            xs = x_flat[dy * W: dy * W + Ho * W, :].astype(jnp.bfloat16)
            for dx in range(3):
                taps[dx] = taps[dx] + jnp.dot(xs, w_ref[dy, dx],
                                              preferred_element_type=jnp.float32)

        t0, t1, t2 = (t.reshape(Ho, W, Cout) for t in taps)
        y = t0[:, 0:Wo, :] + t1[:, 1:1 + Wo, :] + t2[:, 2:2 + Wo, :]
        return y * scale + shift                      # (Ho, Wo, Cout) f32

    def xcorr_dw(xf, kf):
        # xf: (Hxo, Wxo, C2) f32 search feature; kf: (Hk, Wk, C2) f32 template
        Hxo, Wxo, C2 = xf.shape
        Hk, Wk, _ = kf.shape
        Ho, Wo = Hxo - Hk + 1, Wxo - Wk + 1
        acc = jnp.zeros((Ho, Wo, C2), jnp.float32)
        for q in range(Wk):                           # hoist the W slice out of p loop
            xq = xf[:, q:q + Wo, :]
            for p in range(Hk):
                acc = acc + xq[p:p + Ho] * kf[p, q]
        return acc

    zk = conv3x3_bn(z_ref[0], wz_ref, sz_ref[0], bz_ref[0])   # (Hz-2, Wz-2, 2C)
    xf = conv3x3_bn(x_ref[0], wx_ref, sx_ref[0], bx_ref[0])   # (Hx-2, Wx-2, 2C)
    o_ref[0] = xcorr_dw(xf, zk).astype(o_ref.dtype)


# ----------------------------------------------------------------------------
# Wrapper: NCHW <-> NHWC plumbing, branch stacking, single pallas_call
# ----------------------------------------------------------------------------
def siamfcpp_neck(z_nchw, x_nchw, params):
    N, C, Hz, Wz = z_nchw.shape
    _, _, Hx, Wx = x_nchw.shape
    C2 = 2 * C

    # NCHW -> NHWC (channels on the lane axis)
    z = jnp.transpose(z_nchw, (0, 2, 3, 1))
    x = jnp.transpose(x_nchw, (0, 2, 3, 1))

    # Stack the two branches that share an input along Cout: [c | r]; weights in bf16.
    wz = jnp.concatenate([params["c_z_k"][0], params["r_z_k"][0]], axis=-1).astype(jnp.bfloat16)
    wx = jnp.concatenate([params["c_x"][0],  params["r_x"][0]],  axis=-1).astype(jnp.bfloat16)
    sz = jnp.concatenate([params["c_z_k"][1], params["r_z_k"][1]], axis=-1)
    bz = jnp.concatenate([params["c_z_k"][2], params["r_z_k"][2]], axis=-1)
    sx = jnp.concatenate([params["c_x"][1],  params["r_x"][1]],  axis=-1)
    bx = jnp.concatenate([params["c_x"][2],  params["r_x"][2]],  axis=-1)

    Hzo, Wzo = Hz - 2, Wz - 2
    Hxo, Wxo = Hx - 2, Wx - 2
    Ho, Wo = Hxo - Hzo + 1, Wxo - Wzo + 1

    out = pl.pallas_call(
        _neck_kernel,
        out_shape=jax.ShapeDtypeStruct((N, Ho, Wo, C2), jnp.float32),
        grid=(N,),
        in_specs=[
            pl.BlockSpec((1, Hz, Wz, C), lambda n: (n, 0, 0, 0)),
            pl.BlockSpec((1, Hx, Wx, C), lambda n: (n, 0, 0, 0)),
            pl.BlockSpec((3, 3, C, C2), lambda n: (0, 0, 0, 0)),
            pl.BlockSpec((3, 3, C, C2), lambda n: (0, 0, 0, 0)),
            pl.BlockSpec((1, C2), lambda n: (0, 0)),
            pl.BlockSpec((1, C2), lambda n: (0, 0)),
            pl.BlockSpec((1, C2), lambda n: (0, 0)),
            pl.BlockSpec((1, C2), lambda n: (0, 0)),
        ],
        out_specs=pl.BlockSpec((1, Ho, Wo, C2), lambda n: (n, 0, 0, 0)),
        compiler_params=pltpu.CompilerParams(dimension_semantics=("parallel",)),
    )(z, x, wz, wx, sz, bz, sx, bx)

    # Split stacked channels and go back to NCHW (PyTorch convention).
    c_out = jnp.transpose(out[..., :C], (0, 3, 1, 2))
    r_out = jnp.transpose(out[..., C:], (0, 3, 1, 2))
    return c_out, r_out


# ----------------------------------------------------------------------------
# Parameter setup (deterministic, synthetic): conv weight + eval-mode BN folded
# ----------------------------------------------------------------------------
def make_branch_params(key, C):
    kw, kb, kg, kbe, km, kv = jax.random.split(key, 6)
    w = 0.01 * jax.random.normal(kw, (3, 3, C, C), jnp.float32)       # HWIO
    b = 0.01 * jax.random.normal(kb, (C,), jnp.float32)               # conv bias
    gamma = 1.0 + 0.1 * jax.random.normal(kg, (C,), jnp.float32)
    beta = 0.1 * jax.random.normal(kbe, (C,), jnp.float32)
    mean = 0.1 * jax.random.normal(km, (C,), jnp.float32)
    var = 1.0 + 0.1 * jnp.abs(jax.random.normal(kv, (C,), jnp.float32))
    eps = 1e-5
    scale = gamma / jnp.sqrt(var + eps)
    shift = (b - mean) * scale + beta
    return w, scale.reshape(1, C), shift.reshape(1, C)


# ----------------------------------------------------------------------------
# Pure-JAX reference (mirrors the kernel's intentional bf16 rounding of the
# conv operands; BN affine and xcorr in f32, matching the kernel exactly)
# ----------------------------------------------------------------------------
def _bf16_round(a):
    return a.astype(jnp.bfloat16).astype(jnp.float32)


def _ref_conv(inp_nhwc, w, scale, shift):
    y = jax.lax.conv_general_dilated(
        _bf16_round(inp_nhwc), _bf16_round(w), (1, 1), "VALID",
        dimension_numbers=("NHWC", "HWIO", "NHWC"),
        precision=jax.lax.Precision.HIGHEST)
    return y * scale[0] + shift[0]


def _ref_xcorr(xf, kf):
    _, Hx, Wx, _ = xf.shape
    _, Hk, Wk, _ = kf.shape
    Ho, Wo = Hx - Hk + 1, Wx - Wk + 1
    out = jnp.zeros((xf.shape[0], Ho, Wo, xf.shape[3]), jnp.float32)
    for p in range(Hk):
        for q in range(Wk):
            out = out + xf[:, p:p + Ho, q:q + Wo, :] * kf[:, p:p + 1, q:q + 1, :]
    return out


def ref_forward(z_nchw, x_nchw, params):
    z = jnp.transpose(z_nchw, (0, 2, 3, 1))
    x = jnp.transpose(x_nchw, (0, 2, 3, 1))
    c_z_k = _ref_conv(z, *params["c_z_k"])
    r_z_k = _ref_conv(z, *params["r_z_k"])
    c_x = _ref_conv(x, *params["c_x"])
    r_x = _ref_conv(x, *params["r_x"])
    r_out = _ref_xcorr(r_x, r_z_k)
    c_out = _ref_xcorr(c_x, c_z_k)
    return (jnp.transpose(c_out, (0, 3, 1, 2)),
            jnp.transpose(r_out, (0, 3, 1, 2)))


if __name__ == "__main__":
    key = jax.random.PRNGKey(0)
    N, C = 2, 32            # batch, hidden_dim
    Hz = Wz = 8             # template (z) spatial
    Hx = Wx = 16            # search (x) spatial

    kz, kx, kp = jax.random.split(key, 3)
    z_nchw = jax.random.normal(kz, (N, C, Hz, Wz), jnp.float32)
    x_nchw = jax.random.normal(kx, (N, C, Hx, Wx), jnp.float32)

    branch_keys = jax.random.split(kp, 4)
    params = {
        "c_z_k": make_branch_params(branch_keys[0], C),
        "r_z_k": make_branch_params(branch_keys[1], C),
        "c_x":   make_branch_params(branch_keys[2], C),
        "r_x":   make_branch_params(branch_keys[3], C),
    }

    c_out, r_out = jax.jit(siamfcpp_neck)(z_nchw, x_nchw, params)
    jax.block_until_ready((c_out, r_out))

    # shapes match PyTorch: conv shrinks by 2, xcorr is a valid correlation
    assert c_out.shape == (N, C, (Hx - 2) - (Hz - 2) + 1, (Wx - 2) - (Wz - 2) + 1)
    assert r_out.shape == c_out.shape

    c_ref, r_ref = ref_forward(z_nchw, x_nchw, params)
    assert jnp.allclose(c_out, c_ref, atol=2e-3, rtol=2e-3)
    assert jnp.allclose(r_out, r_ref, atol=2e-3, rtol=2e-3)

    print("KERNEL_OK")
</pallas_src>

<mosaic_0001>
module attributes {stable_mosaic.version = 11 : i64} {
  func.func @_neck_kernel(%arg0: i32, %arg1: memref<1x8x8x32xf32, #tpu.memory_space<vmem>>, %arg2: memref<1x16x16x32xf32, #tpu.memory_space<vmem>>, %arg3: memref<3x3x32x64xbf16, #tpu.memory_space<vmem>>, %arg4: memref<3x3x32x64xbf16, #tpu.memory_space<vmem>>, %arg5: memref<1x64xf32, #tpu.memory_space<vmem>>, %arg6: memref<1x64xf32, #tpu.memory_space<vmem>>, %arg7: memref<1x64xf32, #tpu.memory_space<vmem>>, %arg8: memref<1x64xf32, #tpu.memory_space<vmem>>, %arg9: memref<1x9x9x64xf32, #tpu.memory_space<vmem>>) attributes {dimension_semantics = [#tpu.dimension_semantics<parallel>], iteration_bounds = array<i64: 2>, scalar_prefetch = 0 : i64, scratch_operands = 0 : i64, tpu.core_type = #tpu.core_type<tc>, window_params = [{transform_indices = @transform_0, window_bounds = array<i64: 1, 8, 8, 32>}, {transform_indices = @transform_1, window_bounds = array<i64: 1, 16, 16, 32>}, {pipeline_mode = #tpu.pipeline_mode<synchronous>, transform_indices = @transform_2, window_bounds = array<i64: 3, 3, 32, 64>}, {pipeline_mode = #tpu.pipeline_mode<synchronous>, transform_indices = @transform_3, window_bounds = array<i64: 3, 3, 32, 64>}, {pipeline_mode = #tpu.pipeline_mode<synchronous>, transform_indices = @transform_4, window_bounds = array<i64: 1, 64>}, {pipeline_mode = #tpu.pipeline_mode<synchronous>, transform_indices = @transform_5, window_bounds = array<i64: 1, 64>}, {pipeline_mode = #tpu.pipeline_mode<synchronous>, transform_indices = @transform_6, window_bounds = array<i64: 1, 64>}, {pipeline_mode = #tpu.pipeline_mode<synchronous>, transform_indices = @transform_7, window_bounds = array<i64: 1, 64>}, {transform_indices = @transform_8, window_bounds = array<i64: 1, 9, 9, 64>}]} {
    %c0 = arith.constant 0 : index
    %c0_0 = arith.constant 0 : index
    %c0_1 = arith.constant 0 : index
    %c0_2 = arith.constant 0 : index
    %0 = vector.load %arg1[%c0, %c0_0, %c0_1, %c0_2] : memref<1x8x8x32xf32, #tpu.memory_space<vmem>>, vector<1x8x8x32xf32>
    %1 = vector.shape_cast %0 : vector<1x8x8x32xf32> to vector<8x8x32xf32>
    %c0_3 = arith.constant 0 : index
    %c0_4 = arith.constant 0 : index
    %2 = vector.load %arg5[%c0_3, %c0_4] : memref<1x64xf32, #tpu.memory_space<vmem>>, vector<1x64xf32>
    %3 = vector.shape_cast %2 : vector<1x64xf32> to vector<64xf32>
    %c0_5 = arith.constant 0 : index
    %c0_6 = arith.constant 0 : index
    %4 = vector.load %arg6[%c0_5, %c0_6] : memref<1x64xf32, #tpu.memory_space<vmem>>, vector<1x64xf32>
    %5 = vector.shape_cast %4 : vector<1x64xf32> to vector<64xf32>
    %6 = vector.shape_cast %1 : vector<8x8x32xf32> to vector<64x32xf32>
    %7 = vector.extract_strided_slice %6 {offsets = [0, 0], sizes = [48, 32], strides = [1, 1]} : vector<64x32xf32> to vector<48x32xf32>
    %8 = arith.truncf %7 : vector<48x32xf32> to vector<48x32xbf16>
    %c0_7 = arith.constant 0 : index
    %c0_8 = arith.constant 0 : index
    %c0_9 = arith.constant 0 : index
    %c0_10 = arith.constant 0 : index
    %9 = vector.load %arg3[%c0_7, %c0_8, %c0_9, %c0_10] : memref<3x3x32x64xbf16, #tpu.memory_space<vmem>>, vector<1x1x32x64xbf16>
    %10 = vector.shape_cast %9 : vector<1x1x32x64xbf16> to vector<32x64xbf16>
    %cst = arith.constant dense<0.000000e+00> : vector<48x64xf32>
    %11 = tpu.matmul %8, %10, %cst {dimension_numbers = #tpu.dot_dimension_numbers<[1], [0], [0], [1], [0, 0, 1, 1], [], []>} : vector<48x32xbf16>, vector<32x64xbf16>, vector<48x64xf32> -> vector<48x64xf32>
    %c0_11 = arith.constant 0 : index
    %c1 = arith.constant 1 : index
    %c0_12 = arith.constant 0 : index
    %c0_13 = arith.constant 0 : index
    %12 = vector.load %arg3[%c0_11, %c1, %c0_12, %c0_13] : memref<3x3x32x64xbf16, #tpu.memory_space<vmem>>, vector<1x1x32x64xbf16>
    %13 = vector.shape_cast %12 : vector<1x1x32x64xbf16> to vector<32x64xbf16>
    %cst_14 = arith.constant dense<0.000000e+00> : vector<48x64xf32>
    %14 = tpu.matmul %8, %13, %cst_14 {dimension_numbers = #tpu.dot_dimension_numbers<[1], [0], [0], [1], [0, 0, 1, 1], [], []>} : vector<48x32xbf16>, vector<32x64xbf16>, vector<48x64xf32> -> vector<48x64xf32>
    %c0_15 = arith.constant 0 : index
    %c2 = arith.constant 2 : index
    %c0_16 = arith.constant 0 : index
    %c0_17 = arith.constant 0 : index
    %15 = vector.load %arg3[%c0_15, %c2, %c0_16, %c0_17] : memref<3x3x32x64xbf16, #tpu.memory_space<vmem>>, vector<1x1x32x64xbf16>
    %16 = vector.shape_cast %15 : vector<1x1x32x64xbf16> to vector<32x64xbf16>
    %cst_18 = arith.constant dense<0.000000e+00> : vector<48x64xf32>
    %17 = tpu.matmul %8, %16, %cst_18 {dimension_numbers = #tpu.dot_dimension_numbers<[1], [0], [0], [1], [0, 0, 1, 1], [], []>} : vector<48x32xbf16>, vector<32x64xbf16>, vector<48x64xf32> -> vector<48x64xf32>
    %18 = vector.extract_strided_slice %6 {offsets = [8, 0], sizes = [48, 32], strides = [1, 1]} : vector<64x32xf32> to vector<48x32xf32>
    %19 = arith.truncf %18 : vector<48x32xf32> to vector<48x32xbf16>
    %c1_19 = arith.constant 1 : index
    %c0_20 = arith.constant 0 : index
    %c0_21 = arith.constant 0 : index
    %c0_22 = arith.constant 0 : index
    %20 = vector.load %arg3[%c1_19, %c0_20, %c0_21, %c0_22] : memref<3x3x32x64xbf16, #tpu.memory_space<vmem>>, vector<1x1x32x64xbf16>
    %21 = vector.shape_cast %20 : vector<1x1x32x64xbf16> to vector<32x64xbf16>
    %cst_23 = arith.constant dense<0.000000e+00> : vector<48x64xf32>
    %22 = tpu.matmul %19, %21, %cst_23 {dimension_numbers = #tpu.dot_dimension_numbers<[1], [0], [0], [1], [0, 0, 1, 1], [], []>} : vector<48x32xbf16>, vector<32x64xbf16>, vector<48x64xf32> -> vector<48x64xf32>
    %23 = arith.addf %11, %22 : vector<48x64xf32>
    %c1_24 = arith.constant 1 : index
    %c1_25 = arith.constant 1 : index
    %c0_26 = arith.constant 0 : index
    %c0_27 = arith.constant 0 : index
    %24 = vector.load %arg3[%c1_24, %c1_25, %c0_26, %c0_27] : memref<3x3x32x64xbf16, #tpu.memory_space<vmem>>, vector<1x1x32x64xbf16>
    %25 = vector.shape_cast %24 : vector<1x1x32x64xbf16> to vector<32x64xbf16>
    %cst_28 = arith.constant dense<0.000000e+00> : vector<48x64xf32>
    %26 = tpu.matmul %19, %25, %cst_28 {dimension_numbers = #tpu.dot_dimension_numbers<[1], [0], [0], [1], [0, 0, 1, 1], [], []>} : vector<48x32xbf16>, vector<32x64xbf16>, vector<48x64xf32> -> vector<48x64xf32>
    %27 = arith.addf %14, %26 : vector<48x64xf32>
    %c1_29 = arith.constant 1 : index
    %c2_30 = arith.constant 2 : index
    %c0_31 = arith.constant 0 : index
    %c0_32 = arith.constant 0 : index
    %28 = vector.load %arg3[%c1_29, %c2_30, %c0_31, %c0_32] : memref<3x3x32x64xbf16, #tpu.memory_space<vmem>>, vector<1x1x32x64xbf16>
    %29 = vector.shape_cast %28 : vector<1x1x32x64xbf16> to vector<32x64xbf16>
    %cst_33 = arith.constant dense<0.000000e+00> : vector<48x64xf32>
    %30 = tpu.matmul %19, %29, %cst_33 {dimension_numbers = #tpu.dot_dimension_numbers<[1], [0], [0], [1], [0, 0, 1, 1], [], []>} : vector<48x32xbf16>, vector<32x64xbf16>, vector<48x64xf32> -> vector<48x64xf32>
    %31 = arith.addf %17, %30 : vector<48x64xf32>
    %32 = vector.extract_strided_slice %6 {offsets = [16, 0], sizes = [48, 32], strides = [1, 1]} : vector<64x32xf32> to vector<48x32xf32>
    %33 = arith.truncf %32 : vector<48x32xf32> to vector<48x32xbf16>
    %c2_34 = arith.constant 2 : index
    %c0_35 = arith.constant 0 : index
    %c0_36 = arith.constant 0 : index
    %c0_37 = arith.constant 0 : index
    %34 = vector.load %arg3[%c2_34, %c0_35, %c0_36, %c0_37] : memref<3x3x32x64xbf16, #tpu.memory_space<vmem>>, vector<1x1x32x64xbf16>
    %35 = vector.shape_cast %34 : vector<1x1x32x64xbf16> to vector<32x64xbf16>
    %cst_38 = arith.constant dense<0.000000e+00> : vector<48x64xf32>
    %36 = tpu.matmul %33, %35, %cst_38 {dimension_numbers = #tpu.dot_dimension_numbers<[1], [0], [0], [1], [0, 0, 1, 1], [], []>} : vector<48x32xbf16>, vector<32x64xbf16>, vector<48x64xf32> -> vector<48x64xf32>
    %37 = arith.addf %23, %36 : vector<48x64xf32>
    %c2_39 = arith.constant 2 : index
    %c1_40 = arith.constant 1 : index
    %c0_41 = arith.constant 0 : index
    %c0_42 = arith.constant 0 : index
    %38 = vector.load %arg3[%c2_39, %c1_40, %c0_41, %c0_42] : memref<3x3x32x64xbf16, #tpu.memory_space<vmem>>, vector<1x1x32x64xbf16>
    %39 = vector.shape_cast %38 : vector<1x1x32x64xbf16> to vector<32x64xbf16>
    %cst_43 = arith.constant dense<0.000000e+00> : vector<48x64xf32>
    %40 = tpu.matmul %33, %39, %cst_43 {dimension_numbers = #tpu.dot_dimension_numbers<[1], [0], [0], [1], [0, 0, 1, 1], [], []>} : vector<48x32xbf16>, vector<32x64xbf16>, vector<48x64xf32> -> vector<48x64xf32>
    %41 = arith.addf %27, %40 : vector<48x64xf32>
    %c2_44 = arith.constant 2 : index
    %c2_45 = arith.constant 2 : index
    %c0_46 = arith.constant 0 : index
    %c0_47 = arith.constant 0 : index
    %42 = vector.load %arg3[%c2_44, %c2_45, %c0_46, %c0_47] : memref<3x3x32x64xbf16, #tpu.memory_space<vmem>>, vector<1x1x32x64xbf16>
    %43 = vector.shape_cast %42 : vector<1x1x32x64xbf16> to vector<32x64xbf16>
    %cst_48 = arith.constant dense<0.000000e+00> : vector<48x64xf32>
    %44 = tpu.matmul %33, %43, %cst_48 {dimension_numbers = #tpu.dot_dimension_numbers<[1], [0], [0], [1], [0, 0, 1, 1], [], []>} : vector<48x32xbf16>, vector<32x64xbf16>, vector<48x64xf32> -> vector<48x64xf32>
    %45 = arith.addf %31, %44 : vector<48x64xf32>
    %46 = vector.shape_cast %37 : vector<48x64xf32> to vector<6x8x64xf32>
    %47 = vector.shape_cast %41 : vector<48x64xf32> to vector<6x8x64xf32>
    %48 = vector.shape_cast %45 : vector<48x64xf32> to vector<6x8x64xf32>
    %49 = vector.extract_strided_slice %46 {offsets = [0, 0, 0], sizes = [6, 6, 64], strides = [1, 1, 1]} : vector<6x8x64xf32> to vector<6x6x64xf32>
    %50 = vector.extract_strided_slice %47 {offsets = [0, 1, 0], sizes = [6, 6, 64], strides = [1, 1, 1]} : vector<6x8x64xf32> to vector<6x6x64xf32>
    %51 = arith.addf %49, %50 : vector<6x6x64xf32>
    %52 = vector.extract_strided_slice %48 {offsets = [0, 2, 0], sizes = [6, 6, 64], strides = [1, 1, 1]} : vector<6x8x64xf32> to vector<6x6x64xf32>
    %53 = arith.addf %51, %52 : vector<6x6x64xf32>
    %54 = vector.shape_cast %3 : vector<64xf32> to vector<1x1x64xf32>
    %55 = vector.broadcast %54 : vector<1x1x64xf32> to vector<6x6x64xf32>
    %56 = arith.mulf %53, %55 : vector<6x6x64xf32>
    %57 = vector.shape_cast %5 : vector<64xf32> to vector<1x1x64xf32>
    %58 = vector.broadcast %57 : vector<1x1x64xf32> to vector<6x6x64xf32>
    %59 = arith.addf %56, %58 : vector<6x6x64xf32>
    %c0_49 = arith.constant 0 : index
    %c0_50 = arith.constant 0 : index
    %c0_51 = arith.constant 0 : index
    %c0_52 = arith.constant 0 : index
    %60 = vector.load %arg2[%c0_49, %c0_50, %c0_51, %c0_52] : memref<1x16x16x32xf32, #tpu.memory_space<vmem>>, vector<1x16x16x32xf32>
    %61 = vector.shape_cast %60 : vector<1x16x16x32xf32> to vector<16x16x32xf32>
    %c0_53 = arith.constant 0 : index
    %c0_54 = arith.constant 0 : index
    %62 = vector.load %arg7[%c0_53, %c0_54] : memref<1x64xf32, #tpu.memory_space<vmem>>, vector<1x64xf32>
    %63 = vector.shape_cast %62 : vector<1x64xf32> to vector<64xf32>
    %c0_55 = arith.constant 0 : index
    %c0_56 = arith.constant 0 : index
    %64 = vector.load %arg8[%c0_55, %c0_56] : memref<1x64xf32, #tpu.memory_space<vmem>>, vector<1x64xf32>
    %65 = vector.shape_cast %64 : vector<1x64xf32> to vector<64xf32>
    %66 = vector.shape_cast %61 : vector<16x16x32xf32> to vector<256x32xf32>
    %67 = vector.extract_strided_slice %66 {offsets = [0, 0], sizes = [224, 32], strides = [1, 1]} : vector<256x32xf32> to vector<224x32xf32>
    %68 = arith.truncf %67 : vector<224x32xf32> to vector<224x32xbf16>
    %c0_57 = arith.constant 0 : index
    %c0_58 = arith.constant 0 : index
    %c0_59 = arith.constant 0 : index
    %c0_60 = arith.constant 0 : index
    %69 = vector.load %arg4[%c0_57, %c0_58, %c0_59, %c0_60] : memref<3x3x32x64xbf16, #tpu.memory_space<vmem>>, vector<1x1x32x64xbf16>
    %70 = vector.shape_cast %69 : vector<1x1x32x64xbf16> to vector<32x64xbf16>
    %cst_61 = arith.constant dense<0.000000e+00> : vector<224x64xf32>
    %71 = tpu.matmul %68, %70, %cst_61 {dimension_numbers = #tpu.dot_dimension_numbers<[1], [0], [0], [1], [0, 0, 1, 1], [], []>} : vector<224x32xbf16>, vector<32x64xbf16>, vector<224x64xf32> -> vector<224x64xf32>
    %c0_62 = arith.constant 0 : index
    %c1_63 = arith.constant 1 : index
    %c0_64 = arith.constant 0 : index
    %c0_65 = arith.constant 0 : index
    %72 = vector.load %arg4[%c0_62, %c1_63, %c0_64, %c0_65] : memref<3x3x32x64xbf16, #tpu.memory_space<vmem>>, vector<1x1x32x64xbf16>
    %73 = vector.shape_cast %72 : vector<1x1x32x64xbf16> to vector<32x64xbf16>
    %cst_66 = arith.constant dense<0.000000e+00> : vector<224x64xf32>
    %74 = tpu.matmul %68, %73, %cst_66 {dimension_numbers = #tpu.dot_dimension_numbers<[1], [0], [0], [1], [0, 0, 1, 1], [], []>} : vector<224x32xbf16>, vector<32x64xbf16>, vector<224x64xf32> -> vector<224x64xf32>
    %c0_67 = arith.constant 0 : index
    %c2_68 = arith.constant 2 : index
    %c0_69 = arith.constant 0 : index
    %c0_70 = arith.constant 0 : index
    %75 = vector.load %arg4[%c0_67, %c2_68, %c0_69, %c0_70] : memref<3x3x32x64xbf16, #tpu.memory_space<vmem>>, vector<1x1x32x64xbf16>
    %76 = vector.shape_cast %75 : vector<1x1x32x64xbf16> to vector<32x64xbf16>
    %cst_71 = arith.constant dense<0.000000e+00> : vector<224x64xf32>
    %77 = tpu.matmul %68, %76, %cst_71 {dimension_numbers = #tpu.dot_dimension_numbers<[1], [0], [0], [1], [0, 0, 1, 1], [], []>} : vector<224x32xbf16>, vector<32x64xbf16>, vector<224x64xf32> -> vector<224x64xf32>
    %78 = vector.extract_strided_slice %66 {offsets = [16, 0], sizes = [224, 32], strides = [1, 1]} : vector<256x32xf32> to vector<224x32xf32>
    %79 = arith.truncf %78 : vector<224x32xf32> to vector<224x32xbf16>
    %c1_72 = arith.constant 1 : index
    %c0_73 = arith.constant 0 : index
    %c0_74 = arith.constant 0 : index
    %c0_75 = arith.constant 0 : index
    %80 = vector.load %arg4[%c1_72, %c0_73, %c0_74, %c0_75] : memref<3x3x32x64xbf16, #tpu.memory_space<vmem>>, vector<1x1x32x64xbf16>
    %81 = vector.shape_cast %80 : vector<1x1x32x64xbf16> to vector<32x64xbf16>
    %cst_76 = arith.constant dense<0.000000e+00> : vector<224x64xf32>
    %82 = tpu.matmul %79, %81, %cst_76 {dimension_numbers = #tpu.dot_dimension_numbers<[1], [0], [0], [1], [0, 0, 1, 1], [], []>} : vector<224x32xbf16>, vector<32x64xbf16>, vector<224x64xf32> -> vector<224x64xf32>
    %83 = arith.addf %71, %82 : vector<224x64xf32>
    %c1_77 = arith.constant 1 : index
    %c1_78 = arith.constant 1 : index
    %c0_79 = arith.constant 0 : index
    %c0_80 = arith.constant 0 : index
    %84 = vector.load %arg4[%c1_77, %c1_78, %c0_79, %c0_80] : memref<3x3x32x64xbf16, #tpu.memory_space<vmem>>, vector<1x1x32x64xbf16>
    %85 = vector.shape_cast %84 : vector<1x1x32x64xbf16> to vector<32x64xbf16>
    %cst_81 = arith.constant dense<0.000000e+00> : vector<224x64xf32>
    %86 = tpu.matmul %79, %85, %cst_81 {dimension_numbers = #tpu.dot_dimension_numbers<[1], [0], [0], [1], [0, 0, 1, 1], [], []>} : vector<224x32xbf16>, vector<32x64xbf16>, vector<224x64xf32> -> vector<224x64xf32>
    %87 = arith.addf %74, %86 : vector<224x64xf32>
    %c1_82 = arith.constant 1 : index
    %c2_83 = arith.constant 2 : index
    %c0_84 = arith.constant 0 : index
    %c0_85 = arith.constant 0 : index
    %88 = vector.load %arg4[%c1_82, %c2_83, %c0_84, %c0_85] : memref<3x3x32x64xbf16, #tpu.memory_space<vmem>>, vector<1x1x32x64xbf16>
    %89 = vector.shape_cast %88 : vector<1x1x32x64xbf16> to vector<32x64xbf16>
    %cst_86 = arith.constant dense<0.000000e+00> : vector<224x64xf32>
    %90 = tpu.matmul %79, %89, %cst_86 {dimension_numbers = #tpu.dot_dimension_numbers<[1], [0], [0], [1], [0, 0, 1, 1], [], []>} : vector<224x32xbf16>, vector<32x64xbf16>, vector<224x64xf32> -> vector<224x64xf32>
    %91 = arith.addf %77, %90 : vector<224x64xf32>
    %92 = vector.extract_strided_slice %66 {offsets = [32, 0], sizes = [224, 32], strides = [1, 1]} : vector<256x32xf32> to vector<224x32xf32>
    %93 = arith.truncf %92 : vector<224x32xf32> to vector<224x32xbf16>
    %c2_87 = arith.constant 2 : index
    %c0_88 = arith.constant 0 : index
    %c0_89 = arith.constant 0 : index
    %c0_90 = arith.constant 0 : index
    %94 = vector.load %arg4[%c2_87, %c0_88, %c0_89, %c0_90] : memref<3x3x32x64xbf16, #tpu.memory_space<vmem>>, vector<1x1x32x64xbf16>
    %95 = vector.shape_cast %94 : vector<1x1x32x64xbf16> to vector<32x64xbf16>
    %cst_91 = arith.constant dense<0.000000e+00> : vector<224x64xf32>
    %96 = tpu.matmul %93, %95, %cst_91 {dimension_numbers = #tpu.dot_dimension_numbers<[1], [0], [0], [1], [0, 0, 1, 1], [], []>} : vector<224x32xbf16>, vector<32x64xbf16>, vector<224x64xf32> -> vector<224x64xf32>
    %97 = arith.addf %83, %96 : vector<224x64xf32>
    %c2_92 = arith.constant 2 : index
    %c1_93 = arith.constant 1 : index
    %c0_94 = arith.constant 0 : index
    %c0_95 = arith.constant 0 : index
    %98 = vector.load %arg4[%c2_92, %c1_93, %c0_94, %c0_95] : memref<3x3x32x64xbf16, #tpu.memory_space<vmem>>, vector<1x1x32x64xbf16>
    %99 = vector.shape_cast %98 : vector<1x1x32x64xbf16> to vector<32x64xbf16>
    %cst_96 = arith.constant dense<0.000000e+00> : vector<224x64xf32>
    %100 = tpu.matmul %93, %99, %cst_96 {dimension_numbers = #tpu.dot_dimension_numbers<[1], [0], [0], [1], [0, 0, 1, 1], [], []>} : vector<224x32xbf16>, vector<32x64xbf16>, vector<224x64xf32> -> vector<224x64xf32>
    %101 = arith.addf %87, %100 : vector<224x64xf32>
    %c2_97 = arith.constant 2 : index
    %c2_98 = arith.constant 2 : index
    %c0_99 = arith.constant 0 : index
    %c0_100 = arith.constant 0 : index
    %102 = vector.load %arg4[%c2_97, %c2_98, %c0_99, %c0_100] : memref<3x3x32x64xbf16, #tpu.memory_space<vmem>>, vector<1x1x32x64xbf16>
    %103 = vector.shape_cast %102 : vector<1x1x32x64xbf16> to vector<32x64xbf16>
    %cst_101 = arith.constant dense<0.000000e+00> : vector<224x64xf32>
    %104 = tpu.matmul %93, %103, %cst_101 {dimension_numbers = #tpu.dot_dimension_numbers<[1], [0], [0], [1], [0, 0, 1, 1], [], []>} : vector<224x32xbf16>, vector<32x64xbf16>, vector<224x64xf32> -> vector<224x64xf32>
    %105 = arith.addf %91, %104 : vector<224x64xf32>
    %106 = vector.shape_cast %97 : vector<224x64xf32> to vector<14x16x64xf32>
    %107 = vector.shape_cast %101 : vector<224x64xf32> to vector<14x16x64xf32>
    %108 = vector.shape_cast %105 : vector<224x64xf32> to vector<14x16x64xf32>
    %109 = vector.extract_strided_slice %106 {offsets = [0, 0, 0], sizes = [14, 14, 64], strides = [1, 1, 1]} : vector<14x16x64xf32> to vector<14x14x64xf32>
    %110 = vector.extract_strided_slice %107 {offsets = [0, 1, 0], sizes = [14, 14, 64], strides = [1, 1, 1]} : vector<14x16x64xf32> to vector<14x14x64xf32>
    %111 = arith.addf %109, %110 : vector<14x14x64xf32>
    %112 = vector.extract_strided_slice %108 {offsets = [0, 2, 0], sizes = [14, 14, 64], strides = [1, 1, 1]} : vector<14x16x64xf32> to vector<14x14x64xf32>
    %113 = arith.addf %111, %112 : vector<14x14x64xf32>
    %114 = vector.shape_cast %63 : vector<64xf32> to vector<1x1x64xf32>
    %115 = vector.broadcast %114 : vector<1x1x64xf32> to vector<14x14x64xf32>
    %116 = arith.mulf %113, %115 : vector<14x14x64xf32>
    %117 = vector.shape_cast %65 : vector<64xf32> to vector<1x1x64xf32>
    %118 = vector.broadcast %117 : vector<1x1x64xf32> to vector<14x14x64xf32>
    %119 = arith.addf %116, %118 : vector<14x14x64xf32>
    %cst_102 = arith.constant 0.000000e+00 : f32
    %120 = vector.broadcast %cst_102 : f32 to vector<9x9x64xf32>
    %121 = vector.extract_strided_slice %119 {offsets = [0, 0, 0], sizes = [14, 9, 64], strides = [1, 1, 1]} : vector<14x14x64xf32> to vector<14x9x64xf32>
    %122 = vector.extract_strided_slice %121 {offsets = [0, 0, 0], sizes = [9, 9, 64], strides = [1, 1, 1]} : vector<14x9x64xf32> to vector<9x9x64xf32>
    %123 = vector.extract_strided_slice %59 {offsets = [0, 0, 0], sizes = [1, 1, 64], strides = [1, 1, 1]} : vector<6x6x64xf32> to vector<1x1x64xf32>
    %124 = vector.shape_cast %123 : vector<1x1x64xf32> to vector<64xf32>
    %125 = vector.shape_cast %124 : vector<64xf32> to vector<1x1x64xf32>
    %126 = vector.broadcast %125 : vector<1x1x64xf32> to vector<9x9x64xf32>
    %127 = arith.mulf %122, %126 : vector<9x9x64xf32>
    %128 = arith.addf %120, %127 : vector<9x9x64xf32>
    %129 = vector.extract_strided_slice %121 {offsets = [1, 0, 0], sizes = [9, 9, 64], strides = [1, 1, 1]} : vector<14x9x64xf32> to vector<9x9x64xf32>
    %130 = vector.extract_strided_slice %59 {offsets = [1, 0, 0], sizes = [1, 1, 64], strides = [1, 1, 1]} : vector<6x6x64xf32> to vector<1x1x64xf32>
    %131 = vector.shape_cast %130 : vector<1x1x64xf32> to vector<64xf32>
    %132 = vector.shape_cast %131 : vector<64xf32> to vector<1x1x64xf32>
    %133 = vector.broadcast %132 : vector<1x1x64xf32> to vector<9x9x64xf32>
    %134 = arith.mulf %129, %133 : vector<9x9x64xf32>
    %135 = arith.addf %128, %134 : vector<9x9x64xf32>
    %136 = vector.extract_strided_slice %121 {offsets = [2, 0, 0], sizes = [9, 9, 64], strides = [1, 1, 1]} : vector<14x9x64xf32> to vector<9x9x64xf32>
    %137 = vector.extract_strided_slice %59 {offsets = [2, 0, 0], sizes = [1, 1, 64], strides = [1, 1, 1]} : vector<6x6x64xf32> to vector<1x1x64xf32>
    %138 = vector.shape_cast %137 : vector<1x1x64xf32> to vector<64xf32>
    %139 = vector.shape_cast %138 : vector<64xf32> to vector<1x1x64xf32>
    %140 = vector.broadcast %139 : vector<1x1x64xf32> to vector<9x9x64xf32>
    %141 = arith.mulf %136, %140 : vector<9x9x64xf32>
    %142 = arith.addf %135, %141 : vector<9x9x64xf32>
    %143 = vector.extract_strided_slice %121 {offsets = [3, 0, 0], sizes = [9, 9, 64], strides = [1, 1, 1]} : vector<14x9x64xf32> to vector<9x9x64xf32>
    %144 = vector.extract_strided_slice %59 {offsets = [3, 0, 0], sizes = [1, 1, 64], strides = [1, 1, 1]} : vector<6x6x64xf32> to vector<1x1x64xf32>
    %145 = vector.shape_cast %144 : vector<1x1x64xf32> to vector<64xf32>
    %146 = vector.shape_cast %145 : vector<64xf32> to vector<1x1x64xf32>
    %147 = vector.broadcast %146 : vector<1x1x64xf32> to vector<9x9x64xf32>
    %148 = arith.mulf %143, %147 : vector<9x9x64xf32>
    %149 = arith.addf %142, %148 : vector<9x9x64xf32>
    %150 = vector.extract_strided_slice %121 {offsets = [4, 0, 0], sizes = [9, 9, 64], strides = [1, 1, 1]} : vector<14x9x64xf32> to vector<9x9x64xf32>
    %151 = vector.extract_strided_slice %59 {offsets = [4, 0, 0], sizes = [1, 1, 64], strides = [1, 1, 1]} : vector<6x6x64xf32> to vector<1x1x64xf32>
    %152 = vector.shape_cast %151 : vector<1x1x64xf32> to vector<64xf32>
    %153 = vector.shape_cast %152 : vector<64xf32> to vector<1x1x64xf32>
    %154 = vector.broadcast %153 : vector<1x1x64xf32> to vector<9x9x64xf32>
    %155 = arith.mulf %150, %154 : vector<9x9x64xf32>
    %156 = arith.addf %149, %155 : vector<9x9x64xf32>
    %157 = vector.extract_strided_slice %121 {offsets = [5, 0, 0], sizes = [9, 9, 64], strides = [1, 1, 1]} : vector<14x9x64xf32> to vector<9x9x64xf32>
    %158 = vector.extract_strided_slice %59 {offsets = [5, 0, 0], sizes = [1, 1, 64], strides = [1, 1, 1]} : vector<6x6x64xf32> to vector<1x1x64xf32>
    %159 = vector.shape_cast %158 : vector<1x1x64xf32> to vector<64xf32>
    %160 = vector.shape_cast %159 : vector<64xf32> to vector<1x1x64xf32>
    %161 = vector.broadcast %160 : vector<1x1x64xf32> to vector<9x9x64xf32>
    %162 = arith.mulf %157, %161 : vector<9x9x64xf32>
    %163 = arith.addf %156, %162 : vector<9x9x64xf32>
    %164 = vector.extract_strided_slice %119 {offsets = [0, 1, 0], sizes = [14, 9, 64], strides = [1, 1, 1]} : vector<14x14x64xf32> to vector<14x9x64xf32>
    %165 = vector.extract_strided_slice %164 {offsets = [0, 0, 0], sizes = [9, 9, 64], strides = [1, 1, 1]} : vector<14x9x64xf32> to vector<9x9x64xf32>
    %166 = vector.extract_strided_slice %59 {offsets = [0, 1, 0], sizes = [1, 1, 64], strides = [1, 1, 1]} : vector<6x6x64xf32> to vector<1x1x64xf32>
    %167 = vector.shape_cast %166 : vector<1x1x64xf32> to vector<64xf32>
    %168 = vector.shape_cast %167 : vector<64xf32> to vector<1x1x64xf32>
    %169 = vector.broadcast %168 : vector<1x1x64xf32> to vector<9x9x64xf32>
    %170 = arith.mulf %165, %169 : vector<9x9x64xf32>
    %171 = arith.addf %163, %170 : vector<9x9x64xf32>
    %172 = vector.extract_strided_slice %164 {offsets = [1, 0, 0], sizes = [9, 9, 64], strides = [1, 1, 1]} : vector<14x9x64xf32> to vector<9x9x64xf32>
    %173 = vector.extract_strided_slice %59 {offsets = [1, 1, 0], sizes = [1, 1, 64], strides = [1, 1, 1]} : vector<6x6x64xf32> to vector<1x1x64xf32>
    %174 = vector.shape_cast %173 : vector<1x1x64xf32> to vector<64xf32>
    %175 = vector.shape_cast %174 : vector<64xf32> to vector<1x1x64xf32>
    %176 = vector.broadcast %175 : vector<1x1x64xf32> to vector<9x9x64xf32>
    %177 = arith.mulf %172, %176 : vector<9x9x64xf32>
    %178 = arith.addf %171, %177 : vector<9x9x64xf32>
    %179 = vector.extract_strided_slice %164 {offsets = [2, 0, 0], sizes = [9, 9, 64], strides = [1, 1, 1]} : vector<14x9x64xf32> to vector<9x9x64xf32>
    %180 = vector.extract_strided_slice %59 {offsets = [2, 1, 0], sizes = [1, 1, 64], strides = [1, 1, 1]} : vector<6x6x64xf32> to vector<1x1x64xf32>
    %181 = vector.shape_cast %180 : vector<1x1x64xf32> to vector<64xf32>
    %182 = vector.shape_cast %181 : vector<64xf32> to vector<1x1x64xf32>
    %183 = vector.broadcast %182 : vector<1x1x64xf32> to vector<9x9x64xf32>
    %184 = arith.mulf %179, %183 : vector<9x9x64xf32>
    %185 = arith.addf %178, %184 : vector<9x9x64xf32>
    %186 = vector.extract_strided_slice %164 {offsets = [3, 0, 0], sizes = [9, 9, 64], strides = [1, 1, 1]} : vector<14x9x64xf32> to vector<9x9x64xf32>
    %187 = vector.extract_strided_slice %59 {offsets = [3, 1, 0], sizes = [1, 1, 64], strides = [1, 1, 1]} : vector<6x6x64xf32> to vector<1x1x64xf32>
    %188 = vector.shape_cast %187 : vector<1x1x64xf32> to vector<64xf32>
    %189 = vector.shape_cast %188 : vector<64xf32> to vector<1x1x64xf32>
    %190 = vector.broadcast %189 : vector<1x1x64xf32> to vector<9x9x64xf32>
    %191 = arith.mulf %186, %190 : vector<9x9x64xf32>
    %192 = arith.addf %185, %191 : vector<9x9x64xf32>
    %193 = vector.extract_strided_slice %164 {offsets = [4, 0, 0], sizes = [9, 9, 64], strides = [1, 1, 1]} : vector<14x9x64xf32> to vector<9x9x64xf32>
    %194 = vector.extract_strided_slice %59 {offsets = [4, 1, 0], sizes = [1, 1, 64], strides = [1, 1, 1]} : vector<6x6x64xf32> to vector<1x1x64xf32>
    %195 = vector.shape_cast %194 : vector<1x1x64xf32> to vector<64xf32>
    %196 = vector.shape_cast %195 : vector<64xf32> to vector<1x1x64xf32>
    %197 = vector.broadcast %196 : vector<1x1x64xf32> to vector<9x9x64xf32>
    %198 = arith.mulf %193, %197 : vector<9x9x64xf32>
    %199 = arith.addf %192, %198 : vector<9x9x64xf32>
    %200 = vector.extract_strided_slice %164 {offsets = [5, 0, 0], sizes = [9, 9, 64], strides = [1, 1, 1]} : vector<14x9x64xf32> to vector<9x9x64xf32>
    %201 = vector.extract_strided_slice %59 {offsets = [5, 1, 0], sizes = [1, 1, 64], strides = [1, 1, 1]} : vector<6x6x64xf32> to vector<1x1x64xf32>
    %202 = vector.shape_cast %201 : vector<1x1x64xf32> to vector<64xf32>
    %203 = vector.shape_cast %202 : vector<64xf32> to vector<1x1x64xf32>
    %204 = vector.broadcast %203 : vector<1x1x64xf32> to vector<9x9x64xf32>
    %205 = arith.mulf %200, %204 : vector<9x9x64xf32>
    %206 = arith.addf %199, %205 : vector<9x9x64xf32>
    %207 = vector.extract_strided_slice %119 {offsets = [0, 2, 0], sizes = [14, 9, 64], strides = [1, 1, 1]} : vector<14x14x64xf32> to vector<14x9x64xf32>
    %208 = vector.extract_strided_slice %207 {offsets = [0, 0, 0], sizes = [9, 9, 64], strides = [1, 1, 1]} : vector<14x9x64xf32> to vector<9x9x64xf32>
    %209 = vector.extract_strided_slice %59 {offsets = [0, 2, 0], sizes = [1, 1, 64], strides = [1, 1, 1]} : vector<6x6x64xf32> to vector<1x1x64xf32>
    %210 = vector.shape_cast %209 : vector<1x1x64xf32> to vector<64xf32>
    %211 = vector.shape_cast %210 : vector<64xf32> to vector<1x1x64xf32>
    %212 = vector.broadcast %211 : vector<1x1x64xf32> to vector<9x9x64xf32>
    %213 = arith.mulf %208, %212 : vector<9x9x64xf32>
    %214 = arith.addf %206, %213 : vector<9x9x64xf32>
    %215 = vector.extract_strided_slice %207 {offsets = [1, 0, 0], sizes = [9, 9, 64], strides = [1, 1, 1]} : vector<14x9x64xf32> to vector<9x9x64xf32>
    %216 = vector.extract_strided_slice %59 {offsets = [1, 2, 0], sizes = [1, 1, 64], strides = [1, 1, 1]} : vector<6x6x64xf32> to vector<1x1x64xf32>
    %217 = vector.shape_cast %216 : vector<1x1x64xf32> to vector<64xf32>
    %218 = vector.shape_cast %217 : vector<64xf32> to vector<1x1x64xf32>
    %219 = vector.broadcast %218 : vector<1x1x64xf32> to vector<9x9x64xf32>
    %220 = arith.mulf %215, %219 : vector<9x9x64xf32>
    %221 = arith.addf %214, %220 : vector<9x9x64xf32>
    %222 = vector.extract_strided_slice %207 {offsets = [2, 0, 0], sizes = [9, 9, 64], strides = [1, 1, 1]} : vector<14x9x64xf32> to vector<9x9x64xf32>
    %223 = vector.extract_strided_slice %59 {offsets = [2, 2, 0], sizes = [1, 1, 64], strides = [1, 1, 1]} : vector<6x6x64xf32> to vector<1x1x64xf32>
    %224 = vector.shape_cast %223 : vector<1x1x64xf32> to vector<64xf32>
    %225 = vector.shape_cast %224 : vector<64xf32> to vector<1x1x64xf32>
    %226 = vector.broadcast %225 : vector<1x1x64xf32> to vector<9x9x64xf32>
    %227 = arith.mulf %222, %226 : vector<9x9x64xf32>
    %228 = arith.addf %221, %227 : vector<9x9x64xf32>
    %229 = vector.extract_strided_slice %207 {offsets = [3, 0, 0], sizes = [9, 9, 64], strides = [1, 1, 1]} : vector<14x9x64xf32> to vector<9x9x64xf32>
    %230 = vector.extract_strided_slice %59 {offsets = [3, 2, 0], sizes = [1, 1, 64], strides = [1, 1, 1]} : vector<6x6x64xf32> to vector<1x1x64xf32>
    %231 = vector.shape_cast %230 : vector<1x1x64xf32> to vector<64xf32>
    %232 = vector.shape_cast %231 : vector<64xf32> to vector<1x1x64xf32>
    %233 = vector.broadcast %232 : vector<1x1x64xf32> to vector<9x9x64xf32>
    %234 = arith.mulf %229, %233 : vector<9x9x64xf32>
    %235 = arith.addf %228, %234 : vector<9x9x64xf32>
    %236 = vector.extract_strided_slice %207 {offsets = [4, 0, 0], sizes = [9, 9, 64], strides = [1, 1, 1]} : vector<14x9x64xf32> to vector<9x9x64xf32>
    %237 = vector.extract_strided_slice %59 {offsets = [4, 2, 0], sizes = [1, 1, 64], strides = [1, 1, 1]} : vector<6x6x64xf32> to vector<1x1x64xf32>
    %238 = vector.shape_cast %237 : vector<1x1x64xf32> to vector<64xf32>
    %239 = vector.shape_cast %238 : vector<64xf32> to vector<1x1x64xf32>
    %240 = vector.broadcast %239 : vector<1x1x64xf32> to vector<9x9x64xf32>
    %241 = arith.mulf %236, %240 : vector<9x9x64xf32>
    %242 = arith.addf %235, %241 : vector<9x9x64xf32>
    %243 = vector.extract_strided_slice %207 {offsets = [5, 0, 0], sizes = [9, 9, 64], strides = [1, 1, 1]} : vector<14x9x64xf32> to vector<9x9x64xf32>
    %244 = vector.extract_strided_slice %59 {offsets = [5, 2, 0], sizes = [1, 1, 64], strides = [1, 1, 1]} : vector<6x6x64xf32> to vector<1x1x64xf32>
    %245 = vector.shape_cast %244 : vector<1x1x64xf32> to vector<64xf32>
    %246 = vector.shape_cast %245 : vector<64xf32> to vector<1x1x64xf32>
    %247 = vector.broadcast %246 : vector<1x1x64xf32> to vector<9x9x64xf32>
    %248 = arith.mulf %243, %247 : vector<9x9x64xf32>
    %249 = arith.addf %242, %248 : vector<9x9x64xf32>
    %250 = vector.extract_strided_slice %119 {offsets = [0, 3, 0], sizes = [14, 9, 64], strides = [1, 1, 1]} : vector<14x14x64xf32> to vector<14x9x64xf32>
    %251 = vector.extract_strided_slice %250 {offsets = [0, 0, 0], sizes = [9, 9, 64], strides = [1, 1, 1]} : vector<14x9x64xf32> to vector<9x9x64xf32>
    %252 = vector.extract_strided_slice %59 {offsets = [0, 3, 0], sizes = [1, 1, 64], strides = [1, 1, 1]} : vector<6x6x64xf32> to vector<1x1x64xf32>
    %253 = vector.shape_cast %252 : vector<1x1x64xf32> to vector<64xf32>
    %254 = vector.shape_cast %253 : vector<64xf32> to vector<1x1x64xf32>
    %255 = vector.broadcast %254 : vector<1x1x64xf32> to vector<9x9x64xf32>
    %256 = arith.mulf %251, %255 : vector<9x9x64xf32>
    %257 = arith.addf %249, %256 : vector<9x9x64xf32>
    %258 = vector.extract_strided_slice %250 {offsets = [1, 0, 0], sizes = [9, 9, 64], strides = [1, 1, 1]} : vector<14x9x64xf32> to vector<9x9x64xf32>
    %259 = vector.extract_strided_slice %59 {offsets = [1, 3, 0], sizes = [1, 1, 64], strides = [1, 1, 1]} : vector<6x6x64xf32> to vector<1x1x64xf32>
    %260 = vector.shape_cast %259 : vector<1x1x64xf32> to vector<64xf32>
    %261 = vector.shape_cast %260 : vector<64xf32> to vector<1x1x64xf32>
    %262 = vector.broadcast %261 : vector<1x1x64xf32> to vector<9x9x64xf32>
    %263 = arith.mulf %258, %262 : vector<9x9x64xf32>
    %264 = arith.addf %257, %263 : vector<9x9x64xf32>
    %265 = vector.extract_strided_slice %250 {offsets = [2, 0, 0], sizes = [9, 9, 64], strides = [1, 1, 1]} : vector<14x9x64xf32> to vector<9x9x64xf32>
    %266 = vector.extract_strided_slice %59 {offsets = [2, 3, 0], sizes = [1, 1, 64], strides = [1, 1, 1]} : vector<6x6x64xf32> to vector<1x1x64xf32>
    %267 = vector.shape_cast %266 : vector<1x1x64xf32> to vector<64xf32>
    %268 = vector.shape_cast %267 : vector<64xf32> to vector<1x1x64xf32>
    %269 = vector.broadcast %268 : vector<1x1x64xf32> to vector<9x9x64xf32>
    %270 = arith.mulf %265, %269 : vector<9x9x64xf32>
    %271 = arith.addf %264, %270 : vector<9x9x64xf32>
    %272 = vector.extract_strided_slice %250 {offsets = [3, 0, 0], sizes = [9, 9, 64], strides = [1, 1, 1]} : vector<14x9x64xf32> to vector<9x9x64xf32>
    %273 = vector.extract_strided_slice %59 {offsets = [3, 3, 0], sizes = [1, 1, 64], strides = [1, 1, 1]} : vector<6x6x64xf32> to vector<1x1x64xf32>
    %274 = vector.shape_cast %273 : vector<1x1x64xf32> to vector<64xf32>
    %275 = vector.shape_cast %274 : vector<64xf32> to vector<1x1x64xf32>
    %276 = vector.broadcast %275 : vector<1x1x64xf32> to vector<9x9x64xf32>
    %277 = arith.mulf %272, %276 : vector<9x9x64xf32>
    %278 = arith.addf %271, %277 : vector<9x9x64xf32>
    %279 = vector.extract_strided_slice %250 {offsets = [4, 0, 0], sizes = [9, 9, 64], strides = [1, 1, 1]} : vector<14x9x64xf32> to vector<9x9x64xf32>
    %280 = vector.extract_strided_slice %59 {offsets = [4, 3, 0], sizes = [1, 1, 64], strides = [1, 1, 1]} : vector<6x6x64xf32> to vector<1x1x64xf32>
    %281 = vector.shape_cast %280 : vector<1x1x64xf32> to vector<64xf32>
    %282 = vector.shape_cast %281 : vector<64xf32> to vector<1x1x64xf32>
    %283 = vector.broadcast %282 : vector<1x1x64xf32> to vector<9x9x64xf32>
    %284 = arith.mulf %279, %283 : vector<9x9x64xf32>
    %285 = arith.addf %278, %284 : vector<9x9x64xf32>
    %286 = vector.extract_strided_slice %250 {offsets = [5, 0, 0], sizes = [9, 9, 64], strides = [1, 1, 1]} : vector<14x9x64xf32> to vector<9x9x64xf32>
    %287 = vector.extract_strided_slice %59 {offsets = [5, 3, 0], sizes = [1, 1, 64], strides = [1, 1, 1]} : vector<6x6x64xf32> to vector<1x1x64xf32>
    %288 = vector.shape_cast %287 : vector<1x1x64xf32> to vector<64xf32>
    %289 = vector.shape_cast %288 : vector<64xf32> to vector<1x1x64xf32>
    %290 = vector.broadcast %289 : vector<1x1x64xf32> to vector<9x9x64xf32>
    %291 = arith.mulf %286, %290 : vector<9x9x64xf32>
    %292 = arith.addf %285, %291 : vector<9x9x64xf32>
    %293 = vector.extract_strided_slice %119 {offsets = [0, 4, 0], sizes = [14, 9, 64], strides = [1, 1, 1]} : vector<14x14x64xf32> to vector<14x9x64xf32>
    %294 = vector.extract_strided_slice %293 {offsets = [0, 0, 0], sizes = [9, 9, 64], strides = [1, 1, 1]} : vector<14x9x64xf32> to vector<9x9x64xf32>
    %295 = vector.extract_strided_slice %59 {offsets = [0, 4, 0], sizes = [1, 1, 64], strides = [1, 1, 1]} : vector<6x6x64xf32> to vector<1x1x64xf32>
    %296 = vector.shape_cast %295 : vector<1x1x64xf32> to vector<64xf32>
    %297 = vector.shape_cast %296 : vector<64xf32> to vector<1x1x64xf32>
    %298 = vector.broadcast %297 : vector<1x1x64xf32> to vector<9x9x64xf32>
    %299 = arith.mulf %294, %298 : vector<9x9x64xf32>
    %300 = arith.addf %292, %299 : vector<9x9x64xf32>
    %301 = vector.extract_strided_slice %293 {offsets = [1, 0, 0], sizes = [9, 9, 64], strides = [1, 1, 1]} : vector<14x9x64xf32> to vector<9x9x64xf32>
    %302 = vector.extract_strided_slice %59 {offsets = [1, 4, 0], sizes = [1, 1, 64], strides = [1, 1, 1]} : vector<6x6x64xf32> to vector<1x1x64xf32>
    %303 = vector.shape_cast %302 : vector<1x1x64xf32> to vector<64xf32>
    %304 = vector.shape_cast %303 : vector<64xf32> to vector<1x1x64xf32>
    %305 = vector.broadcast %304 : vector<1x1x64xf32> to vector<9x9x64xf32>
    %306 = arith.mulf %301, %305 : vector<9x9x64xf32>
    %307 = arith.addf %300, %306 : vector<9x9x64xf32>
    %308 = vector.extract_strided_slice %293 {offsets = [2, 0, 0], sizes = [9, 9, 64], strides = [1, 1, 1]} : vector<14x9x64xf32> to vector<9x9x64xf32>
    %309 = vector.extract_strided_slice %59 {offsets = [2, 4, 0], sizes = [1, 1, 64], strides = [1, 1, 1]} : vector<6x6x64xf32> to vector<1x1x64xf32>
    %310 = vector.shape_cast %309 : vector<1x1x64xf32> to vector<64xf32>
    %311 = vector.shape_cast %310 : vector<64xf32> to vector<1x1x64xf32>
    %312 = vector.broadcast %311 : vector<1x1x64xf32> to vector<9x9x64xf32>
    %313 = arith.mulf %308, %312 : vector<9x9x64xf32>
    %314 = arith.addf %307, %313 : vector<9x9x64xf32>
    %315 = vector.extract_strided_slice %293 {offsets = [3, 0, 0], sizes = [9, 9, 64], strides = [1, 1, 1]} : vector<14x9x64xf32> to vector<9x9x64xf32>
    %316 = vector.extract_strided_slice %59 {offsets = [3, 4, 0], sizes = [1, 1, 64], strides = [1, 1, 1]} : vector<6x6x64xf32> to vector<1x1x64xf32>
    %317 = vector.shape_cast %316 : vector<1x1x64xf32> to vector<64xf32>
    %318 = vector.shape_cast %317 : vector<64xf32> to vector<1x1x64xf32>
    %319 = vector.broadcast %318 : vector<1x1x64xf32> to vector<9x9x64xf32>
    %320 = arith.mulf %315, %319 : vector<9x9x64xf32>
    %321 = arith.addf %314, %320 : vector<9x9x64xf32>
    %322 = vector.extract_strided_slice %293 {offsets = [4, 0, 0], sizes = [9, 9, 64], strides = [1, 1, 1]} : vector<14x9x64xf32> to vector<9x9x64xf32>
    %323 = vector.extract_strided_slice %59 {offsets = [4, 4, 0], sizes = [1, 1, 64], strides = [1, 1, 1]} : vector<6x6x64xf32> to vector<1x1x64xf32>
    %324 = vector.shape_cast %323 : vector<1x1x64xf32> to vector<64xf32>
    %325 = vector.shape_cast %324 : vector<64xf32> to vector<1x1x64xf32>
    %326 = vector.broadcast %325 : vector<1x1x64xf32> to vector<9x9x64xf32>
    %327 = arith.mulf %322, %326 : vector<9x9x64xf32>
    %328 = arith.addf %321, %327 : vector<9x9x64xf32>
    %329 = vector.extract_strided_slice %293 {offsets = [5, 0, 0], sizes = [9, 9, 64], strides = [1, 1, 1]} : vector<14x9x64xf32> to vector<9x9x64xf32>
    %330 = vector.extract_strided_slice %59 {offsets = [5, 4, 0], sizes = [1, 1, 64], strides = [1, 1, 1]} : vector<6x6x64xf32> to vector<1x1x64xf32>
    %331 = vector.shape_cast %330 : vector<1x1x64xf32> to vector<64xf32>
    %332 = vector.shape_cast %331 : vector<64xf32> to vector<1x1x64xf32>
    %333 = vector.broadcast %332 : vector<1x1x64xf32> to vector<9x9x64xf32>
    %334 = arith.mulf %329, %333 : vector<9x9x64xf32>
    %335 = arith.addf %328, %334 : vector<9x9x64xf32>
    %336 = vector.extract_strided_slice %119 {offsets = [0, 5, 0], sizes = [14, 9, 64], strides = [1, 1, 1]} : vector<14x14x64xf32> to vector<14x9x64xf32>
    %337 = vector.extract_strided_slice %336 {offsets = [0, 0, 0], sizes = [9, 9, 64], strides = [1, 1, 1]} : vector<14x9x64xf32> to vector<9x9x64xf32>
    %338 = vector.extract_strided_slice %59 {offsets = [0, 5, 0], sizes = [1, 1, 64], strides = [1, 1, 1]} : vector<6x6x64xf32> to vector<1x1x64xf32>
    %339 = vector.shape_cast %338 : vector<1x1x64xf32> to vector<64xf32>
    %340 = vector.shape_cast %339 : vector<64xf32> to vector<1x1x64xf32>
    %341 = vector.broadcast %340 : vector<1x1x64xf32> to vector<9x9x64xf32>
    %342 = arith.mulf %337, %341 : vector<9x9x64xf32>
    %343 = arith.addf %335, %342 : vector<9x9x64xf32>
    %344 = vector.extract_strided_slice %336 {offsets = [1, 0, 0], sizes = [9, 9, 64], strides = [1, 1, 1]} : vector<14x9x64xf32> to vector<9x9x64xf32>
    %345 = vector.extract_strided_slice %59 {offsets = [1, 5, 0], sizes = [1, 1, 64], strides = [1, 1, 1]} : vector<6x6x64xf32> to vector<1x1x64xf32>
    %346 = vector.shape_cast %345 : vector<1x1x64xf32> to vector<64xf32>
    %347 = vector.shape_cast %346 : vector<64xf32> to vector<1x1x64xf32>
    %348 = vector.broadcast %347 : vector<1x1x64xf32> to vector<9x9x64xf32>
    %349 = arith.mulf %344, %348 : vector<9x9x64xf32>
    %350 = arith.addf %343, %349 : vector<9x9x64xf32>
    %351 = vector.extract_strided_slice %336 {offsets = [2, 0, 0], sizes = [9, 9, 64], strides = [1, 1, 1]} : vector<14x9x64xf32> to vector<9x9x64xf32>
    %352 = vector.extract_strided_slice %59 {offsets = [2, 5, 0], sizes = [1, 1, 64], strides = [1, 1, 1]} : vector<6x6x64xf32> to vector<1x1x64xf32>
    %353 = vector.shape_cast %352 : vector<1x1x64xf32> to vector<64xf32>
    %354 = vector.shape_cast %353 : vector<64xf32> to vector<1x1x64xf32>
    %355 = vector.broadcast %354 : vector<1x1x64xf32> to vector<9x9x64xf32>
    %356 = arith.mulf %351, %355 : vector<9x9x64xf32>
    %357 = arith.addf %350, %356 : vector<9x9x64xf32>
    %358 = vector.extract_strided_slice %336 {offsets = [3, 0, 0], sizes = [9, 9, 64], strides = [1, 1, 1]} : vector<14x9x64xf32> to vector<9x9x64xf32>
    %359 = vector.extract_strided_slice %59 {offsets = [3, 5, 0], sizes = [1, 1, 64], strides = [1, 1, 1]} : vector<6x6x64xf32> to vector<1x1x64xf32>
    %360 = vector.shape_cast %359 : vector<1x1x64xf32> to vector<64xf32>
    %361 = vector.shape_cast %360 : vector<64xf32> to vector<1x1x64xf32>
    %362 = vector.broadcast %361 : vector<1x1x64xf32> to vector<9x9x64xf32>
    %363 = arith.mulf %358, %362 : vector<9x9x64xf32>
    %364 = arith.addf %357, %363 : vector<9x9x64xf32>
    %365 = vector.extract_strided_slice %336 {offsets = [4, 0, 0], sizes = [9, 9, 64], strides = [1, 1, 1]} : vector<14x9x64xf32> to vector<9x9x64xf32>
    %366 = vector.extract_strided_slice %59 {offsets = [4, 5, 0], sizes = [1, 1, 64], strides = [1, 1, 1]} : vector<6x6x64xf32> to vector<1x1x64xf32>
    %367 = vector.shape_cast %366 : vector<1x1x64xf32> to vector<64xf32>
    %368 = vector.shape_cast %367 : vector<64xf32> to vector<1x1x64xf32>
    %369 = vector.broadcast %368 : vector<1x1x64xf32> to vector<9x9x64xf32>
    %370 = arith.mulf %365, %369 : vector<9x9x64xf32>
    %371 = arith.addf %364, %370 : vector<9x9x64xf32>
    %372 = vector.extract_strided_slice %336 {offsets = [5, 0, 0], sizes = [9, 9, 64], strides = [1, 1, 1]} : vector<14x9x64xf32> to vector<9x9x64xf32>
    %373 = vector.extract_strided_slice %59 {offsets = [5, 5, 0], sizes = [1, 1, 64], strides = [1, 1, 1]} : vector<6x6x64xf32> to vector<1x1x64xf32>
    %374 = vector.shape_cast %373 : vector<1x1x64xf32> to vector<64xf32>
    %375 = vector.shape_cast %374 : vector<64xf32> to vector<1x1x64xf32>
    %376 = vector.broadcast %375 : vector<1x1x64xf32> to vector<9x9x64xf32>
    %377 = arith.mulf %372, %376 : vector<9x9x64xf32>
    %378 = arith.addf %371, %377 : vector<9x9x64xf32>
    %c0_103 = arith.constant 0 : index
    %c0_104 = arith.constant 0 : index
    %c0_105 = arith.constant 0 : index
    %c0_106 = arith.constant 0 : index
    %379 = vector.load %arg9[%c0_103, %c0_104, %c0_105, %c0_106] : memref<1x9x9x64xf32, #tpu.memory_space<vmem>>, vector<1x9x9x64xf32>
    %380 = vector.shape_cast %379 : vector<1x9x9x64xf32> to vector<9x9x64xf32>
    %381 = vector.shape_cast %378 : vector<9x9x64xf32> to vector<1x9x9x64xf32>
    tpu.vector_store %arg9[%c0_103, %c0_104, %c0_105, %c0_106], %381 {strides = array<i32>} : memref<1x9x9x64xf32, #tpu.memory_space<vmem>>, vector<1x9x9x64xf32>,
    return
  }
  func.func @transform_0(%arg0: i32) -> (i32, i32, i32, i32) {
    %c0_i32 = arith.constant 0 : i32
    %c0_i32_0 = arith.constant 0 : i32
    %c0_i32_1 = arith.constant 0 : i32
    %c0_i32_2 = arith.constant 0 : i32
    return %arg0, %c0_i32, %c0_i32_0, %c0_i32_1 : i32, i32, i32, i32
  }
  func.func @transform_1(%arg0: i32) -> (i32, i32, i32, i32) {
    %c0_i32 = arith.constant 0 : i32
    %c0_i32_0 = arith.constant 0 : i32
    %c0_i32_1 = arith.constant 0 : i32
    %c0_i32_2 = arith.constant 0 : i32
    return %arg0, %c0_i32, %c0_i32_0, %c0_i32_1 : i32, i32, i32, i32
  }
  func.func @transform_2(%arg0: i32) -> (i32, i32, i32, i32) {
    %c0_i32 = arith.constant 0 : i32
    %c0_i32_0 = arith.constant 0 : i32
    %c0_i32_1 = arith.constant 0 : i32
    %c0_i32_2 = arith.constant 0 : i32
    %c0_i32_3 = arith.constant 0 : i32
    return %c0_i32, %c0_i32_0, %c0_i32_1, %c0_i32_2 : i32, i32, i32, i32
  }
  func.func @transform_3(%arg0: i32) -> (i32, i32, i32, i32) {
    %c0_i32 = arith.constant 0 : i32
    %c0_i32_0 = arith.constant 0 : i32
    %c0_i32_1 = arith.constant 0 : i32
    %c0_i32_2 = arith.constant 0 : i32
    %c0_i32_3 = arith.constant 0 : i32
    return %c0_i32, %c0_i32_0, %c0_i32_1, %c0_i32_2 : i32, i32, i32, i32
  }
  func.func @transform_4(%arg0: i32) -> (i32, i32) {
    %c0_i32 = arith.constant 0 : i32
    %c0_i32_0 = arith.constant 0 : i32
    %c0_i32_1 = arith.constant 0 : i32
    return %c0_i32, %c0_i32_0 : i32, i32
  }
  func.func @transform_5(%arg0: i32) -> (i32, i32) {
    %c0_i32 = arith.constant 0 : i32
    %c0_i32_0 = arith.constant 0 : i32
    %c0_i32_1 = arith.constant 0 : i32
    return %c0_i32, %c0_i32_0 : i32, i32
  }
  func.func @transform_6(%arg0: i32) -> (i32, i32) {
    %c0_i32 = arith.constant 0 : i32
    %c0_i32_0 = arith.constant 0 : i32
    %c0_i32_1 = arith.constant 0 : i32
    return %c0_i32, %c0_i32_0 : i32, i32
  }
  func.func @transform_7(%arg0: i32) -> (i32, i32) {
    %c0_i32 = arith.constant 0 : i32
    %c0_i32_0 = arith.constant 0 : i32
    %c0_i32_1 = arith.constant 0 : i32
    return %c0_i32, %c0_i32_0 : i32, i32
  }
  func.func @transform_8(%arg0: i32) -> (i32, i32, i32, i32) {
    %c0_i32 = arith.constant 0 : i32
    %c0_i32_0 = arith.constant 0 : i32
    %c0_i32_1 = arith.constant 0 : i32
    %c0_i32_2 = arith.constant 0 : i32
    return %arg0, %c0_i32, %c0_i32_0, %c0_i32_1 : i32, i32, i32, i32
  }
}

</mosaic_0001>

<llo_original>
// kernel: siamfcpp_neck.1
$region0: #{siamfcpp_neck.1}
  #allocation0 [shape = 'u32[]', space=smem, size = 0x4, offset = 0x4, fixed_abs, tag = 'smem constant byte address 0x4 - core index']
  #allocation1 [shape = 'u32[144,128]{1,0:T(1,128)}', space=vmem, size = 0x12000, scoped, tag = 'internal scratch']
  %s0 = inlined_call_operand.vmem [shape: f32[2,8,8,32], index: 0, kind: input, shape index: {}]
  %s1 = inlined_call_operand.vmem [shape: f32[2,16,16,32], index: 1, kind: input, shape index: {}]
  %s2 = inlined_call_operand.vmem [shape: bf16[3,3,32,64], index: 2, kind: input, shape index: {}]
  %s3 = inlined_call_operand.vmem [shape: bf16[3,3,32,64], index: 3, kind: input, shape index: {}]
  %s4 = inlined_call_operand.vmem [shape: f32[1,64], index: 4, kind: input, shape index: {}]
  %s5 = inlined_call_operand.vmem [shape: f32[1,64], index: 5, kind: input, shape index: {}]
  %s6 = inlined_call_operand.vmem [shape: f32[1,64], index: 6, kind: input, shape index: {}]
  %s7 = inlined_call_operand.vmem [shape: f32[1,64], index: 7, kind: input, shape index: {}]
  %s8 = inlined_call_operand.vmem [shape: f32[2,9,9,64], index: 8, kind: output, shape index: {}]
  %s9 = sld [smem:[#allocation0]]
  $region65: #{siamfcpp_neck.1} parent=0
    _
  %s11 = ssub.s32 1, %s9
  %s12 = scalar_select 0, %s11, %s9
  loop: start=0, step=1, limit=4
  $region2: #{siamfcpp_neck.1} parent=0 // loop_pre_header
    _
  $region3: #{siamfcpp_neck.1} parent=0 // loop_header
    %s14 = sphi 0, %s18
    %p15 = scmp.ge.s32.totalorder %s14, 4
    %s24 = sphi 0, %s26
    %s27 = sphi 0, %s24
    %s28 = sphi 0, %s27
    %s44 = sphi 0, %s28
    %s50 = sphi 0, %s52
    %s53 = sphi 0, %s50
    %s54 = sphi 0, %s53
    %s70 = sphi 0, %s54
    %s74 = sphi 0, %s74
    %s76 = sphi 0, %s74
    %s77 = sphi 0, %s76
    %s91 = sphi 0, %s77
    %s95 = sphi 0, %s95
    %s97 = sphi 0, %s95
    %s98 = sphi 0, %s97
    %s112 = sphi 0, %s98
    %s116 = sphi 0, %s116
    %s118 = sphi 0, %s116
    %s119 = sphi 0, %s118
    %s133 = sphi 0, %s119
    %s137 = sphi 0, %s137
    %s139 = sphi 0, %s137
    %s140 = sphi 0, %s139
    %s154 = sphi 0, %s140
    %s158 = sphi 0, %s158
    %s160 = sphi 0, %s158
    %s161 = sphi 0, %s160
    %s175 = sphi 0, %s161
    %s179 = sphi 0, %s179
    %s181 = sphi 0, %s179
    %s182 = sphi 0, %s181
    %s196 = sphi 0, %s182
    %s202 = sphi 0, %s204
    %s205 = sphi 0, %s202
    %s206 = sphi 0, %s205
    %s222 = sphi 0, %s206
  $region4: #{siamfcpp_neck.1} parent=0 // loop_header_branch
    %17 = sbr.rel (%p15) target = $region8
  $region5: #{siamfcpp_neck.1} parent=0 // loop_body
    %s19 = ssub.s32 %s14, 1
    %s20 = ssub.s32 %s14, 2
    %s21 = sadd.s32 %s14, 1
    %s22 = ssub.s32 %s14, %s21
    %p23 = scmp.eq.s32.totalorder %s22, 0
    %s25 = sadd.s32 %s24, 1
    %s26 = scalar_select %p23, %s24, %s25
    %p29 = pneg %p23
    %p30 = scmp.eq.s32.totalorder %s14, 1
    %p31 = por %p29, %p30
    %p32 = scmp.ne.s32.totalorder %s24, %s27
    %p33 = scmp.eq.s32.totalorder %s14, 0
    %p34 = por %p32, %p33
    %p35 = scmp.ne.s32.totalorder %s24, %s27
    %p36 = scmp.eq.s32.totalorder %s19, 1
    %p37 = por %p35, %p36
    %p38 = scmp.ne.s32.totalorder %s27, %s28
    %p39 = scmp.eq.s32.totalorder %s19, 0
    %p40 = por %p38, %p39
    %p41 = scmp.ne.s32.totalorder %s27, %s28
    %p42 = scmp.eq.s32.totalorder %s20, 1
    %p43 = por %p41, %p42
    %p45 = scmp.ne.s32.totalorder %s28, %s44
    %p46 = scmp.eq.s32.totalorder %s20, 0
    %p47 = por %p45, %p46
    %s48 = ssub.s32 %s14, %s21
    %p49 = scmp.eq.s32.totalorder %s48, 0
    %s51 = sadd.s32 %s50, 1
    %s52 = scalar_select %p49, %s50, %s51
    %p55 = pneg %p49
    %p56 = scmp.eq.s32.totalorder %s14, 1
    %p57 = por %p55, %p56
    %p58 = scmp.ne.s32.totalorder %s50, %s53
    %p59 = scmp.eq.s32.totalorder %s14, 0
    %p60 = por %p58, %p59
    %p61 = scmp.ne.s32.totalorder %s50, %s53
    %p62 = scmp.eq.s32.totalorder %s19, 1
    %p63 = por %p61, %p62
    %p64 = scmp.ne.s32.totalorder %s53, %s54
    %p65 = scmp.eq.s32.totalorder %s19, 0
    %p66 = por %p64, %p65
    %p67 = scmp.ne.s32.totalorder %s53, %s54
    %p68 = scmp.eq.s32.totalorder %s20, 1
    %p69 = por %p67, %p68
    %p71 = scmp.ne.s32.totalorder %s54, %s70
    %p72 = scmp.eq.s32.totalorder %s20, 0
    %p73 = por %p71, %p72
    %s75 = sadd.s32 %s74, 1
    %p78 = scmp.eq.s32.totalorder %s14, 1
    %p79 = scmp.ne.s32.totalorder %s74, %s76
    %p80 = scmp.eq.s32.totalorder %s14, 0
    %p81 = por %p79, %p80
    %p82 = scmp.ne.s32.totalorder %s74, %s76
    %p83 = scmp.eq.s32.totalorder %s19, 1
    %p84 = por %p82, %p83
    %p85 = scmp.ne.s32.totalorder %s76, %s77
    %p86 = scmp.eq.s32.totalorder %s19, 0
    %p87 = por %p85, %p86
    %p88 = scmp.ne.s32.totalorder %s76, %s77
    %p89 = scmp.eq.s32.totalorder %s20, 1
    %p90 = por %p88, %p89
    %p92 = scmp.ne.s32.totalorder %s77, %s91
    %p93 = scmp.eq.s32.totalorder %s20, 0
    %p94 = por %p92, %p93
    %s96 = sadd.s32 %s95, 1
    %p99 = scmp.eq.s32.totalorder %s14, 1
    %p100 = scmp.ne.s32.totalorder %s95, %s97
    %p101 = scmp.eq.s32.totalorder %s14, 0
    %p102 = por %p100, %p101
    %p103 = scmp.ne.s32.totalorder %s95, %s97
    %p104 = scmp.eq.s32.totalorder %s19, 1
    %p105 = por %p103, %p104
    %p106 = scmp.ne.s32.totalorder %s97, %s98
    %p107 = scmp.eq.s32.totalorder %s19, 0
    %p108 = por %p106, %p107
    %p109 = scmp.ne.s32.totalorder %s97, %s98
    %p110 = scmp.eq.s32.totalorder %s20, 1
    %p111 = por %p109, %p110
    %p113 = scmp.ne.s32.totalorder %s98, %s112
    %p114 = scmp.eq.s32.totalorder %s20, 0
    %p115 = por %p113, %p114
    %s117 = sadd.s32 %s116, 1
    %p120 = scmp.eq.s32.totalorder %s14, 1
    %p121 = scmp.ne.s32.totalorder %s116, %s118
    %p122 = scmp.eq.s32.totalorder %s14, 0
    %p123 = por %p121, %p122
    %p124 = scmp.ne.s32.totalorder %s116, %s118
    %p125 = scmp.eq.s32.totalorder %s19, 1
    %p126 = por %p124, %p125
    %p127 = scmp.ne.s32.totalorder %s118, %s119
    %p128 = scmp.eq.s32.totalorder %s19, 0
    %p129 = por %p127, %p128
    %p130 = scmp.ne.s32.totalorder %s118, %s119
    %p131 = scmp.eq.s32.totalorder %s20, 1
    %p132 = por %p130, %p131
    %p134 = scmp.ne.s32.totalorder %s119, %s133
    %p135 = scmp.eq.s32.totalorder %s20, 0
    %p136 = por %p134, %p135
    %s138 = sadd.s32 %s137, 1
    %p141 = scmp.eq.s32.totalorder %s14, 1
    %p142 = scmp.ne.s32.totalorder %s137, %s139
    %p143 = scmp.eq.s32.totalorder %s14, 0
    %p144 = por %p142, %p143
    %p145 = scmp.ne.s32.totalorder %s137, %s139
    %p146 = scmp.eq.s32.totalorder %s19, 1
    %p147 = por %p145, %p146
    %p148 = scmp.ne.s32.totalorder %s139, %s140
    %p149 = scmp.eq.s32.totalorder %s19, 0
    %p150 = por %p148, %p149
    %p151 = scmp.ne.s32.totalorder %s139, %s140
    %p152 = scmp.eq.s32.totalorder %s20, 1
    %p153 = por %p151, %p152
    %p155 = scmp.ne.s32.totalorder %s140, %s154
    %p156 = scmp.eq.s32.totalorder %s20, 0
    %p157 = por %p155, %p156
    %s159 = sadd.s32 %s158, 1
    %p162 = scmp.eq.s32.totalorder %s14, 1
    %p163 = scmp.ne.s32.totalorder %s158, %s160
    %p164 = scmp.eq.s32.totalorder %s14, 0
    %p165 = por %p163, %p164
    %p166 = scmp.ne.s32.totalorder %s158, %s160
    %p167 = scmp.eq.s32.totalorder %s19, 1
    %p168 = por %p166, %p167
    %p169 = scmp.ne.s32.totalorder %s160, %s161
    %p170 = scmp.eq.s32.totalorder %s19, 0
    %p171 = por %p169, %p170
    %p172 = scmp.ne.s32.totalorder %s160, %s161
    %p173 = scmp.eq.s32.totalorder %s20, 1
    %p174 = por %p172, %p173
    %p176 = scmp.ne.s32.totalorder %s161, %s175
    %p177 = scmp.eq.s32.totalorder %s20, 0
    %p178 = por %p176, %p177
    %s180 = sadd.s32 %s179, 1
    %p183 = scmp.eq.s32.totalorder %s14, 1
    %p184 = scmp.ne.s32.totalorder %s179, %s181
    %p185 = scmp.eq.s32.totalorder %s14, 0
    %p186 = por %p184, %p185
    %p187 = scmp.ne.s32.totalorder %s179, %s181
    %p188 = scmp.eq.s32.totalorder %s19, 1
    %p189 = por %p187, %p188
    %p190 = scmp.ne.s32.totalorder %s181, %s182
    %p191 = scmp.eq.s32.totalorder %s19, 0
    %p192 = por %p190, %p191
    %p193 = scmp.ne.s32.totalorder %s181, %s182
    %p194 = scmp.eq.s32.totalorder %s20, 1
    %p195 = por %p193, %p194
    %p197 = scmp.ne.s32.totalorder %s182, %s196
    %p198 = scmp.eq.s32.totalorder %s20, 0
    %p199 = por %p197, %p198
    %s200 = ssub.s32 %s14, %s21
    %p201 = scmp.eq.s32.totalorder %s200, 0
    %s203 = sadd.s32 %s202, 1
    %s204 = scalar_select %p201, %s202, %s203
    %p207 = pneg %p201
    %p208 = scmp.eq.s32.totalorder %s14, 1
    %p209 = por %p207, %p208
    %p210 = scmp.ne.s32.totalorder %s202, %s205
    %p211 = scmp.eq.s32.totalorder %s14, 0
    %p212 = por %p210, %p211
    %p213 = scmp.ne.s32.totalorder %s202, %s205
    %p214 = scmp.eq.s32.totalorder %s19, 1
    %p215 = por %p213, %p214
    %p216 = scmp.ne.s32.totalorder %s205, %s206
    %p217 = scmp.eq.s32.totalorder %s19, 0
    %p218 = por %p216, %p217
    %p219 = scmp.ne.s32.totalorder %s205, %s206
    %p220 = scmp.eq.s32.totalorder %s20, 1
    %p221 = por %p219, %p220
    %p223 = scmp.ne.s32.totalorder %s206, %s222
    %p224 = scmp.eq.s32.totalorder %s20, 0
    %p225 = por %p223, %p224
    %p226 = scmp.le.s32.totalorder 1, %s14
    %p227 = scmp.lt.s32.totalorder %s14, 3
    %p228 = pnand %p226, %p227
    %p229 = pneg %p228
    // Predicated region
    $region9: #{siamfcpp_neck.1} parent=5 // pred_check
      _
    $region10: #{siamfcpp_neck.1} parent=5 // pred_check_branch
      %231 = sbr.rel (%p228) target = $region12
    $region11: #{siamfcpp_neck.1} parent=5 // pred_region
      %s232 = ssub.s32 %s14, 1
      // Predicated region
      $region13: #{siamfcpp_neck.1} parent=11 // pred_check
        %p233 = pneg %p87
      $region14: #{siamfcpp_neck.1} parent=11 // pred_check_branch
        %235 = sbr.rel (%p233) target = $region16
      $region15: #{siamfcpp_neck.1} parent=11 // pred_region
        _
      $region16: #{siamfcpp_neck.1} parent=11 // pred_fallthru
        _
      // Predicated region
      $region17: #{siamfcpp_neck.1} parent=11 // pred_check
        %p236 = pneg %p108
      $region18: #{siamfcpp_neck.1} parent=11 // pred_check_branch
        %238 = sbr.rel (%p236) target = $region20
      $region19: #{siamfcpp_neck.1} parent=11 // pred_region
        _
      $region20: #{siamfcpp_neck.1} parent=11 // pred_fallthru
        _
      // Predicated region
      $region21: #{siamfcpp_neck.1} parent=11 // pred_check
        %p239 = pneg %p129
      $region22: #{siamfcpp_neck.1} parent=11 // pred_check_branch
        %241 = sbr.rel (%p239) target = $region24
      $region23: #{siamfcpp_neck.1} parent=11 // pred_region
        _
      $region24: #{siamfcpp_neck.1} parent=11 // pred_fallthru
        _
      // Predicated region
      $region25: #{siamfcpp_neck.1} parent=11 // pred_check
        %p242 = pneg %p150
      $region26: #{siamfcpp_neck.1} parent=11 // pred_check_branch
        %244 = sbr.rel (%p242) target = $region28
      $region27: #{siamfcpp_neck.1} parent=11 // pred_region
        _
      $region28: #{siamfcpp_neck.1} parent=11 // pred_fallthru
        _
      // Predicated region
      $region29: #{siamfcpp_neck.1} parent=11 // pred_check
        %p245 = pneg %p171
      $region30: #{siamfcpp_neck.1} parent=11 // pred_check_branch
        %247 = sbr.rel (%p245) target = $region32
      $region31: #{siamfcpp_neck.1} parent=11 // pred_region
        _
      $region32: #{siamfcpp_neck.1} parent=11 // pred_fallthru
        _
      // Predicated region
      $region33: #{siamfcpp_neck.1} parent=11 // pred_check
        %p248 = pneg %p192
      $region34: #{siamfcpp_neck.1} parent=11 // pred_check_branch
        %250 = sbr.rel (%p248) target = $region36
      $region35: #{siamfcpp_neck.1} parent=11 // pred_region
        _
      $region36: #{siamfcpp_neck.1} parent=11 // pred_fallthru
        _
    $region12: #{siamfcpp_neck.1} parent=5 // pred_fallthru
      _
    %p251 = scmp.lt.s32.totalorder %s14, 2
    // Predicated region
    $region37: #{siamfcpp_neck.1} parent=5 // pred_check
      %p252 = pneg %p251
    $region38: #{siamfcpp_neck.1} parent=5 // pred_check_branch
      %254 = sbr.rel (%p252) target = $region40
    $region39: #{siamfcpp_neck.1} parent=5 // pred_region
      // Predicated region
      $region41: #{siamfcpp_neck.1} parent=39 // pred_check
        %p255 = pneg %p34
      $region42: #{siamfcpp_neck.1} parent=39 // pred_check_branch
        %257 = sbr.rel (%p255) target = $region44
      $region43: #{siamfcpp_neck.1} parent=39 // pred_region
        %p258 = scmp.lt.s32.totalorder %s14, 1
        %s259 = scalar_select %p258, %s14, 1
        %s260 = smul.addr %s259, 8
        %s261 = smul.addr %s260, 8
        %s262 = scalar_lea.vmem %s0, %s261
      $region44: #{siamfcpp_neck.1} parent=39 // pred_fallthru
        _
      // Predicated region
      $region45: #{siamfcpp_neck.1} parent=39 // pred_check
        %p263 = pneg %p60
      $region46: #{siamfcpp_neck.1} parent=39 // pred_check_branch
        %265 = sbr.rel (%p263) target = $region48
      $region47: #{siamfcpp_neck.1} parent=39 // pred_region
        %p266 = scmp.lt.s32.totalorder %s14, 1
        %s267 = scalar_select %p266, %s14, 1
        %s268 = smul.addr %s267, 32
        %s269 = smul.addr %s268, 8
        %s270 = scalar_lea.vmem %s1, %s269
      $region48: #{siamfcpp_neck.1} parent=39 // pred_fallthru
        _
    $region40: #{siamfcpp_neck.1} parent=5 // pred_fallthru
      _
    %p271 = scmp.le.s32.totalorder 1, %s14
    %p272 = scmp.lt.s32.totalorder %s14, 3
    %p273 = pnand %p271, %p272
    %p274 = pneg %p273
    // Predicated region
    $region49: #{siamfcpp_neck.1} parent=5 // pred_check
      _
    $region50: #{siamfcpp_neck.1} parent=5 // pred_check_branch
      %276 = sbr.rel (%p273) target = $region52
    $region51: #{siamfcpp_neck.1} parent=5 // pred_region
      %s277 = ssub.s32 %s14, 1
      %p278 = scmp.lt.s32.totalorder %s19, 1
      %s279 = scalar_select %p278, %s19, 1
      %s280 = smul.addr %s279, 8
      %s281 = smul.addr %s280, 8
      %s282 = scalar_lea.vmem %s0, %s281
      %p283 = pneg %p40
      %p284 = pneg %p37
      %p285 = scmp.lt.s32.totalorder %s19, 1
      %s286 = scalar_select %p285, %s19, 1
      %s287 = smul.addr %s286, 32
      %s288 = smul.addr %s287, 8
      %s289 = scalar_lea.vmem %s1, %s288
      %p290 = pneg %p66
      %p291 = pneg %p63
      %p292 = pneg %p87
      %p293 = pneg %p84
      %p294 = pneg %p108
      %p295 = pneg %p105
      %p296 = pneg %p129
      %p297 = pneg %p126
      %p298 = pneg %p150
      %p299 = pneg %p147
      %p300 = pneg %p171
      %p301 = pneg %p168
      %p302 = pneg %p192
      %p303 = pneg %p189
      %p304 = pneg %p218
      %p305 = pneg %p215
      %p306 = scmp.lt.s32.totalorder %s19, 1
      %s307 = scalar_select %p306, %s19, 1
      %s308 = smul.addr %s307, 18
      %s309 = smul.addr %s308, 8
      %s310 = scalar_lea.vmem %s8, %s309
      %p311 = scmp.lt.s32.totalorder %s19, 1
      %s312 = scalar_select %p311, %s19, 1
      %s313 = smul.addr %s312, 8
      %s314 = smul.addr %s313, 8
      %s315 = scalar_lea.vmem %s0, %s314
      %p316 = scmp.lt.s32.totalorder %s19, 1
      %s317 = scalar_select %p316, %s19, 1
      %s318 = smul.addr %s317, 32
      %s319 = smul.addr %s318, 8
      %s320 = scalar_lea.vmem %s1, %s319
      %p321 = scmp.lt.s32.totalorder %s19, 1
      %s322 = scalar_select %p321, %s19, 1
      %s323 = smul.addr %s322, 18
      %s324 = smul.addr %s323, 8
      %s325 = scalar_lea.vmem %s8, %s324
      %v327 = vld [vmem:[%s315] sm:$0xff]
      %v328 = vld [vmem:[%s315 + $0x8] sm:$0xff]
      %v329 = vld [vmem:[%s315 + $0x10] sm:$0xff]
      %v330 = vld [vmem:[%s315 + $0x18] sm:$0xff]
      %v331 = vld [vmem:[%s315 + $0x20] sm:$0xff]
      %v332 = vld [vmem:[%s315 + $0x28] sm:$0xff]
      %v333 = vld [vmem:[%s315 + $0x30] sm:$0xff]
      %v334 = vld [vmem:[%s315 + $0x38] sm:$0xff]
      %v335 = vld [vmem:[%s4] sm:$0x1]
      %v336 = vld [vmem:[%s5] sm:$0x1]
      %v337 = vpack.c.bf16 %v328, %v327
      %v338 = vpack.c.bf16 %v330, %v329
      %v339 = vpack.c.bf16 %v332, %v331
      %v340 = vld [vmem:[%s2] sm:$0xf]
      %v341 = vld [vmem:[%s2 + $0x4] sm:$0xf]
      %v342 = vld [vmem:[%s2 + $0x8] sm:$0xf]
      %v343 = vld [vmem:[%s2 + $0xc] sm:$0xf]
      %s344 = scalar_lea.vmem %s2, 16
      %v345 = vld [vmem:[%s344] sm:$0xf]
      %v346 = vld [vmem:[%s344 + $0x4] sm:$0xf]
      %v347 = vld [vmem:[%s344 + $0x8] sm:$0xf]
      %v348 = vld [vmem:[%s344 + $0xc] sm:$0xf]
      %s349 = scalar_lea.vmem %s2, 32
      %v350 = vld [vmem:[%s349] sm:$0xf]
      %v351 = vld [vmem:[%s349 + $0x4] sm:$0xf]
      %v352 = vld [vmem:[%s349 + $0x8] sm:$0xf]
      %v353 = vld [vmem:[%s349 + $0xc] sm:$0xf]
      %v354 = vpack.c.bf16 %v329, %v328
      %v355 = vpack.c.bf16 %v331, %v330
      %v356 = vpack.c.bf16 %v333, %v332
      %s357 = scalar_lea.vmem %s2, 48
      %v358 = vld [vmem:[%s357] sm:$0xf]
      %v359 = vld [vmem:[%s357 + $0x4] sm:$0xf]
      %v360 = vld [vmem:[%s357 + $0x8] sm:$0xf]
      %v361 = vld [vmem:[%s357 + $0xc] sm:$0xf]
      %v366 = vunpack.c.l.b16 %v358
      %v367 = vunpack.c.l.b16 %v359
      %v368 = vunpack.c.l.b16 %v360
      %v369 = vunpack.c.l.b16 %v361
      %v370 = vpack.c.b16 %v367, %v366
      %v371 = vpack.c.b16 %v369, %v368
      %vm374 = vcmask 261120
      %v376 = vsel %vm374, %v354, 0
      %v379 = vsel %vm374, %v355, 0
      %v382 = vsel %vm374, %v356, 0
      %384 = vmatprep.subr.bf16.mxu0 0
      %385 = vmatpush1.bf16.msra.mxu0 %v370
      %386 = vmatprep.subr.bf16.mxu0 0
      %387 = vmatpush1.bf16.msra.mxu0 %v371
      %388 = vmatprep.subr.bf16.mxu0 0
      %389 = vmatpush1.bf16.msra.mxu0 0
      %390 = vmatprep.subr.bf16.mxu0 0
      %391 = vmatpush1.bf16.msra.mxu0 0
      %392 = vmatprep.subr.bf16.mxu0 0
      %393 = vmatpush1.bf16.msra.mxu0 0
      %394 = vmatprep.subr.bf16.mxu0 0
      %395 = vmatpush1.bf16.msra.mxu0 0
      %396 = vmatprep.subr.bf16.mxu0 0
      %397 = vmatpush1.bf16.msra.mxu0 0
      %398 = vmatprep.subr.bf16.mxu0 0
      %399 = vmatpush1.bf16.msra.mxu0 0
      %400 = vmatprep.subr.bf16.mxu0 0
      %401 = vmatpush1.bf16.msra.mxu0 0
      %402 = vmatprep.subr.bf16.mxu0 0
      %403 = vmatpush1.bf16.msra.mxu0 0
      %404 = vmatprep.subr.bf16.mxu0 0
      %405 = vmatpush1.bf16.msra.mxu0 0
      %406 = vmatprep.subr.bf16.mxu0 0
      %407 = vmatpush1.bf16.msra.mxu0 0
      %408 = vmatprep.subr.bf16.mxu0 0
      %409 = vmatpush1.bf16.msra.mxu0 0
      %410 = vmatprep.subr.bf16.mxu0 0
      %411 = vmatpush1.bf16.msra.mxu0 0
      %412 = vmatprep.subr.bf16.mxu0 0
      %413 = vmatpush1.bf16.msra.mxu0 0
      %414 = vmatprep.subr.bf16.mxu0 0
      %415 = vmatpush1.bf16.msra.mxu0 0
      %416 = vmatprep.mubr.bf16.mxu0 0
      %417 = vmatmul.mubr.bf16.gmra.mrb[0].mxu0 %v376
      %v418 = vpop.f32.mrb[0].mxu0
      %v419 = vadd.f32 0.0, %v418
      %v420 = vpop.f32.mrb[0].mxu0
      %v421 = vpop.f32.mrb[0].mxu0
      %v422 = vadd.f32 0.0, %v421
      %v423 = vpop.f32.mrb[0].mxu0
      %424 = vmatprep.mubr.bf16.mxu0 0
      %425 = vmatmul.mubr.bf16.gmra.mrb[0].mxu0 %v379
      %v426 = vpop.f32.mrb[0].mxu0
      %v427 = vadd.f32 0.0, %v426
      %v428 = vpop.f32.mrb[0].mxu0
      %v429 = vpop.f32.mrb[0].mxu0
      %v430 = vadd.f32 0.0, %v429
      %v431 = vpop.f32.mrb[0].mxu0
      %432 = vmatprep.mubr.bf16.mxu0 0
      %433 = vmatmul.mubr.bf16.gmra.mrb[0].mxu0 %v382
      %v434 = vpop.f32.mrb[0].mxu0
      %v435 = vadd.f32 0.0, %v434
      %v436 = vpop.f32.mrb[0].mxu0
      %v437 = vpop.f32.mrb[0].mxu0
      %v438 = vadd.f32 0.0, %v437
      %v439 = vpop.f32.mrb[0].mxu0
      %440 = vdwg.mxu0
      %v445 = vunpack.c.l.b16 %v340
      %v446 = vunpack.c.l.b16 %v341
      %v447 = vunpack.c.l.b16 %v342
      %v448 = vunpack.c.l.b16 %v343
      %v449 = vpack.c.b16 %v446, %v445
      %v450 = vpack.c.b16 %v448, %v447
      %v454 = vsel %vm374, %v337, 0
      %v457 = vsel %vm374, %v338, 0
      %v460 = vsel %vm374, %v339, 0
      %462 = vmatprep.subr.bf16.mxu0 0
      %463 = vmatpush1.bf16.msra.mxu0 %v449
      %464 = vmatprep.subr.bf16.mxu0 0
      %465 = vmatpush1.bf16.msra.mxu0 %v450
      %466 = vmatprep.subr.bf16.mxu0 0
      %467 = vmatpush1.bf16.msra.mxu0 0
      %468 = vmatprep.subr.bf16.mxu0 0
      %469 = vmatpush1.bf16.msra.mxu0 0
      %470 = vmatprep.subr.bf16.mxu0 0
      %471 = vmatpush1.bf16.msra.mxu0 0
      %472 = vmatprep.subr.bf16.mxu0 0
      %473 = vmatpush1.bf16.msra.mxu0 0
      %474 = vmatprep.subr.bf16.mxu0 0
      %475 = vmatpush1.bf16.msra.mxu0 0
      %476 = vmatprep.subr.bf16.mxu0 0
      %477 = vmatpush1.bf16.msra.mxu0 0
      %478 = vmatprep.subr.bf16.mxu0 0
      %479 = vmatpush1.bf16.msra.mxu0 0
      %480 = vmatprep.subr.bf16.mxu0 0
      %481 = vmatpush1.bf16.msra.mxu0 0
      %482 = vmatprep.subr.bf16.mxu0 0
      %483 = vmatpush1.bf16.msra.mxu0 0
      %484 = vmatprep.subr.bf16.mxu0 0
      %485 = vmatpush1.bf16.msra.mxu0 0
      %486 = vmatprep.subr.bf16.mxu0 0
      %487 = vmatpush1.bf16.msra.mxu0 0
      %488 = vmatprep.subr.bf16.mxu0 0
      %489 = vmatpush1.bf16.msra.mxu0 0
      %490 = vmatprep.subr.bf16.mxu0 0
      %491 = vmatpush1.bf16.msra.mxu0 0
      %492 = vmatprep.subr.bf16.mxu0 0
      %493 = vmatpush1.bf16.msra.mxu0 0
      %494 = vmatprep.mubr.bf16.mxu0 0
      %495 = vmatmul.mubr.bf16.gmra.mrb[0].mxu0 %v454
      %v496 = vpop.f32.mrb[0].mxu0
      %v497 = vadd.f32 %v419, %v496
      %v498 = vpop.f32.mrb[0].mxu0
      %v499 = vpop.f32.mrb[0].mxu0
      %v500 = vadd.f32 %v422, %v499
      %v501 = vpop.f32.mrb[0].mxu0
      %502 = vmatprep.mubr.bf16.mxu0 0
      %503 = vmatmul.mubr.bf16.gmra.mrb[0].mxu0 %v457
      %v504 = vpop.f32.mrb[0].mxu0
      %v505 = vadd.f32 %v427, %v504
      %v506 = vpop.f32.mrb[0].mxu0
      %v507 = vpop.f32.mrb[0].mxu0
      %v508 = vadd.f32 %v430, %v507
      %v509 = vpop.f32.mrb[0].mxu0
      %510 = vmatprep.mubr.bf16.mxu0 0
      %511 = vmatmul.mubr.bf16.gmra.mrb[0].mxu0 %v460
      %v512 = vpop.f32.mrb[0].mxu0
      %v513 = vadd.f32 %v435, %v512
      %v514 = vpop.f32.mrb[0].mxu0
      %v515 = vpop.f32.mrb[0].mxu0
      %v516 = vadd.f32 %v438, %v515
      %v517 = vpop.f32.mrb[0].mxu0
      %518 = vdwg.mxu0
      %s519 = scalar_lea.vmem %s2, 64
      %v520 = vld [vmem:[%s519] sm:$0xf]
      %v521 = vld [vmem:[%s519 + $0x4] sm:$0xf]
      %v522 = vld [vmem:[%s519 + $0x8] sm:$0xf]
      %v523 = vld [vmem:[%s519 + $0xc] sm:$0xf]
      %v528 = vunpack.c.l.b16 %v520
      %v529 = vunpack.c.l.b16 %v521
      %v530 = vunpack.c.l.b16 %v522
      %v531 = vunpack.c.l.b16 %v523
      %v532 = vpack.c.b16 %v529, %v528
      %v533 = vpack.c.b16 %v531, %v530
      %536 = vmatprep.subr.bf16.mxu0 0
      %537 = vmatpush1.bf16.msra.mxu0 %v532
      %538 = vmatprep.subr.bf16.mxu0 0
      %539 = vmatpush1.bf16.msra.mxu0 %v533
      %540 = vmatprep.subr.bf16.mxu0 0
      %541 = vmatpush1.bf16.msra.mxu0 0
      %542 = vmatprep.subr.bf16.mxu0 0
      %543 = vmatpush1.bf16.msra.mxu0 0
      %544 = vmatprep.subr.bf16.mxu0 0
      %545 = vmatpush1.bf16.msra.mxu0 0
      %546 = vmatprep.subr.bf16.mxu0 0
      %547 = vmatpush1.bf16.msra.mxu0 0
      %548 = vmatprep.subr.bf16.mxu0 0
      %549 = vmatpush1.bf16.msra.mxu0 0
      %550 = vmatprep.subr.bf16.mxu0 0
      %551 = vmatpush1.bf16.msra.mxu0 0
      %552 = vmatprep.subr.bf16.mxu0 0
      %553 = vmatpush1.bf16.msra.mxu0 0
      %554 = vmatprep.subr.bf16.mxu0 0
      %555 = vmatpush1.bf16.msra.mxu0 0
      %556 = vmatprep.subr.bf16.mxu0 0
      %557 = vmatpush1.bf16.msra.mxu0 0
      %558 = vmatprep.subr.bf16.mxu0 0
      %559 = vmatpush1.bf16.msra.mxu0 0
      %560 = vmatprep.subr.bf16.mxu0 0
      %561 = vmatpush1.bf16.msra.mxu0 0
      %562 = vmatprep.subr.bf16.mxu0 0
      %563 = vmatpush1.bf16.msra.mxu0 0
      %564 = vmatprep.subr.bf16.mxu0 0
      %565 = vmatpush1.bf16.msra.mxu0 0
      %566 = vmatprep.subr.bf16.mxu0 0
      %567 = vmatpush1.bf16.msra.mxu0 0
      %568 = vmatprep.mubr.bf16.mxu0 0
      %569 = vmatmul.mubr.bf16.gmra.mrb[0].mxu0 %v376
      %v570 = vpop.f32.mrb[0].mxu0
      %v571 = vadd.f32 0.0, %v570
      %v572 = vpop.f32.mrb[0].mxu0
      %v573 = vpop.f32.mrb[0].mxu0
      %v574 = vadd.f32 0.0, %v573
      %v575 = vpop.f32.mrb[0].mxu0
      %576 = vmatprep.mubr.bf16.mxu0 0
      %577 = vmatmul.mubr.bf16.gmra.mrb[0].mxu0 %v379
      %v578 = vpop.f32.mrb[0].mxu0
      %v579 = vadd.f32 0.0, %v578
      %v580 = vpop.f32.mrb[0].mxu0
      %v581 = vpop.f32.mrb[0].mxu0
      %v582 = vadd.f32 0.0, %v581
      %v583 = vpop.f32.mrb[0].mxu0
      %584 = vmatprep.mubr.bf16.mxu0 0
      %585 = vmatmul.mubr.bf16.gmra.mrb[0].mxu0 %v382
      %v586 = vpop.f32.mrb[0].mxu0
      %v587 = vadd.f32 0.0, %v586
      %v588 = vpop.f32.mrb[0].mxu0
      %v589 = vpop.f32.mrb[0].mxu0
      %v590 = vadd.f32 0.0, %v589
      %v591 = vpop.f32.mrb[0].mxu0
      %592 = vdwg.mxu0
      %v597 = vunpack.c.l.b16 %v345
      %v598 = vunpack.c.l.b16 %v346
      %v599 = vunpack.c.l.b16 %v347
      %v600 = vunpack.c.l.b16 %v348
      %v601 = vpack.c.b16 %v598, %v597
      %v602 = vpack.c.b16 %v600, %v599
      %605 = vmatprep.subr.bf16.mxu0 0
      %606 = vmatpush1.bf16.msra.mxu0 %v601
      %607 = vmatprep.subr.bf16.mxu0 0
      %608 = vmatpush1.bf16.msra.mxu0 %v602
      %609 = vmatprep.subr.bf16.mxu0 0
      %610 = vmatpush1.bf16.msra.mxu0 0
      %611 = vmatprep.subr.bf16.mxu0 0
      %612 = vmatpush1.bf16.msra.mxu0 0
      %613 = vmatprep.subr.bf16.mxu0 0
      %614 = vmatpush1.bf16.msra.mxu0 0
      %615 = vmatprep.subr.bf16.mxu0 0
      %616 = vmatpush1.bf16.msra.mxu0 0
      %617 = vmatprep.subr.bf16.mxu0 0
      %618 = vmatpush1.bf16.msra.mxu0 0
      %619 = vmatprep.subr.bf16.mxu0 0
      %620 = vmatpush1.bf16.msra.mxu0 0
      %621 = vmatprep.subr.bf16.mxu0 0
      %622 = vmatpush1.bf16.msra.mxu0 0
      %623 = vmatprep.subr.bf16.mxu0 0
      %624 = vmatpush1.bf16.msra.mxu0 0
      %625 = vmatprep.subr.bf16.mxu0 0
      %626 = vmatpush1.bf16.msra.mxu0 0
      %627 = vmatprep.subr.bf16.mxu0 0
      %628 = vmatpush1.bf16.msra.mxu0 0
      %629 = vmatprep.subr.bf16.mxu0 0
      %630 = vmatpush1.bf16.msra.mxu0 0
      %631 = vmatprep.subr.bf16.mxu0 0
      %632 = vmatpush1.bf16.msra.mxu0 0
      %633 = vmatprep.subr.bf16.mxu0 0
      %634 = vmatpush1.bf16.msra.mxu0 0
      %635 = vmatprep.subr.bf16.mxu0 0
      %636 = vmatpush1.bf16.msra.mxu0 0
      %637 = vmatprep.mubr.bf16.mxu0 0
      %638 = vmatmul.mubr.bf16.gmra.mrb[0].mxu0 %v454
      %v639 = vpop.f32.mrb[0].mxu0
      %v640 = vadd.f32 %v571, %v639
      %v641 = vpop.f32.mrb[0].mxu0
      %v642 = vpop.f32.mrb[0].mxu0
      %v643 = vadd.f32 %v574, %v642
      %v644 = vpop.f32.mrb[0].mxu0
      %645 = vmatprep.mubr.bf16.mxu0 0
      %646 = vmatmul.mubr.bf16.gmra.mrb[0].mxu0 %v457
      %v647 = vpop.f32.mrb[0].mxu0
      %v648 = vadd.f32 %v579, %v647
      %v649 = vpop.f32.mrb[0].mxu0
      %v650 = vpop.f32.mrb[0].mxu0
      %v651 = vadd.f32 %v582, %v650
      %v652 = vpop.f32.mrb[0].mxu0
      %653 = vmatprep.mubr.bf16.mxu0 0
      %654 = vmatmul.mubr.bf16.gmra.mrb[0].mxu0 %v460
      %v655 = vpop.f32.mrb[0].mxu0
      %v656 = vadd.f32 %v587, %v655
      %v657 = vpop.f32.mrb[0].mxu0
      %v658 = vpop.f32.mrb[0].mxu0
      %v659 = vadd.f32 %v590, %v658
      %v660 = vpop.f32.mrb[0].mxu0
      %661 = vdwg.mxu0
      %s662 = scalar_lea.vmem %s2, 80
      %v663 = vld [vmem:[%s662] sm:$0xf]
      %v664 = vld [vmem:[%s662 + $0x4] sm:$0xf]
      %v665 = vld [vmem:[%s662 + $0x8] sm:$0xf]
      %v666 = vld [vmem:[%s662 + $0xc] sm:$0xf]
      %v671 = vunpack.c.l.b16 %v663
      %v672 = vunpack.c.l.b16 %v664
      %v673 = vunpack.c.l.b16 %v665
      %v674 = vunpack.c.l.b16 %v666
      %v675 = vpack.c.b16 %v672, %v671
      %v676 = vpack.c.b16 %v674, %v673
      %679 = vmatprep.subr.bf16.mxu0 0
      %680 = vmatpush1.bf16.msra.mxu0 %v675
      %681 = vmatprep.subr.bf16.mxu0 0
      %682 = vmatpush1.bf16.msra.mxu0 %v676
      %683 = vmatprep.subr.bf16.mxu0 0
      %684 = vmatpush1.bf16.msra.mxu0 0
      %685 = vmatprep.subr.bf16.mxu0 0
      %686 = vmatpush1.bf16.msra.mxu0 0
      %687 = vmatprep.subr.bf16.mxu0 0
      %688 = vmatpush1.bf16.msra.mxu0 0
      %689 = vmatprep.subr.bf16.mxu0 0
      %690 = vmatpush1.bf16.msra.mxu0 0
      %691 = vmatprep.subr.bf16.mxu0 0
      %692 = vmatpush1.bf16.msra.mxu0 0
      %693 = vmatprep.subr.bf16.mxu0 0
      %694 = vmatpush1.bf16.msra.mxu0 0
      %695 = vmatprep.subr.bf16.mxu0 0
      %696 = vmatpush1.bf16.msra.mxu0 0
      %697 = vmatprep.subr.bf16.mxu0 0
      %698 = vmatpush1.bf16.msra.mxu0 0
      %699 = vmatprep.subr.bf16.mxu0 0
      %700 = vmatpush1.bf16.msra.mxu0 0
      %701 = vmatprep.subr.bf16.mxu0 0
      %702 = vmatpush1.bf16.msra.mxu0 0
      %703 = vmatprep.subr.bf16.mxu0 0
      %704 = vmatpush1.bf16.msra.mxu0 0
      %705 = vmatprep.subr.bf16.mxu0 0
      %706 = vmatpush1.bf16.msra.mxu0 0
      %707 = vmatprep.subr.bf16.mxu0 0
      %708 = vmatpush1.bf16.msra.mxu0 0
      %709 = vmatprep.subr.bf16.mxu0 0
      %710 = vmatpush1.bf16.msra.mxu0 0
      %711 = vmatprep.mubr.bf16.mxu0 0
      %712 = vmatmul.mubr.bf16.gmra.mrb[0].mxu0 %v376
      %v713 = vpop.f32.mrb[0].mxu0
      %v714 = vadd.f32 0.0, %v713
      %v715 = vpop.f32.mrb[0].mxu0
      %v716 = vpop.f32.mrb[0].mxu0
      %v717 = vadd.f32 0.0, %v716
      %v718 = vpop.f32.mrb[0].mxu0
      %719 = vmatprep.mubr.bf16.mxu0 0
      %720 = vmatmul.mubr.bf16.gmra.mrb[0].mxu0 %v379
      %v721 = vpop.f32.mrb[0].mxu0
      %v722 = vadd.f32 0.0, %v721
      %v723 = vpop.f32.mrb[0].mxu0
      %v724 = vpop.f32.mrb[0].mxu0
      %v725 = vadd.f32 0.0, %v724
      %v726 = vpop.f32.mrb[0].mxu0
      %727 = vmatprep.mubr.bf16.mxu0 0
      %728 = vmatmul.mubr.bf16.gmra.mrb[0].mxu0 %v382
      %v729 = vpop.f32.mrb[0].mxu0
      %v730 = vadd.f32 0.0, %v729
      %v731 = vpop.f32.mrb[0].mxu0
      %v732 = vpop.f32.mrb[0].mxu0
      %v733 = vadd.f32 0.0, %v732
      %v734 = vpop.f32.mrb[0].mxu0
      %735 = vdwg.mxu0
      %v740 = vunpack.c.l.b16 %v350
      %v741 = vunpack.c.l.b16 %v351
      %v742 = vunpack.c.l.b16 %v352
      %v743 = vunpack.c.l.b16 %v353
      %v744 = vpack.c.b16 %v741, %v740
      %v745 = vpack.c.b16 %v743, %v742
      %748 = vmatprep.subr.bf16.mxu0 0
      %749 = vmatpush1.bf16.msra.mxu0 %v744
      %750 = vmatprep.subr.bf16.mxu0 0
      %751 = vmatpush1.bf16.msra.mxu0 %v745
      %752 = vmatprep.subr.bf16.mxu0 0
      %753 = vmatpush1.bf16.msra.mxu0 0
      %754 = vmatprep.subr.bf16.mxu0 0
      %755 = vmatpush1.bf16.msra.mxu0 0
      %756 = vmatprep.subr.bf16.mxu0 0
      %757 = vmatpush1.bf16.msra.mxu0 0
      %758 = vmatprep.subr.bf16.mxu0 0
      %759 = vmatpush1.bf16.msra.mxu0 0
      %760 = vmatprep.subr.bf16.mxu0 0
      %761 = vmatpush1.bf16.msra.mxu0 0
      %762 = vmatprep.subr.bf16.mxu0 0
      %763 = vmatpush1.bf16.msra.mxu0 0
      %764 = vmatprep.subr.bf16.mxu0 0
      %765 = vmatpush1.bf16.msra.mxu0 0
      %766 = vmatprep.subr.bf16.mxu0 0
      %767 = vmatpush1.bf16.msra.mxu0 0
      %768 = vmatprep.subr.bf16.mxu0 0
      %769 = vmatpush1.bf16.msra.mxu0 0
      %770 = vmatprep.subr.bf16.mxu0 0
      %771 = vmatpush1.bf16.msra.mxu0 0
      %772 = vmatprep.subr.bf16.mxu0 0
      %773 = vmatpush1.bf16.msra.mxu0 0
      %774 = vmatprep.subr.bf16.mxu0 0
      %775 = vmatpush1.bf16.msra.mxu0 0
      %776 = vmatprep.subr.bf16.mxu0 0
      %777 = vmatpush1.bf16.msra.mxu0 0
      %778 = vmatprep.subr.bf16.mxu0 0
      %779 = vmatpush1.bf16.msra.mxu0 0
      %780 = vmatprep.mubr.bf16.mxu0 0
      %781 = vmatmul.mubr.bf16.gmra.mrb[0].mxu0 %v454
      %v782 = vpop.f32.mrb[0].mxu0
      %v783 = vadd.f32 %v714, %v782
      %v784 = vpop.f32.mrb[0].mxu0
      %v785 = vpop.f32.mrb[0].mxu0
      %v786 = vadd.f32 %v717, %v785
      %v787 = vpop.f32.mrb[0].mxu0
      %788 = vmatprep.mubr.bf16.mxu0 0
      %789 = vmatmul.mubr.bf16.gmra.mrb[0].mxu0 %v457
      %v790 = vpop.f32.mrb[0].mxu0
      %v791 = vadd.f32 %v722, %v790
      %v792 = vpop.f32.mrb[0].mxu0
      %v793 = vpop.f32.mrb[0].mxu0
      %v794 = vadd.f32 %v725, %v793
      %v795 = vpop.f32.mrb[0].mxu0
      %796 = vmatprep.mubr.bf16.mxu0 0
      %797 = vmatmul.mubr.bf16.gmra.mrb[0].mxu0 %v460
      %v798 = vpop.f32.mrb[0].mxu0
      %v799 = vadd.f32 %v730, %v798
      %v800 = vpop.f32.mrb[0].mxu0
      %v801 = vpop.f32.mrb[0].mxu0
      %v802 = vadd.f32 %v733, %v801
      %v803 = vpop.f32.mrb[0].mxu0
      %804 = vdwg.mxu0
      %v805 = vpack.c.bf16 %v334, %v333
      %s806 = scalar_lea.vmem %s2, 96
      %v807 = vld [vmem:[%s806] sm:$0xf]
      %v808 = vld [vmem:[%s806 + $0x4] sm:$0xf]
      %v809 = vld [vmem:[%s806 + $0x8] sm:$0xf]
      %v810 = vld [vmem:[%s806 + $0xc] sm:$0xf]
      %v815 = vunpack.c.l.b16 %v807
      %v816 = vunpack.c.l.b16 %v808
      %v817 = vunpack.c.l.b16 %v809
      %v818 = vunpack.c.l.b16 %v810
      %v819 = vpack.c.b16 %v816, %v815
      %v820 = vpack.c.b16 %v818, %v817
      %v824 = vsel %vm374, %v805, 0
      %826 = vmatprep.subr.bf16.mxu0 0
      %827 = vmatpush1.bf16.msra.mxu0 %v819
      %828 = vmatprep.subr.bf16.mxu0 0
      %829 = vmatpush1.bf16.msra.mxu0 %v820
      %830 = vmatprep.subr.bf16.mxu0 0
      %831 = vmatpush1.bf16.msra.mxu0 0
      %832 = vmatprep.subr.bf16.mxu0 0
      %833 = vmatpush1.bf16.msra.mxu0 0
      %834 = vmatprep.subr.bf16.mxu0 0
      %835 = vmatpush1.bf16.msra.mxu0 0
      %836 = vmatprep.subr.bf16.mxu0 0
      %837 = vmatpush1.bf16.msra.mxu0 0
      %838 = vmatprep.subr.bf16.mxu0 0
      %839 = vmatpush1.bf16.msra.mxu0 0
      %840 = vmatprep.subr.bf16.mxu0 0
      %841 = vmatpush1.bf16.msra.mxu0 0
      %842 = vmatprep.subr.bf16.mxu0 0
      %843 = vmatpush1.bf16.msra.mxu0 0
      %844 = vmatprep.subr.bf16.mxu0 0
      %845 = vmatpush1.bf16.msra.mxu0 0
      %846 = vmatprep.subr.bf16.mxu0 0
      %847 = vmatpush1.bf16.msra.mxu0 0
      %848 = vmatprep.subr.bf16.mxu0 0
      %849 = vmatpush1.bf16.msra.mxu0 0
      %850 = vmatprep.subr.bf16.mxu0 0
      %851 = vmatpush1.bf16.msra.mxu0 0
      %852 = vmatprep.subr.bf16.mxu0 0
      %853 = vmatpush1.bf16.msra.mxu0 0
      %854 = vmatprep.subr.bf16.mxu0 0
      %855 = vmatpush1.bf16.msra.mxu0 0
      %856 = vmatprep.subr.bf16.mxu0 0
      %857 = vmatpush1.bf16.msra.mxu0 0
      %858 = vmatprep.mubr.bf16.mxu0 0
      %859 = vmatmul.mubr.bf16.gmra.mrb[0].mxu0 %v457
      %v860 = vpop.f32.mrb[0].mxu0
      %v861 = vadd.f32 0.0, %v860
      %v862 = vpop.f32.mrb[0].mxu0
      %v863 = vpop.f32.mrb[0].mxu0
      %v864 = vadd.f32 0.0, %v863
      %v865 = vpop.f32.mrb[0].mxu0
      %866 = vmatprep.mubr.bf16.mxu0 0
      %867 = vmatmul.mubr.bf16.gmra.mrb[0].mxu0 %v460
      %v868 = vpop.f32.mrb[0].mxu0
      %v869 = vadd.f32 0.0, %v868
      %v870 = vpop.f32.mrb[0].mxu0
      %v871 = vpop.f32.mrb[0].mxu0
      %v872 = vadd.f32 0.0, %v871
      %v873 = vpop.f32.mrb[0].mxu0
      %874 = vmatprep.mubr.bf16.mxu0 0
      %875 = vmatmul.mubr.bf16.gmra.mrb[0].mxu0 %v824
      %v876 = vpop.f32.mrb[0].mxu0
      %v877 = vadd.f32 0.0, %v876
      %v878 = vpop.f32.mrb[0].mxu0
      %v879 = vpop.f32.mrb[0].mxu0
      %v880 = vadd.f32 0.0, %v879
      %v881 = vpop.f32.mrb[0].mxu0
      %882 = vdwg.mxu0
      %v883 = vadd.f32 %v497, %v861
      %v884 = vadd.f32 %v500, %v864
      %v885 = vadd.f32 %v505, %v869
      %v886 = vadd.f32 %v508, %v872
      %v887 = vadd.f32 %v513, %v877
      %v888 = vadd.f32 %v516, %v880
      %s889 = scalar_lea.vmem %s2, 112
      %v890 = vld [vmem:[%s889] sm:$0xf]
      %v891 = vld [vmem:[%s889 + $0x4] sm:$0xf]
      %v892 = vld [vmem:[%s889 + $0x8] sm:$0xf]
      %v893 = vld [vmem:[%s889 + $0xc] sm:$0xf]
      %v898 = vunpack.c.l.b16 %v890
      %v899 = vunpack.c.l.b16 %v891
      %v900 = vunpack.c.l.b16 %v892
      %v901 = vunpack.c.l.b16 %v893
      %v902 = vpack.c.b16 %v899, %v898
      %v903 = vpack.c.b16 %v901, %v900
      %906 = vmatprep.subr.bf16.mxu0 0
      %907 = vmatpush1.bf16.msra.mxu0 %v902
      %908 = vmatprep.subr.bf16.mxu0 0
      %909 = vmatpush1.bf16.msra.mxu0 %v903
      %910 = vmatprep.subr.bf16.mxu0 0
      %911 = vmatpush1.bf16.msra.mxu0 0
      %912 = vmatprep.subr.bf16.mxu0 0
      %913 = vmatpush1.bf16.msra.mxu0 0
      %914 = vmatprep.subr.bf16.mxu0 0
      %915 = vmatpush1.bf16.msra.mxu0 0
      %916 = vmatprep.subr.bf16.mxu0 0
      %917 = vmatpush1.bf16.msra.mxu0 0
      %918 = vmatprep.subr.bf16.mxu0 0
      %919 = vmatpush1.bf16.msra.mxu0 0
      %920 = vmatprep.subr.bf16.mxu0 0
      %921 = vmatpush1.bf16.msra.mxu0 0
      %922 = vmatprep.subr.bf16.mxu0 0
      %923 = vmatpush1.bf16.msra.mxu0 0
      %924 = vmatprep.subr.bf16.mxu0 0
      %925 = vmatpush1.bf16.msra.mxu0 0
      %926 = vmatprep.subr.bf16.mxu0 0
      %927 = vmatpush1.bf16.msra.mxu0 0
      %928 = vmatprep.subr.bf16.mxu0 0
      %929 = vmatpush1.bf16.msra.mxu0 0
      %930 = vmatprep.subr.bf16.mxu0 0
      %931 = vmatpush1.bf16.msra.mxu0 0
      %932 = vmatprep.subr.bf16.mxu0 0
      %933 = vmatpush1.bf16.msra.mxu0 0
      %934 = vmatprep.subr.bf16.mxu0 0
      %935 = vmatpush1.bf16.msra.mxu0 0
      %936 = vmatprep.subr.bf16.mxu0 0
      %937 = vmatpush1.bf16.msra.mxu0 0
      %938 = vmatprep.mubr.bf16.mxu0 0
      %939 = vmatmul.mubr.bf16.gmra.mrb[0].mxu0 %v457
      %v940 = vpop.f32.mrb[0].mxu0
      %v941 = vadd.f32 0.0, %v940
      %v942 = vpop.f32.mrb[0].mxu0
      %v943 = vpop.f32.mrb[0].mxu0
      %v944 = vadd.f32 0.0, %v943
      %v945 = vpop.f32.mrb[0].mxu0
      %946 = vmatprep.mubr.bf16.mxu0 0
      %947 = vmatmul.mubr.bf16.gmra.mrb[0].mxu0 %v460
      %v948 = vpop.f32.mrb[0].mxu0
      %v949 = vadd.f32 0.0, %v948
      %v950 = vpop.f32.mrb[0].mxu0
      %v951 = vpop.f32.mrb[0].mxu0
      %v952 = vadd.f32 0.0, %v951
      %v953 = vpop.f32.mrb[0].mxu0
      %954 = vmatprep.mubr.bf16.mxu0 0
      %955 = vmatmul.mubr.bf16.gmra.mrb[0].mxu0 %v824
      %v956 = vpop.f32.mrb[0].mxu0
      %v957 = vadd.f32 0.0, %v956
      %v958 = vpop.f32.mrb[0].mxu0
      %v959 = vpop.f32.mrb[0].mxu0
      %v960 = vadd.f32 0.0, %v959
      %v961 = vpop.f32.mrb[0].mxu0
      %962 = vdwg.mxu0
      %v963 = vadd.f32 %v640, %v941
      %v964 = vadd.f32 %v643, %v944
      %v965 = vadd.f32 %v648, %v949
      %v966 = vadd.f32 %v651, %v952
      %v967 = vadd.f32 %v656, %v957
      %v968 = vadd.f32 %v659, %v960
      %s969 = scalar_lea.vmem %s2, 128
      %v970 = vld [vmem:[%s969] sm:$0xf]
      %v971 = vld [vmem:[%s969 + $0x4] sm:$0xf]
      %v972 = vld [vmem:[%s969 + $0x8] sm:$0xf]
      %v973 = vld [vmem:[%s969 + $0xc] sm:$0xf]
      %v978 = vunpack.c.l.b16 %v970
      %v979 = vunpack.c.l.b16 %v971
      %v980 = vunpack.c.l.b16 %v972
      %v981 = vunpack.c.l.b16 %v973
      %v982 = vpack.c.b16 %v979, %v978
      %v983 = vpack.c.b16 %v981, %v980
      %986 = vmatprep.subr.bf16.mxu0 0
      %987 = vmatpush1.bf16.msra.mxu0 %v982
      %988 = vmatprep.subr.bf16.mxu0 0
      %989 = vmatpush1.bf16.msra.mxu0 %v983
      %990 = vmatprep.subr.bf16.mxu0 0
      %991 = vmatpush1.bf16.msra.mxu0 0
      %992 = vmatprep.subr.bf16.mxu0 0
      %993 = vmatpush1.bf16.msra.mxu0 0
      %994 = vmatprep.subr.bf16.mxu0 0
      %995 = vmatpush1.bf16.msra.mxu0 0
      %996 = vmatprep.subr.bf16.mxu0 0
      %997 = vmatpush1.bf16.msra.mxu0 0
      %998 = vmatprep.subr.bf16.mxu0 0
      %999 = vmatpush1.bf16.msra.mxu0 0
      %1000 = vmatprep.subr.bf16.mxu0 0
      %1001 = vmatpush1.bf16.msra.mxu0 0
      %1002 = vmatprep.subr.bf16.mxu0 0
      %1003 = vmatpush1.bf16.msra.mxu0 0
      %1004 = vmatprep.subr.bf16.mxu0 0
      %1005 = vmatpush1.bf16.msra.mxu0 0
      %1006 = vmatprep.subr.bf16.mxu0 0
      %1007 = vmatpush1.bf16.msra.mxu0 0
      %1008 = vmatprep.subr.bf16.mxu0 0
      %1009 = vmatpush1.bf16.msra.mxu0 0
      %1010 = vmatprep.subr.bf16.mxu0 0
      %1011 = vmatpush1.bf16.msra.mxu0 0
      %1012 = vmatprep.subr.bf16.mxu0 0
      %1013 = vmatpush1.bf16.msra.mxu0 0
      %1014 = vmatprep.subr.bf16.mxu0 0
      %1015 = vmatpush1.bf16.msra.mxu0 0
      %1016 = vmatprep.subr.bf16.mxu0 0
      %1017 = vmatpush1.bf16.msra.mxu0 0
      %1018 = vmatprep.mubr.bf16.mxu0 0
      %1019 = vmatmul.mubr.bf16.gmra.mrb[0].mxu0 %v457
      %v1020 = vpop.f32.mrb[0].mxu0
      %v1021 = vadd.f32 0.0, %v1020
      %v1022 = vpop.f32.mrb[0].mxu0
      %v1023 = vpop.f32.mrb[0].mxu0
      %v1024 = vadd.f32 0.0, %v1023
      %v1025 = vpop.f32.mrb[0].mxu0
      %1026 = vmatprep.mubr.bf16.mxu0 0
      %1027 = vmatmul.mubr.bf16.gmra.mrb[0].mxu0 %v460
      %v1028 = vpop.f32.mrb[0].mxu0
      %v1029 = vadd.f32 0.0, %v1028
      %v1030 = vpop.f32.mrb[0].mxu0
      %v1031 = vpop.f32.mrb[0].mxu0
      %v1032 = vadd.f32 0.0, %v1031
      %v1033 = vpop.f32.mrb[0].mxu0
      %1034 = vmatprep.mubr.bf16.mxu0 0
      %1035 = vmatmul.mubr.bf16.gmra.mrb[0].mxu0 %v824
      %v1036 = vpop.f32.mrb[0].mxu0
      %v1037 = vadd.f32 0.0, %v1036
      %v1038 = vpop.f32.mrb[0].mxu0
      %v1039 = vpop.f32.mrb[0].mxu0
      %v1040 = vadd.f32 0.0, %v1039
      %v1041 = vpop.f32.mrb[0].mxu0
      %1042 = vdwg.mxu0
      %v1043 = vadd.f32 %v783, %v1021
      %v1044 = vadd.f32 %v786, %v1024
      %v1045 = vadd.f32 %v791, %v1029
      %v1046 = vadd.f32 %v794, %v1032
      %v1047 = vadd.f32 %v799, %v1037
      %v1048 = vadd.f32 %v802, %v1040
      %v1055 = vrot.slane %v963, 1
      %v1056 = vrot.slane %v964, 1
      %v1057 = vrot.slane %v965, 1
      %v1058 = vrot.slane %v966, 1
      %v1059 = vrot.slane %v967, 1
      %v1060 = vrot.slane %v968, 1
      %v1067 = vadd.f32 %v883, %v1055
      %v1068 = vadd.f32 %v884, %v1056
      %v1069 = vadd.f32 %v885, %v1057
      %v1070 = vadd.f32 %v886, %v1058
      %v1071 = vadd.f32 %v887, %v1059
      %v1072 = vadd.f32 %v888, %v1060
      %v1079 = vrot.slane %v1043, 2
      %v1080 = vrot.slane %v1044, 2
      %v1081 = vrot.slane %v1045, 2
      %v1082 = vrot.slane %v1046, 2
      %v1083 = vrot.slane %v1047, 2
      %v1084 = vrot.slane %v1048, 2
      %v1091 = vadd.f32 %v1067, %v1079
      %v1092 = vadd.f32 %v1068, %v1080
      %v1093 = vadd.f32 %v1069, %v1081
      %v1094 = vadd.f32 %v1070, %v1082
      %v1095 = vadd.f32 %v1071, %v1083
      %v1096 = vadd.f32 %v1072, %v1084
      %v1098 = vlaneseq
      %v1099 = vshrl.u32 %v1098, 7
      %v1100 = vsub.s32 0, %v1099
      %v1101 = vrot.slane %v335, %v1100
      %v1103 = vmul.f32 %v1091, %v1101
      %v1104 = vmul.f32 %v1092, %v1101
      %v1105 = vmul.f32 %v1093, %v1101
      %v1106 = vmul.f32 %v1094, %v1101
      %v1107 = vmul.f32 %v1095, %v1101
      %v1108 = vmul.f32 %v1096, %v1101
      %v1110 = vlaneseq
      %v1111 = vshrl.u32 %v1110, 7
      %v1112 = vsub.s32 0, %v1111
      %v1113 = vrot.slane %v336, %v1112
      %v1115 = vadd.f32 %v1103, %v1113
      %v1116 = vadd.f32 %v1104, %v1113
      %v1117 = vadd.f32 %v1105, %v1113
      %v1118 = vadd.f32 %v1106, %v1113
      %v1119 = vadd.f32 %v1107, %v1113
      %v1120 = vadd.f32 %v1108, %v1113
      %v1121 = vld [vmem:[%s320] sm:$0xff]
      %v1122 = vld [vmem:[%s320 + $0x8] sm:$0xff]
      %v1123 = vld [vmem:[%s320 + $0x10] sm:$0xff]
      %v1124 = vld [vmem:[%s320 + $0x18] sm:$0xff]
      %v1125 = vld [vmem:[%s320 + $0x20] sm:$0xff]
      %v1126 = vld [vmem:[%s320 + $0x28] sm:$0xff]
      %v1127 = vld [vmem:[%s320 + $0x30] sm:$0xff]
      %v1128 = vld [vmem:[%s320 + $0x38] sm:$0xff]
      %v1129 = vld [vmem:[%s320 + $0x40] sm:$0xff]
      %v1130 = vld [vmem:[%s320 + $0x48] sm:$0xff]
      %v1131 = vld [vmem:[%s320 + $0x50] sm:$0xff]
      %v1132 = vld [vmem:[%s320 + $0x58] sm:$0xff]
      %v1133 = vld [vmem:[%s320 + $0x60] sm:$0xff]
      %v1134 = vld [vmem:[%s320 + $0x68] sm:$0xff]
      %v1135 = vld [vmem:[%s320 + $0x70] sm:$0xff]
      %v1136 = vld [vmem:[%s320 + $0x78] sm:$0xff]
      %v1137 = vld [vmem:[%s320 + $0x80] sm:$0xff]
      %v1138 = vld [vmem:[%s320 + $0x88] sm:$0xff]
      %v1139 = vld [vmem:[%s320 + $0x90] sm:$0xff]
      %v1140 = vld [vmem:[%s320 + $0x98] sm:$0xff]
      %v1141 = vld [vmem:[%s320 + $0xa0] sm:$0xff]
      %v1142 = vld [vmem:[%s320 + $0xa8] sm:$0xff]
      %v1143 = vld [vmem:[%s320 + $0xb0] sm:$0xff]
      %v1144 = vld [vmem:[%s320 + $0xb8] sm:$0xff]
      %v1145 = vld [vmem:[%s320 + $0xc0] sm:$0xff]
      %v1146 = vld [vmem:[%s320 + $0xc8] sm:$0xff]
      %v1147 = vld [vmem:[%s320 + $0xd0] sm:$0xff]
      %v1148 = vld [vmem:[%s320 + $0xd8] sm:$0xff]
      %v1149 = vld [vmem:[%s320 + $0xe0] sm:$0xff]
      %v1150 = vld [vmem:[%s320 + $0xe8] sm:$0xff]
      %v1151 = vld [vmem:[%s320 + $0xf0] sm:$0xff]
      %v1152 = vld [vmem:[%s320 + $0xf8] sm:$0xff]
      %v1153 = vld [vmem:[%s6] sm:$0x1]
      %v1154 = vld [vmem:[%s7] sm:$0x1]
      %v1155 = vpack.c.bf16 %v1122, %v1121
      %v1156 = vpack.c.bf16 %v1124, %v1123
      %v1157 = vpack.c.bf16 %v1126, %v1125
      %v1158 = vpack.c.bf16 %v1128, %v1127
      %v1159 = vpack.c.bf16 %v1130, %v1129
      %v1160 = vpack.c.bf16 %v1132, %v1131
      %v1161 = vpack.c.bf16 %v1134, %v1133
      %v1162 = vpack.c.bf16 %v1136, %v1135
      %v1163 = vpack.c.bf16 %v1138, %v1137
      %v1164 = vpack.c.bf16 %v1140, %v1139
      %v1165 = vpack.c.bf16 %v1142, %v1141
      %v1166 = vpack.c.bf16 %v1144, %v1143
      %v1167 = vpack.c.bf16 %v1146, %v1145
      %v1168 = vpack.c.bf16 %v1148, %v1147
      %v1169 = vld [vmem:[%s3] sm:$0xf]
      %v1170 = vld [vmem:[%s3 + $0x4] sm:$0xf]
      %v1171 = vld [vmem:[%s3 + $0x8] sm:$0xf]
      %v1172 = vld [vmem:[%s3 + $0xc] sm:$0xf]
      %s1173 = scalar_lea.vmem %s3, 16
      %v1174 = vld [vmem:[%s1173] sm:$0xf]
      %v1175 = vld [vmem:[%s1173 + $0x4] sm:$0xf]
      %v1176 = vld [vmem:[%s1173 + $0x8] sm:$0xf]
      %v1177 = vld [vmem:[%s1173 + $0xc] sm:$0xf]
      %s1178 = scalar_lea.vmem %s3, 32
      %v1179 = vld [vmem:[%s1178] sm:$0xf]
      %v1180 = vld [vmem:[%s1178 + $0x4] sm:$0xf]
      %v1181 = vld [vmem:[%s1178 + $0x8] sm:$0xf]
      %v1182 = vld [vmem:[%s1178 + $0xc] sm:$0xf]
      %v1183 = vpack.c.bf16 %v1150, %v1149
      %s1184 = scalar_lea.vmem %s3, 48
      %v1185 = vld [vmem:[%s1184] sm:$0xf]
      %v1186 = vld [vmem:[%s1184 + $0x4] sm:$0xf]
      %v1187 = vld [vmem:[%s1184 + $0x8] sm:$0xf]
      %v1188 = vld [vmem:[%s1184 + $0xc] sm:$0xf]
      %v1193 = vunpack.c.l.b16 %v1185
      %v1194 = vunpack.c.l.b16 %v1186
      %v1195 = vunpack.c.l.b16 %v1187
      %v1196 = vunpack.c.l.b16 %v1188
      %v1197 = vpack.c.b16 %v1194, %v1193
      %v1198 = vpack.c.b16 %v1196, %v1195
      %v1202 = vsel %vm374, %v1156, 0
      %v1205 = vsel %vm374, %v1157, 0
      %v1208 = vsel %vm374, %v1158, 0
      %v1211 = vsel %vm374, %v1159, 0
      %v1214 = vsel %vm374, %v1160, 0
      %v1217 = vsel %vm374, %v1161, 0
      %v1220 = vsel %vm374, %v1162, 0
      %v1223 = vsel %vm374, %v1163, 0
      %v1226 = vsel %vm374, %v1164, 0
      %v1229 = vsel %vm374, %v1165, 0
      %v1232 = vsel %vm374, %v1166, 0
      %v1235 = vsel %vm374, %v1167, 0
      %v1238 = vsel %vm374, %v1168, 0
      %v1241 = vsel %vm374, %v1183, 0
      %1243 = vmatprep.subr.bf16.mxu0 0
      %1244 = vmatpush1.bf16.msra.mxu0 %v1197
      %1245 = vmatprep.subr.bf16.mxu0 0
      %1246 = vmatpush1.bf16.msra.mxu0 %v1198
      %1247 = vmatprep.subr.bf16.mxu0 0
      %1248 = vmatpush1.bf16.msra.mxu0 0
      %1249 = vmatprep.subr.bf16.mxu0 0
      %1250 = vmatpush1.bf16.msra.mxu0 0
      %1251 = vmatprep.subr.bf16.mxu0 0
      %1252 = vmatpush1.bf16.msra.mxu0 0
      %1253 = vmatprep.subr.bf16.mxu0 0
      %1254 = vmatpush1.bf16.msra.mxu0 0
      %1255 = vmatprep.subr.bf16.mxu0 0
      %1256 = vmatpush1.bf16.msra.mxu0 0
      %1257 = vmatprep.subr.bf16.mxu0 0
      %1258 = vmatpush1.bf16.msra.mxu0 0
      %1259 = vmatprep.subr.bf16.mxu0 0
      %1260 = vmatpush1.bf16.msra.mxu0 0
      %1261 = vmatprep.subr.bf16.mxu0 0
      %1262 = vmatpush1.bf16.msra.mxu0 0
      %1263 = vmatprep.subr.bf16.mxu0 0
      %1264 = vmatpush1.bf16.msra.mxu0 0
      %1265 = vmatprep.subr.bf16.mxu0 0
      %1266 = vmatpush1.bf16.msra.mxu0 0
      %1267 = vmatprep.subr.bf16.mxu0 0
      %1268 = vmatpush1.bf16.msra.mxu0 0
      %1269 = vmatprep.subr.bf16.mxu0 0
      %1270 = vmatpush1.bf16.msra.mxu0 0
      %1271 = vmatprep.subr.bf16.mxu0 0
      %1272 = vmatpush1.bf16.msra.mxu0 0
      %1273 = vmatprep.subr.bf16.mxu0 0
      %1274 = vmatpush1.bf16.msra.mxu0 0
      %1275 = vmatprep.mubr.bf16.mxu0 0
      %1276 = vmatmul.mubr.bf16.gmra.mrb[0].mxu0 %v1202
      %v1277 = vpop.f32.mrb[0].mxu0
      %v1278 = vadd.f32 0.0, %v1277
      %v1279 = vpop.f32.mrb[0].mxu0
      %v1280 = vpop.f32.mrb[0].mxu0
      %v1281 = vadd.f32 0.0, %v1280
      %v1282 = vpop.f32.mrb[0].mxu0
      %1283 = vmatprep.mubr.bf16.mxu0 0
      %1284 = vmatmul.mubr.bf16.gmra.mrb[0].mxu0 %v1205
      %v1285 = vpop.f32.mrb[0].mxu0
      %v1286 = vadd.f32 0.0, %v1285
      %v1287 = vpop.f32.mrb[0].mxu0
      %v1288 = vpop.f32.mrb[0].mxu0
      %v1289 = vadd.f32 0.0, %v1288
      %v1290 = vpop.f32.mrb[0].mxu0
      %1291 = vmatprep.mubr.bf16.mxu0 0
      %1292 = vmatmul.mubr.bf16.gmra.mrb[0].mxu0 %v1208
      %v1293 = vpop.f32.mrb[0].mxu0
      %v1294 = vadd.f32 0.0, %v1293
      %v1295 = vpop.f32.mrb[0].mxu0
      %v1296 = vpop.f32.mrb[0].mxu0
      %v1297 = vadd.f32 0.0, %v1296
      %v1298 = vpop.f32.mrb[0].mxu0
      %1299 = vmatprep.mubr.bf16.mxu0 0
      %1300 = vmatmul.mubr.bf16.gmra.mrb[0].mxu0 %v1211
      %v1301 = vpop.f32.mrb[0].mxu0
      %v1302 = vadd.f32 0.0, %v1301
      %v1303 = vpop.f32.mrb[0].mxu0
      %v1304 = vpop.f32.mrb[0].mxu0
      %v1305 = vadd.f32 0.0, %v1304
      %v1306 = vpop.f32.mrb[0].mxu0
      %1307 = vmatprep.mubr.bf16.mxu0 0
      %1308 = vmatmul.mubr.bf16.gmra.mrb[0].mxu0 %v1214
      %v1309 = vpop.f32.mrb[0].mxu0
      %v1310 = vadd.f32 0.0, %v1309
      %v1311 = vpop.f32.mrb[0].mxu0
      %v1312 = vpop.f32.mrb[0].mxu0
      %v1313 = vadd.f32 0.0, %v1312
      %v1314 = vpop.f32.mrb[0].mxu0
      %1315 = vmatprep.mubr.bf16.mxu0 0
      %1316 = vmatmul.mubr.bf16.gmra.mrb[0].mxu0 %v1217
      %v1317 = vpop.f32.mrb[0].mxu0
      %v1318 = vadd.f32 0.0, %v1317
      %v1319 = vpop.f32.mrb[0].mxu0
      %v1320 = vpop.f32.mrb[0].mxu0
      %v1321 = vadd.f32 0.0, %v1320
      %v1322 = vpop.f32.mrb[0].mxu0
      %1323 = vmatprep.mubr.bf16.mxu0 0
      %1324 = vmatmul.mubr.bf16.gmra.mrb[0].mxu0 %v1220
      %v1325 = vpop.f32.mrb[0].mxu0
      %v1326 = vadd.f32 0.0, %v1325
      %v1327 = vpop.f32.mrb[0].mxu0
      %v1328 = vpop.f32.mrb[0].mxu0
      %v1329 = vadd.f32 0.0, %v1328
      %v1330 = vpop.f32.mrb[0].mxu0
      %1331 = vmatprep.mubr.bf16.mxu0 0
      %1332 = vmatmul.mubr.bf16.gmra.mrb[0].mxu0 %v1223
      %v1333 = vpop.f32.mrb[0].mxu0
      %v1334 = vadd.f32 0.0, %v1333
      %v1335 = vpop.f32.mrb[0].mxu0
      %v1336 = vpop.f32.mrb[0].mxu0
      %v1337 = vadd.f32 0.0, %v1336
      %v1338 = vpop.f32.mrb[0].mxu0
      %1339 = vmatprep.mubr.bf16.mxu0 0
      %1340 = vmatmul.mubr.bf16.gmra.mrb[0].mxu0 %v1226
      %v1341 = vpop.f32.mrb[0].mxu0
      %v1342 = vadd.f32 0.0, %v1341
      %v1343 = vpop.f32.mrb[0].mxu0
      %v1344 = vpop.f32.mrb[0].mxu0
      %v1345 = vadd.f32 0.0, %v1344
      %v1346 = vpop.f32.mrb[0].mxu0
      %1347 = vmatprep.mubr.bf16.mxu0 0
      %1348 = vmatmul.mubr.bf16.gmra.mrb[0].mxu0 %v1229
      %v1349 = vpop.f32.mrb[0].mxu0
      %v1350 = vadd.f32 0.0, %v1349
      %v1351 = vpop.f32.mrb[0].mxu0
      %v1352 = vpop.f32.mrb[0].mxu0
      %v1353 = vadd.f32 0.0, %v1352
      %v1354 = vpop.f32.mrb[0].mxu0
      %1355 = vmatprep.mubr.bf16.mxu0 0
      %1356 = vmatmul.mubr.bf16.gmra.mrb[0].mxu0 %v1232
      %v1357 = vpop.f32.mrb[0].mxu0
      %v1358 = vadd.f32 0.0, %v1357
      %v1359 = vpop.f32.mrb[0].mxu0
      %v1360 = vpop.f32.mrb[0].mxu0
      %v1361 = vadd.f32 0.0, %v1360
      %v1362 = vpop.f32.mrb[0].mxu0
      %1363 = vmatprep.mubr.bf16.mxu0 0
      %1364 = vmatmul.mubr.bf16.gmra.mrb[0].mxu0 %v1235
      %v1365 = vpop.f32.mrb[0].mxu0
      %v1366 = vadd.f32 0.0, %v1365
      %v1367 = vpop.f32.mrb[0].mxu0
      %v1368 = vpop.f32.mrb[0].mxu0
      %v1369 = vadd.f32 0.0, %v1368
      %v1370 = vpop.f32.mrb[0].mxu0
      %1371 = vmatprep.mubr.bf16.mxu0 0
      %1372 = vmatmul.mubr.bf16.gmra.mrb[0].mxu0 %v1238
      %v1373 = vpop.f32.mrb[0].mxu0
      %v1374 = vadd.f32 0.0, %v1373
      %v1375 = vpop.f32.mrb[0].mxu0
      %v1376 = vpop.f32.mrb[0].mxu0
      %v1377 = vadd.f32 0.0, %v1376
      %v1378 = vpop.f32.mrb[0].mxu0
      %1379 = vmatprep.mubr.bf16.mxu0 0
      %1380 = vmatmul.mubr.bf16.gmra.mrb[0].mxu0 %v1241
      %v1381 = vpop.f32.mrb[0].mxu0
      %v1382 = vadd.f32 0.0, %v1381
      %v1383 = vpop.f32.mrb[0].mxu0
      %v1384 = vpop.f32.mrb[0].mxu0
      %v1385 = vadd.f32 0.0, %v1384
      %v1386 = vpop.f32.mrb[0].mxu0
      %1387 = vdwg.mxu0
      %v1392 = vunpack.c.l.b16 %v1169
      %v1393 = vunpack.c.l.b16 %v1170
      %v1394 = vunpack.c.l.b16 %v1171
      %v1395 = vunpack.c.l.b16 %v1172
      %v1396 = vpack.c.b16 %v1393, %v1392
      %v1397 = vpack.c.b16 %v1395, %v1394
      %v1401 = vsel %vm374, %v1155, 0
      %1403 = vmatprep.subr.bf16.mxu0 0
      %1404 = vmatpush1.bf16.msra.mxu0 %v1396
      %1405 = vmatprep.subr.bf16.mxu0 0
      %1406 = vmatpush1.bf16.msra.mxu0 %v1397
      %1407 = vmatprep.subr.bf16.mxu0 0
      %1408 = vmatpush1.bf16.msra.mxu0 0
      %1409 = vmatprep.subr.bf16.mxu0 0
      %1410 = vmatpush1.bf16.msra.mxu0 0
      %1411 = vmatprep.subr.bf16.mxu0 0
      %1412 = vmatpush1.bf16.msra.mxu0 0
      %1413 = vmatprep.subr.bf16.mxu0 0
      %1414 = vmatpush1.bf16.msra.mxu0 0
      %1415 = vmatprep.subr.bf16.mxu0 0
      %1416 = vmatpush1.bf16.msra.mxu0 0
      %1417 = vmatprep.subr.bf16.mxu0 0
      %1418 = vmatpush1.bf16.msra.mxu0 0
      %1419 = vmatprep.subr.bf16.mxu0 0
      %1420 = vmatpush1.bf16.msra.mxu0 0
      %1421 = vmatprep.subr.bf16.mxu0 0
      %1422 = vmatpush1.bf16.msra.mxu0 0
      %1423 = vmatprep.subr.bf16.mxu0 0
      %1424 = vmatpush1.bf16.msra.mxu0 0
      %1425 = vmatprep.subr.bf16.mxu0 0
      %1426 = vmatpush1.bf16.msra.mxu0 0
      %1427 = vmatprep.subr.bf16.mxu0 0
      %1428 = vmatpush1.bf16.msra.mxu0 0
      %1429 = vmatprep.subr.bf16.mxu0 0
      %1430 = vmatpush1.bf16.msra.mxu0 0
      %1431 = vmatprep.subr.bf16.mxu0 0
      %1432 = vmatpush1.bf16.msra.mxu0 0
      %1433 = vmatprep.subr.bf16.mxu0 0
      %1434 = vmatpush1.bf16.msra.mxu0 0
      %1435 = vmatprep.mubr.bf16.mxu0 0
      %1436 = vmatmul.mubr.bf16.gmra.mrb[0].mxu0 %v1401
      %v1437 = vpop.f32.mrb[0].mxu0
      %v1438 = vadd.f32 %v1278, %v1437
      %v1439 = vpop.f32.mrb[0].mxu0
      %v1440 = vpop.f32.mrb[0].mxu0
      %v1441 = vadd.f32 %v1281, %v1440
      %v1442 = vpop.f32.mrb[0].mxu0
      %1443 = vmatprep.mubr.bf16.mxu0 0
      %1444 = vmatmul.mubr.bf16.gmra.mrb[0].mxu0 %v1202
      %v1445 = vpop.f32.mrb[0].mxu0
      %v1446 = vadd.f32 %v1286, %v1445
      %v1447 = vpop.f32.mrb[0].mxu0
      %v1448 = vpop.f32.mrb[0].mxu0
      %v1449 = vadd.f32 %v1289, %v1448
      %v1450 = vpop.f32.mrb[0].mxu0
      %1451 = vmatprep.mubr.bf16.mxu0 0
      %1452 = vmatmul.mubr.bf16.gmra.mrb[0].mxu0 %v1205
      %v1453 = vpop.f32.mrb[0].mxu0
      %v1454 = vadd.f32 %v1294, %v1453
      %v1455 = vpop.f32.mrb[0].mxu0
      %v1456 = vpop.f32.mrb[0].mxu0
      %v1457 = vadd.f32 %v1297, %v1456
      %v1458 = vpop.f32.mrb[0].mxu0
      %1459 = vmatprep.mubr.bf16.mxu0 0
      %1460 = vmatmul.mubr.bf16.gmra.mrb[0].mxu0 %v1208
      %v1461 = vpop.f32.mrb[0].mxu0
      %v1462 = vadd.f32 %v1302, %v1461
      %v1463 = vpop.f32.mrb[0].mxu0
      %v1464 = vpop.f32.mrb[0].mxu0
      %v1465 = vadd.f32 %v1305, %v1464
      %v1466 = vpop.f32.mrb[0].mxu0
      %1467 = vmatprep.mubr.bf16.mxu0 0
      %1468 = vmatmul.mubr.bf16.gmra.mrb[0].mxu0 %v1211
      %v1469 = vpop.f32.mrb[0].mxu0
      %v1470 = vadd.f32 %v1310, %v1469
      %v1471 = vpop.f32.mrb[0].mxu0
      %v1472 = vpop.f32.mrb[0].mxu0
      %v1473 = vadd.f32 %v1313, %v1472
      %v1474 = vpop.f32.mrb[0].mxu0
      %1475 = vmatprep.mubr.bf16.mxu0 0
      %1476 = vmatmul.mubr.bf16.gmra.mrb[0].mxu0 %v1214
      %v1477 = vpop.f32.mrb[0].mxu0
      %v1478 = vadd.f32 %v1318, %v1477
      %v1479 = vpop.f32.mrb[0].mxu0
      %v1480 = vpop.f32.mrb[0].mxu0
      %v1481 = vadd.f32 %v1321, %v1480
      %v1482 = vpop.f32.mrb[0].mxu0
      %1483 = vmatprep.mubr.bf16.mxu0 0
      %1484 = vmatmul.mubr.bf16.gmra.mrb[0].mxu0 %v1217
      %v1485 = vpop.f32.mrb[0].mxu0
      %v1486 = vadd.f32 %v1326, %v1485
      %v1487 = vpop.f32.mrb[0].mxu0
      %v1488 = vpop.f32.mrb[0].mxu0
      %v1489 = vadd.f32 %v1329, %v1488
      %v1490 = vpop.f32.mrb[0].mxu0
      %1491 = vmatprep.mubr.bf16.mxu0 0
      %1492 = vmatmul.mubr.bf16.gmra.mrb[0].mxu0 %v1220
      %v1493 = vpop.f32.mrb[0].mxu0
      %v1494 = vadd.f32 %v1334, %v1493
      %v1495 = vpop.f32.mrb[0].mxu0
      %v1496 = vpop.f32.mrb[0].mxu0
      %v1497 = vadd.f32 %v1337, %v1496
      %v1498 = vpop.f32.mrb[0].mxu0
      %1499 = vmatprep.mubr.bf16.mxu0 0
      %1500 = vmatmul.mubr.bf16.gmra.mrb[0].mxu0 %v1223
      %v1501 = vpop.f32.mrb[0].mxu0
      %v1502 = vadd.f32 %v1342, %v1501
      %v1503 = vpop.f32.mrb[0].mxu0
      %v1504 = vpop.f32.mrb[0].mxu0
      %v1505 = vadd.f32 %v1345, %v1504
      %v1506 = vpop.f32.mrb[0].mxu0
      %1507 = vmatprep.mubr.bf16.mxu0 0
      %1508 = vmatmul.mubr.bf16.gmra.mrb[0].mxu0 %v1226
      %v1509 = vpop.f32.mrb[0].mxu0
      %v1510 = vadd.f32 %v1350, %v1509
      %v1511 = vpop.f32.mrb[0].mxu0
      %v1512 = vpop.f32.mrb[0].mxu0
      %v1513 = vadd.f32 %v1353, %v1512
      %v1514 = vpop.f32.mrb[0].mxu0
      %1515 = vmatprep.mubr.bf16.mxu0 0
      %1516 = vmatmul.mubr.bf16.gmra.mrb[0].mxu0 %v1229
      %v1517 = vpop.f32.mrb[0].mxu0
      %v1518 = vadd.f32 %v1358, %v1517
      %v1519 = vpop.f32.mrb[0].mxu0
      %v1520 = vpop.f32.mrb[0].mxu0
      %v1521 = vadd.f32 %v1361, %v1520
      %v1522 = vpop.f32.mrb[0].mxu0
      %1523 = vmatprep.mubr.bf16.mxu0 0
      %1524 = vmatmul.mubr.bf16.gmra.mrb[0].mxu0 %v1232
      %v1525 = vpop.f32.mrb[0].mxu0
      %v1526 = vadd.f32 %v1366, %v1525
      %v1527 = vpop.f32.mrb[0].mxu0
      %v1528 = vpop.f32.mrb[0].mxu0
      %v1529 = vadd.f32 %v1369, %v1528
      %v1530 = vpop.f32.mrb[0].mxu0
      %1531 = vmatprep.mubr.bf16.mxu0 0
      %1532 = vmatmul.mubr.bf16.gmra.mrb[0].mxu0 %v1235
      %v1533 = vpop.f32.mrb[0].mxu0
      %v1534 = vadd.f32 %v1374, %v1533
      %v1535 = vpop.f32.mrb[0].mxu0
      %v1536 = vpop.f32.mrb[0].mxu0
      %v1537 = vadd.f32 %v1377, %v1536
      %v1538 = vpop.f32.mrb[0].mxu0
      %1539 = vmatprep.mubr.bf16.mxu0 0
      %1540 = vmatmul.mubr.bf16.gmra.mrb[0].mxu0 %v1238
      %v1541 = vpop.f32.mrb[0].mxu0
      %v1542 = vadd.f32 %v1382, %v1541
      %v1543 = vpop.f32.mrb[0].mxu0
      %v1544 = vpop.f32.mrb[0].mxu0
      %v1545 = vadd.f32 %v1385, %v1544
      %v1546 = vpop.f32.mrb[0].mxu0
      %1547 = vdwg.mxu0
      %s1548 = scalar_lea.vmem %s3, 64
      %v1549 = vld [vmem:[%s1548] sm:$0xf]
      %v1550 = vld [vmem:[%s1548 + $0x4] sm:$0xf]
      %v1551 = vld [vmem:[%s1548 + $0x8] sm:$0xf]
      %v1552 = vld [vmem:[%s1548 + $0xc] sm:$0xf]
      %v1557 = vunpack.c.l.b16 %v1549
      %v1558 = vunpack.c.l.b16 %v1550
      %v1559 = vunpack.c.l.b16 %v1551
      %v1560 = vunpack.c.l.b16 %v1552
      %v1561 = vpack.c.b16 %v1558, %v1557
      %v1562 = vpack.c.b16 %v1560, %v1559
      %1565 = vmatprep.subr.bf16.mxu0 0
      %1566 = vmatpush1.bf16.msra.mxu0 %v1561
      %1567 = vmatprep.subr.bf16.mxu0 0
      %1568 = vmatpush1.bf16.msra.mxu0 %v1562
      %1569 = vmatprep.subr.bf16.mxu0 0
      %1570 = vmatpush1.bf16.msra.mxu0 0
      %1571 = vmatprep.subr.bf16.mxu0 0
      %1572 = vmatpush1.bf16.msra.mxu0 0
      %1573 = vmatprep.subr.bf16.mxu0 0
      %1574 = vmatpush1.bf16.msra.mxu0 0
      %1575 = vmatprep.subr.bf16.mxu0 0
      %1576 = vmatpush1.bf16.msra.mxu0 0
      %1577 = vmatprep.subr.bf16.mxu0 0
      %1578 = vmatpush1.bf16.msra.mxu0 0
      %1579 = vmatprep.subr.bf16.mxu0 0
      %1580 = vmatpush1.bf16.msra.mxu0 0
      %1581 = vmatprep.subr.bf16.mxu0 0
      %1582 = vmatpush1.bf16.msra.mxu0 0
      %1583 = vmatprep.subr.bf16.mxu0 0
      %1584 = vmatpush1.bf16.msra.mxu0 0
      %1585 = vmatprep.subr.bf16.mxu0 0
      %1586 = vmatpush1.bf16.msra.mxu0 0
      %1587 = vmatprep.subr.bf16.mxu0 0
      %1588 = vmatpush1.bf16.msra.mxu0 0
      %1589 = vmatprep.subr.bf16.mxu0 0
      %1590 = vmatpush1.bf16.msra.mxu0 0
      %1591 = vmatprep.subr.bf16.mxu0 0
      %1592 = vmatpush1.bf16.msra.mxu0 0
      %1593 = vmatprep.subr.bf16.mxu0 0
      %1594 = vmatpush1.bf16.msra.mxu0 0
      %1595 = vmatprep.subr.bf16.mxu0 0
      %1596 = vmatpush1.bf16.msra.mxu0 0
      %1597 = vmatprep.mubr.bf16.mxu0 0
      %1598 = vmatmul.mubr.bf16.gmra.mrb[0].mxu0 %v1202
      %v1599 = vpop.f32.mrb[0].mxu0
      %v1600 = vadd.f32 0.0, %v1599
      %v1601 = vpop.f32.mrb[0].mxu0
      %v1602 = vpop.f32.mrb[0].mxu0
      %v1603 = vadd.f32 0.0, %v1602
      %v1604 = vpop.f32.mrb[0].mxu0
      %1605 = vmatprep.mubr.bf16.mxu0 0
      %1606 = vmatmul.mubr.bf16.gmra.mrb[0].mxu0 %v1205
      %v1607 = vpop.f32.mrb[0].mxu0
      %v1608 = vadd.f32 0.0, %v1607
      %v1609 = vpop.f32.mrb[0].mxu0
      %v1610 = vpop.f32.mrb[0].mxu0
      %v1611 = vadd.f32 0.0, %v1610
      %v1612 = vpop.f32.mrb[0].mxu0
      %1613 = vmatprep.mubr.bf16.mxu0 0
      %1614 = vmatmul.mubr.bf16.gmra.mrb[0].mxu0 %v1208
      %v1615 = vpop.f32.mrb[0].mxu0
      %v1616 = vadd.f32 0.0, %v1615
      %v1617 = vpop.f32.mrb[0].mxu0
      %v1618 = vpop.f32.mrb[0].mxu0
      %v1619 = vadd.f32 0.0, %v1618
      %v1620 = vpop.f32.mrb[0].mxu0
      %1621 = vmatprep.mubr.bf16.mxu0 0
      %1622 = vmatmul.mubr.bf16.gmra.mrb[0].mxu0 %v1211
      %v1623 = vpop.f32.mrb[0].mxu0
      %v1624 = vadd.f32 0.0, %v1623
      %v1625 = vpop.f32.mrb[0].mxu0
      %v1626 = vpop.f32.mrb[0].mxu0
      %v1627 = vadd.f32 0.0, %v1626
      %v1628 = vpop.f32.mrb[0].mxu0
      %1629 = vmatprep.mubr.bf16.mxu0 0
      %1630 = vmatmul.mubr.bf16.gmra.mrb[0].mxu0 %v1214
      %v1631 = vpop.f32.mrb[0].mxu0
      %v1632 = vadd.f32 0.0, %v1631
      %v1633 = vpop.f32.mrb[0].mxu0
      %v1634 = vpop.f32.mrb[0].mxu0
      %v1635 = vadd.f32 0.0, %v1634
      %v1636 = vpop.f32.mrb[0].mxu0
      %1637 = vmatprep.mubr.bf16.mxu0 0
      %1638 = vmatmul.mubr.bf16.gmra.mrb[0].mxu0 %v1217
      %v1639 = vpop.f32.mrb[0].mxu0
      %v1640 = vadd.f32 0.0, %v1639
      %v1641 = vpop.f32.mrb[0].mxu0
      %v1642 = vpop.f32.mrb[0].mxu0
      %v1643 = vadd.f32 0.0, %v1642
      %v1644 = vpop.f32.mrb[0].mxu0
      %1645 = vmatprep.mubr.bf16.mxu0 0
      %1646 = vmatmul.mubr.bf16.gmra.mrb[0].mxu0 %v1220
      %v1647 = vpop.f32.mrb[0].mxu0
      %v1648 = vadd.f32 0.0, %v1647
      %v1649 = vpop.f32.mrb[0].mxu0
      %v1650 = vpop.f32.mrb[0].mxu0
      %v1651 = vadd.f32 0.0, %v1650
      %v1652 = vpop.f32.mrb[0].mxu0
      %1653 = vmatprep.mubr.bf16.mxu0 0
      %1654 = vmatmul.mubr.bf16.gmra.mrb[0].mxu0 %v1223
      %v1655 = vpop.f32.mrb[0].mxu0
      %v1656 = vadd.f32 0.0, %v1655
      %v1657 = vpop.f32.mrb[0].mxu0
      %v1658 = vpop.f32.mrb[0].mxu0
      %v1659 = vadd.f32 0.0, %v1658
      %v1660 = vpop.f32.mrb[0].mxu0
      %1661 = vmatprep.mubr.bf16.mxu0 0
      %1662 = vmatmul.mubr.bf16.gmra.mrb[0].mxu0 %v1226
      %v1663 = vpop.f32.mrb[0].mxu0
      %v1664 = vadd.f32 0.0, %v1663
      %v1665 = vpop.f32.mrb[0].mxu0
      %v1666 = vpop.f32.mrb[0].mxu0
      %v1667 = vadd.f32 0.0, %v1666
      %v1668 = vpop.f32.mrb[0].mxu0
      %1669 = vmatprep.mubr.bf16.mxu0 0
      %1670 = vmatmul.mubr.bf16.gmra.mrb[0].mxu0 %v1229
      %v1671 = vpop.f32.mrb[0].mxu0
      %v1672 = vadd.f32 0.0, %v1671
      %v1673 = vpop.f32.mrb[0].mxu0
      %v1674 = vpop.f32.mrb[0].mxu0
      %v1675 = vadd.f32 0.0, %v1674
      %v1676 = vpop.f32.mrb[0].mxu0
      %1677 = vmatprep.mubr.bf16.mxu0 0
      %1678 = vmatmul.mubr.bf16.gmra.mrb[0].mxu0 %v1232
      %v1679 = vpop.f32.mrb[0].mxu0
      %v1680 = vadd.f32 0.0, %v1679
      %v1681 = vpop.f32.mrb[0].mxu0
      %v1682 = vpop.f32.mrb[0].mxu0
      %v1683 = vadd.f32 0.0, %v1682
      %v1684 = vpop.f32.mrb[0].mxu0
      %1685 = vmatprep.mubr.bf16.mxu0 0
      %1686 = vmatmul.mubr.bf16.gmra.mrb[0].mxu0 %v1235
      %v1687 = vpop.f32.mrb[0].mxu0
      %v1688 = vadd.f32 0.0, %v1687
      %v1689 = vpop.f32.mrb[0].mxu0
      %v1690 = vpop.f32.mrb[0].mxu0
      %v1691 = vadd.f32 0.0, %v1690
      %v1692 = vpop.f32.mrb[0].mxu0
      %1693 = vmatprep.mubr.bf16.mxu0 0
      %1694 = vmatmul.mubr.bf16.gmra.mrb[0].mxu0 %v1238
      %v1695 = vpop.f32.mrb[0].mxu0
      %v1696 = vadd.f32 0.0, %v1695
      %v1697 = vpop.f32.mrb[0].mxu0
      %v1698 = vpop.f32.mrb[0].mxu0
      %v1699 = vadd.f32 0.0, %v1698
      %v1700 = vpop.f32.mrb[0].mxu0
      %1701 = vmatprep.mubr.bf16.mxu0 0
      %1702 = vmatmul.mubr.bf16.gmra.mrb[0].mxu0 %v1241
      %v1703 = vpop.f32.mrb[0].mxu0
      %v1704 = vadd.f32 0.0, %v1703
      %v1705 = vpop.f32.mrb[0].mxu0
      %v1706 = vpop.f32.mrb[0].mxu0
      %v1707 = vadd.f32 0.0, %v1706
      %v1708 = vpop.f32.mrb[0].mxu0
      %1709 = vdwg.mxu0
      %v1714 = vunpack.c.l.b16 %v1174
      %v1715 = vunpack.c.l.b16 %v1175
      %v1716 = vunpack.c.l.b16 %v1176
      %v1717 = vunpack.c.l.b16 %v1177
      %v1718 = vpack.c.b16 %v1715, %v1714
      %v1719 = vpack.c.b16 %v1717, %v1716
      %1722 = vmatprep.subr.bf16.mxu0 0
      %1723 = vmatpush1.bf16.msra.mxu0 %v1718
      %1724 = vmatprep.subr.bf16.mxu0 0
      %1725 = vmatpush1.bf16.msra.mxu0 %v1719
      %1726 = vmatprep.subr.bf16.mxu0 0
      %1727 = vmatpush1.bf16.msra.mxu0 0
      %1728 = vmatprep.subr.bf16.mxu0 0
      %1729 = vmatpush1.bf16.msra.mxu0 0
      %1730 = vmatprep.subr.bf16.mxu0 0
      %1731 = vmatpush1.bf16.msra.mxu0 0
      %1732 = vmatprep.subr.bf16.mxu0 0
      %1733 = vmatpush1.bf16.msra.mxu0 0
      %1734 = vmatprep.subr.bf16.mxu0 0
      %1735 = vmatpush1.bf16.msra.mxu0 0
      %1736 = vmatprep.subr.bf16.mxu0 0
      %1737 = vmatpush1.bf16.msra.mxu0 0
      %1738 = vmatprep.subr.bf16.mxu0 0
      %1739 = vmatpush1.bf16.msra.mxu0 0
      %1740 = vmatprep.subr.bf16.mxu0 0
      %1741 = vmatpush1.bf16.msra.mxu0 0
      %1742 = vmatprep.subr.bf16.mxu0 0
      %1743 = vmatpush1.bf16.msra.mxu0 0
      %1744 = vmatprep.subr.bf16.mxu0 0
      %1745 = vmatpush1.bf16.msra.mxu0 0
      %1746 = vmatprep.subr.bf16.mxu0 0
      %1747 = vmatpush1.bf16.msra.mxu0 0
      %1748 = vmatprep.subr.bf16.mxu0 0
      %1749 = vmatpush1.bf16.msra.mxu0 0
      %1750 = vmatprep.subr.bf16.mxu0 0
      %1751 = vmatpush1.bf16.msra.mxu0 0
      %1752 = vmatprep.subr.bf16.mxu0 0
      %1753 = vmatpush1.bf16.msra.mxu0 0
      %1754 = vmatprep.mubr.bf16.mxu0 0
      %1755 = vmatmul.mubr.bf16.gmra.mrb[0].mxu0 %v1401
      %v1756 = vpop.f32.mrb[0].mxu0
      %v1757 = vadd.f32 %v1600, %v1756
      %v1758 = vpop.f32.mrb[0].mxu0
      %v1759 = vpop.f32.mrb[0].mxu0
      %v1760 = vadd.f32 %v1603, %v1759
      %v1761 = vpop.f32.mrb[0].mxu0
      %1762 = vmatprep.mubr.bf16.mxu0 0
      %1763 = vmatmul.mubr.bf16.gmra.mrb[0].mxu0 %v1202
      %v1764 = vpop.f32.mrb[0].mxu0
      %v1765 = vadd.f32 %v1608, %v1764
      %v1766 = vpop.f32.mrb[0].mxu0
      %v1767 = vpop.f32.mrb[0].mxu0
      %v1768 = vadd.f32 %v1611, %v1767
      %v1769 = vpop.f32.mrb[0].mxu0
      %1770 = vmatprep.mubr.bf16.mxu0 0
      %1771 = vmatmul.mubr.bf16.gmra.mrb[0].mxu0 %v1205
      %v1772 = vpop.f32.mrb[0].mxu0
      %v1773 = vadd.f32 %v1616, %v1772
      %v1774 = vpop.f32.mrb[0].mxu0
      %v1775 = vpop.f32.mrb[0].mxu0
      %v1776 = vadd.f32 %v1619, %v1775
      %v1777 = vpop.f32.mrb[0].mxu0
      %1778 = vmatprep.mubr.bf16.mxu0 0
      %1779 = vmatmul.mubr.bf16.gmra.mrb[0].mxu0 %v1208
      %v1780 = vpop.f32.mrb[0].mxu0
      %v1781 = vadd.f32 %v1624, %v1780
      %v1782 = vpop.f32.mrb[0].mxu0
      %v1783 = vpop.f32.mrb[0].mxu0
      %v1784 = vadd.f32 %v1627, %v1783
      %v1785 = vpop.f32.mrb[0].mxu0
      %1786 = vmatprep.mubr.bf16.mxu0 0
      %1787 = vmatmul.mubr.bf16.gmra.mrb[0].mxu0 %v1211
      %v1788 = vpop.f32.mrb[0].mxu0
      %v1789 = vadd.f32 %v1632, %v1788
      %v1790 = vpop.f32.mrb[0].mxu0
      %v1791 = vpop.f32.mrb[0].mxu0
      %v1792 = vadd.f32 %v1635, %v1791
      %v1793 = vpop.f32.mrb[0].mxu0
      %1794 = vmatprep.mubr.bf16.mxu0 0
      %1795 = vmatmul.mubr.bf16.gmra.mrb[0].mxu0 %v1214
      %v1796 = vpop.f32.mrb[0].mxu0
      %v1797 = vadd.f32 %v1640, %v1796
      %v1798 = vpop.f32.mrb[0].mxu0
      %v1799 = vpop.f32.mrb[0].mxu0
      %v1800 = vadd.f32 %v1643, %v1799
      %v1801 = vpop.f32.mrb[0].mxu0
      %1802 = vmatprep.mubr.bf16.mxu0 0
      %1803 = vmatmul.mubr.bf16.gmra.mrb[0].mxu0 %v1217
      %v1804 = vpop.f32.mrb[0].mxu0
      %v1805 = vadd.f32 %v1648, %v1804
      %v1806 = vpop.f32.mrb[0].mxu0
      %v1807 = vpop.f32.mrb[0].mxu0
      %v1808 = vadd.f32 %v1651, %v1807
      %v1809 = vpop.f32.mrb[0].mxu0
      %1810 = vmatprep.mubr.bf16.mxu0 0
      %1811 = vmatmul.mubr.bf16.gmra.mrb[0].mxu0 %v1220
      %v1812 = vpop.f32.mrb[0].mxu0
      %v1813 = vadd.f32 %v1656, %v1812
      %v1814 = vpop.f32.mrb[0].mxu0
      %v1815 = vpop.f32.mrb[0].mxu0
      %v1816 = vadd.f32 %v1659, %v1815
      %v1817 = vpop.f32.mrb[0].mxu0
      %1818 = vmatprep.mubr.bf16.mxu0 0
      %1819 = vmatmul.mubr.bf16.gmra.mrb[0].mxu0 %v1223
      %v1820 = vpop.f32.mrb[0].mxu0
      %v1821 = vadd.f32 %v1664, %v1820
      %v1822 = vpop.f32.mrb[0].mxu0
      %v1823 = vpop.f32.mrb[0].mxu0
      %v1824 = vadd.f32 %v1667, %v1823
      %v1825 = vpop.f32.mrb[0].mxu0
      %1826 = vmatprep.mubr.bf16.mxu0 0
      %1827 = vmatmul.mubr.bf16.gmra.mrb[0].mxu0 %v1226
      %v1828 = vpop.f32.mrb[0].mxu0
      %v1829 = vadd.f32 %v1672, %v1828
      %v1830 = vpop.f32.mrb[0].mxu0
      %v1831 = vpop.f32.mrb[0].mxu0
      %v1832 = vadd.f32 %v1675, %v1831
      %v1833 = vpop.f32.mrb[0].mxu0
      %1834 = vmatprep.mubr.bf16.mxu0 0
      %1835 = vmatmul.mubr.bf16.gmra.mrb[0].mxu0 %v1229
      %v1836 = vpop.f32.mrb[0].mxu0
      %v1837 = vadd.f32 %v1680, %v1836
      %v1838 = vpop.f32.mrb[0].mxu0
      %v1839 = vpop.f32.mrb[0].mxu0
      %v1840 = vadd.f32 %v1683, %v1839
      %v1841 = vpop.f32.mrb[0].mxu0
      %1842 = vmatprep.mubr.bf16.mxu0 0
      %1843 = vmatmul.mubr.bf16.gmra.mrb[0].mxu0 %v1232
      %v1844 = vpop.f32.mrb[0].mxu0
      %v1845 = vadd.f32 %v1688, %v1844
      %v1846 = vpop.f32.mrb[0].mxu0
      %v1847 = vpop.f32.mrb[0].mxu0
      %v1848 = vadd.f32 %v1691, %v1847
      %v1849 = vpop.f32.mrb[0].mxu0
      %1850 = vmatprep.mubr.bf16.mxu0 0
      %1851 = vmatmul.mubr.bf16.gmra.mrb[0].mxu0 %v1235
      %v1852 = vpop.f32.mrb[0].mxu0
      %v1853 = vadd.f32 %v1696, %v1852
      %v1854 = vpop.f32.mrb[0].mxu0
      %v1855 = vpop.f32.mrb[0].mxu0
      %v1856 = vadd.f32 %v1699, %v1855
      %v1857 = vpop.f32.mrb[0].mxu0
      %1858 = vmatprep.mubr.bf16.mxu0 0
      %1859 = vmatmul.mubr.bf16.gmra.mrb[0].mxu0 %v1238
      %v1860 = vpop.f32.mrb[0].mxu0
      %v1861 = vadd.f32 %v1704, %v1860
      %v1862 = vpop.f32.mrb[0].mxu0
      %v1863 = vpop.f32.mrb[0].mxu0
      %v1864 = vadd.f32 %v1707, %v1863
      %v1865 = vpop.f32.mrb[0].mxu0
      %1866 = vdwg.mxu0
      %s1867 = scalar_lea.vmem %s3, 80
      %v1868 = vld [vmem:[%s1867] sm:$0xf]
      %v1869 = vld [vmem:[%s1867 + $0x4] sm:$0xf]
      %v1870 = vld [vmem:[%s1867 + $0x8] sm:$0xf]
      %v1871 = vld [vmem:[%s1867 + $0xc] sm:$0xf]
      %v1876 = vunpack.c.l.b16 %v1868
      %v1877 = vunpack.c.l.b16 %v1869
      %v1878 = vunpack.c.l.b16 %v1870
      %v1879 = vunpack.c.l.b16 %v1871
      %v1880 = vpack.c.b16 %v1877, %v1876
      %v1881 = vpack.c.b16 %v1879, %v1878
      %1884 = vmatprep.subr.bf16.mxu0 0
      %1885 = vmatpush1.bf16.msra.mxu0 %v1880
      %1886 = vmatprep.subr.bf16.mxu0 0
      %1887 = vmatpush1.bf16.msra.mxu0 %v1881
      %1888 = vmatprep.subr.bf16.mxu0 0
      %1889 = vmatpush1.bf16.msra.mxu0 0
      %1890 = vmatprep.subr.bf16.mxu0 0
      %1891 = vmatpush1.bf16.msra.mxu0 0
      %1892 = vmatprep.subr.bf16.mxu0 0
      %1893 = vmatpush1.bf16.msra.mxu0 0
      %1894 = vmatprep.subr.bf16.mxu0 0
      %1895 = vmatpush1.bf16.msra.mxu0 0
      %1896 = vmatprep.subr.bf16.mxu0 0
      %1897 = vmatpush1.bf16.msra.mxu0 0
      %1898 = vmatprep.subr.bf16.mxu0 0
      %1899 = vmatpush1.bf16.msra.mxu0 0
      %1900 = vmatprep.subr.bf16.mxu0 0
      %1901 = vmatpush1.bf16.msra.mxu0 0
      %1902 = vmatprep.subr.bf16.mxu0 0
      %1903 = vmatpush1.bf16.msra.mxu0 0
      %1904 = vmatprep.subr.bf16.mxu0 0
      %1905 = vmatpush1.bf16.msra.mxu0 0
      %1906 = vmatprep.subr.bf16.mxu0 0
      %1907 = vmatpush1.bf16.msra.mxu0 0
      %1908 = vmatprep.subr.bf16.mxu0 0
      %1909 = vmatpush1.bf16.msra.mxu0 0
      %1910 = vmatprep.subr.bf16.mxu0 0
      %1911 = vmatpush1.bf16.msra.mxu0 0
      %1912 = vmatprep.subr.bf16.mxu0 0
      %1913 = vmatpush1.bf16.msra.mxu0 0
      %1914 = vmatprep.subr.bf16.mxu0 0
      %1915 = vmatpush1.bf16.msra.mxu0 0
      %1916 = vmatprep.mubr.bf16.mxu0 0
      %1917 = vmatmul.mubr.bf16.gmra.mrb[0].mxu0 %v1202
      %v1918 = vpop.f32.mrb[0].mxu0
      %v1919 = vadd.f32 0.0, %v1918
      %v1920 = vpop.f32.mrb[0].mxu0
      %v1921 = vpop.f32.mrb[0].mxu0
      %v1922 = vadd.f32 0.0, %v1921
      %v1923 = vpop.f32.mrb[0].mxu0
      %1924 = vmatprep.mubr.bf16.mxu0 0
      %1925 = vmatmul.mubr.bf16.gmra.mrb[0].mxu0 %v1205
      %v1926 = vpop.f32.mrb[0].mxu0
      %v1927 = vadd.f32 0.0, %v1926
      %v1928 = vpop.f32.mrb[0].mxu0
      %v1929 = vpop.f32.mrb[0].mxu0
      %v1930 = vadd.f32 0.0, %v1929
      %v1931 = vpop.f32.mrb[0].mxu0
      %1932 = vmatprep.mubr.bf16.mxu0 0
      %1933 = vmatmul.mubr.bf16.gmra.mrb[0].mxu0 %v1208
      %v1934 = vpop.f32.mrb[0].mxu0
      %v1935 = vadd.f32 0.0, %v1934
      %v1936 = vpop.f32.mrb[0].mxu0
      %v1937 = vpop.f32.mrb[0].mxu0
      %v1938 = vadd.f32 0.0, %v1937
      %v1939 = vpop.f32.mrb[0].mxu0
      %1940 = vmatprep.mubr.bf16.mxu0 0
      %1941 = vmatmul.mubr.bf16.gmra.mrb[0].mxu0 %v1211
      %v1942 = vpop.f32.mrb[0].mxu0
      %v1943 = vadd.f32 0.0, %v1942
      %v1944 = vpop.f32.mrb[0].mxu0
      %v1945 = vpop.f32.mrb[0].mxu0
      %v1946 = vadd.f32 0.0, %v1945
      %v1947 = vpop.f32.mrb[0].mxu0
      %1948 = vmatprep.mubr.bf16.mxu0 0
      %1949 = vmatmul.mubr.bf16.gmra.mrb[0].mxu0 %v1214
      %v1950 = vpop.f32.mrb[0].mxu0
      %v1951 = vadd.f32 0.0, %v1950
      %v1952 = vpop.f32.mrb[0].mxu0
      %v1953 = vpop.f32.mrb[0].mxu0
      %v1954 = vadd.f32 0.0, %v1953
      %v1955 = vpop.f32.mrb[0].mxu0
      %1956 = vmatprep.mubr.bf16.mxu0 0
      %1957 = vmatmul.mubr.bf16.gmra.mrb[0].mxu0 %v1217
      %v1958 = vpop.f32.mrb[0].mxu0
      %v1959 = vadd.f32 0.0, %v1958
      %v1960 = vpop.f32.mrb[0].mxu0
      %v1961 = vpop.f32.mrb[0].mxu0
      %v1962 = vadd.f32 0.0, %v1961
      %v1963 = vpop.f32.mrb[0].mxu0
      %1964 = vmatprep.mubr.bf16.mxu0 0
      %1965 = vmatmul.mubr.bf16.gmra.mrb[0].mxu0 %v1220
      %v1966 = vpop.f32.mrb[0].mxu0
      %v1967 = vadd.f32 0.0, %v1966
      %v1968 = vpop.f32.mrb[0].mxu0
      %v1969 = vpop.f32.mrb[0].mxu0
      %v1970 = vadd.f32 0.0, %v1969
      %v1971 = vpop.f32.mrb[0].mxu0
      %1972 = vmatprep.mubr.bf16.mxu0 0
      %1973 = vmatmul.mubr.bf16.gmra.mrb[0].mxu0 %v1223
      %v1974 = vpop.f32.mrb[0].mxu0
      %v1975 = vadd.f32 0.0, %v1974
      %v1976 = vpop.f32.mrb[0].mxu0
      %v1977 = vpop.f32.mrb[0].mxu0
      %v1978 = vadd.f32 0.0, %v1977
      %v1979 = vpop.f32.mrb[0].mxu0
      %1980 = vmatprep.mubr.bf16.mxu0 0
      %1981 = vmatmul.mubr.bf16.gmra.mrb[0].mxu0 %v1226
      %v1982 = vpop.f32.mrb[0].mxu0
      %v1983 = vadd.f32 0.0, %v1982
      %v1984 = vpop.f32.mrb[0].mxu0
      %v1985 = vpop.f32.mrb[0].mxu0
      %v1986 = vadd.f32 0.0, %v1985
      %v1987 = vpop.f32.mrb[0].mxu0
      %1988 = vmatprep.mubr.bf16.mxu0 0
      %1989 = vmatmul.mubr.bf16.gmra.mrb[0].mxu0 %v1229
      %v1990 = vpop.f32.mrb[0].mxu0
      %v1991 = vadd.f32 0.0, %v1990
      %v1992 = vpop.f32.mrb[0].mxu0
      %v1993 = vpop.f32.mrb[0].mxu0
      %v1994 = vadd.f32 0.0, %v1993
      %v1995 = vpop.f32.mrb[0].mxu0
      %1996 = vmatprep.mubr.bf16.mxu0 0
      %1997 = vmatmul.mubr.bf16.gmra.mrb[0].mxu0 %v1232
      %v1998 = vpop.f32.mrb[0].mxu0
      %v1999 = vadd.f32 0.0, %v1998
      %v2000 = vpop.f32.mrb[0].mxu0
      %v2001 = vpop.f32.mrb[0].mxu0
      %v2002 = vadd.f32 0.0, %v2001
      %v2003 = vpop.f32.mrb[0].mxu0
      %2004 = vmatprep.mubr.bf16.mxu0 0
      %2005 = vmatmul.mubr.bf16.gmra.mrb[0].mxu0 %v1235
      %v2006 = vpop.f32.mrb[0].mxu0
      %v2007 = vadd.f32 0.0, %v2006
      %v2008 = vpop.f32.mrb[0].mxu0
      %v2009 = vpop.f32.mrb[0].mxu0
      %v2010 = vadd.f32 0.0, %v2009
      %v2011 = vpop.f32.mrb[0].mxu0
      %2012 = vmatprep.mubr.bf16.mxu0 0
      %2013 = vmatmul.mubr.bf16.gmra.mrb[0].mxu0 %v1238
      %v2014 = vpop.f32.mrb[0].mxu0
      %v2015 = vadd.f32 0.0, %v2014
      %v2016 = vpop.f32.mrb[0].mxu0
      %v2017 = vpop.f32.mrb[0].mxu0
      %v2018 = vadd.f32 0.0, %v2017
      %v2019 = vpop.f32.mrb[0].mxu0
      %2020 = vmatprep.mubr.bf16.mxu0 0
      %2021 = vmatmul.mubr.bf16.gmra.mrb[0].mxu0 %v1241
      %v2022 = vpop.f32.mrb[0].mxu0
      %v2023 = vadd.f32 0.0, %v2022
      %v2024 = vpop.f32.mrb[0].mxu0
      %v2025 = vpop.f32.mrb[0].mxu0
      %v2026 = vadd.f32 0.0, %v2025
      %v2027 = vpop.f32.mrb[0].mxu0
      %2028 = vdwg.mxu0
      %v2033 = vunpack.c.l.b16 %v1179
      %v2034 = vunpack.c.l.b16 %v1180
      %v2035 = vunpack.c.l.b16 %v1181
      %v2036 = vunpack.c.l.b16 %v1182
      %v2037 = vpack.c.b16 %v2034, %v2033
      %v2038 = vpack.c.b16 %v2036, %v2035
      %2041 = vmatprep.subr.bf16.mxu0 0
      %2042 = vmatpush1.bf16.msra.mxu0 %v2037
      %2043 = vmatprep.subr.bf16.mxu0 0
      %2044 = vmatpush1.bf16.msra.mxu0 %v2038
      %2045 = vmatprep.subr.bf16.mxu0 0
      %2046 = vmatpush1.bf16.msra.mxu0 0
      %2047 = vmatprep.subr.bf16.mxu0 0
      %2048 = vmatpush1.bf16.msra.mxu0 0
      %2049 = vmatprep.subr.bf16.mxu0 0
      %2050 = vmatpush1.bf16.msra.mxu0 0
      %2051 = vmatprep.subr.bf16.mxu0 0
      %2052 = vmatpush1.bf16.msra.mxu0 0
      %2053 = vmatprep.subr.bf16.mxu0 0
      %2054 = vmatpush1.bf16.msra.mxu0 0
      %2055 = vmatprep.subr.bf16.mxu0 0
      %2056 = vmatpush1.bf16.msra.mxu0 0
      %2057 = vmatprep.subr.bf16.mxu0 0
      %2058 = vmatpush1.bf16.msra.mxu0 0
      %2059 = vmatprep.subr.bf16.mxu0 0
      %2060 = vmatpush1.bf16.msra.mxu0 0
      %2061 = vmatprep.subr.bf16.mxu0 0
      %2062 = vmatpush1.bf16.msra.mxu0 0
      %2063 = vmatprep.subr.bf16.mxu0 0
      %2064 = vmatpush1.bf16.msra.mxu0 0
      %2065 = vmatprep.subr.bf16.mxu0 0
      %2066 = vmatpush1.bf16.msra.mxu0 0
      %2067 = vmatprep.subr.bf16.mxu0 0
      %2068 = vmatpush1.bf16.msra.mxu0 0
      %2069 = vmatprep.subr.bf16.mxu0 0
      %2070 = vmatpush1.bf16.msra.mxu0 0
      %2071 = vmatprep.subr.bf16.mxu0 0
      %2072 = vmatpush1.bf16.msra.mxu0 0
      %2073 = vmatprep.mubr.bf16.mxu0 0
      %2074 = vmatmul.mubr.bf16.gmra.mrb[0].mxu0 %v1401
      %v2075 = vpop.f32.mrb[0].mxu0
      %v2076 = vadd.f32 %v1919, %v2075
      %v2077 = vpop.f32.mrb[0].mxu0
      %v2078 = vpop.f32.mrb[0].mxu0
      %v2079 = vadd.f32 %v1922, %v2078
      %v2080 = vpop.f32.mrb[0].mxu0
      %2081 = vmatprep.mubr.bf16.mxu0 0
      %2082 = vmatmul.mubr.bf16.gmra.mrb[0].mxu0 %v1202
      %v2083 = vpop.f32.mrb[0].mxu0
      %v2084 = vadd.f32 %v1927, %v2083
      %v2085 = vpop.f32.mrb[0].mxu0
      %v2086 = vpop.f32.mrb[0].mxu0
      %v2087 = vadd.f32 %v1930, %v2086
      %v2088 = vpop.f32.mrb[0].mxu0
      %2089 = vmatprep.mubr.bf16.mxu0 0
      %2090 = vmatmul.mubr.bf16.gmra.mrb[0].mxu0 %v1205
      %v2091 = vpop.f32.mrb[0].mxu0
      %v2092 = vadd.f32 %v1935, %v2091
      %v2093 = vpop.f32.mrb[0].mxu0
      %v2094 = vpop.f32.mrb[0].mxu0
      %v2095 = vadd.f32 %v1938, %v2094
      %v2096 = vpop.f32.mrb[0].mxu0
      %2097 = vmatprep.mubr.bf16.mxu0 0
      %2098 = vmatmul.mubr.bf16.gmra.mrb[0].mxu0 %v1208
      %v2099 = vpop.f32.mrb[0].mxu0
      %v2100 = vadd.f32 %v1943, %v2099
      %v2101 = vpop.f32.mrb[0].mxu0
      %v2102 = vpop.f32.mrb[0].mxu0
      %v2103 = vadd.f32 %v1946, %v2102
      %v2104 = vpop.f32.mrb[0].mxu0
      %2105 = vmatprep.mubr.bf16.mxu0 0
      %2106 = vmatmul.mubr.bf16.gmra.mrb[0].mxu0 %v1211
      %v2107 = vpop.f32.mrb[0].mxu0
      %v2108 = vadd.f32 %v1951, %v2107
      %v2109 = vpop.f32.mrb[0].mxu0
      %v2110 = vpop.f32.mrb[0].mxu0
      %v2111 = vadd.f32 %v1954, %v2110
      %v2112 = vpop.f32.mrb[0].mxu0
      %2113 = vmatprep.mubr.bf16.mxu0 0
      %2114 = vmatmul.mubr.bf16.gmra.mrb[0].mxu0 %v1214
      %v2115 = vpop.f32.mrb[0].mxu0
      %v2116 = vadd.f32 %v1959, %v2115
      %v2117 = vpop.f32.mrb[0].mxu0
      %v2118 = vpop.f32.mrb[0].mxu0
      %v2119 = vadd.f32 %v1962, %v2118
      %v2120 = vpop.f32.mrb[0].mxu0
      %2121 = vmatprep.mubr.bf16.mxu0 0
      %2122 = vmatmul.mubr.bf16.gmra.mrb[0].mxu0 %v1217
      %v2123 = vpop.f32.mrb[0].mxu0
      %v2124 = vadd.f32 %v1967, %v2123
      %v2125 = vpop.f32.mrb[0].mxu0
      %v2126 = vpop.f32.mrb[0].mxu0
      %v2127 = vadd.f32 %v1970, %v2126
      %v2128 = vpop.f32.mrb[0].mxu0
      %2129 = vmatprep.mubr.bf16.mxu0 0
      %2130 = vmatmul.mubr.bf16.gmra.mrb[0].mxu0 %v1220
      %v2131 = vpop.f32.mrb[0].mxu0
      %v2132 = vadd.f32 %v1975, %v2131
      %v2133 = vpop.f32.mrb[0].mxu0
      %v2134 = vpop.f32.mrb[0].mxu0
      %v2135 = vadd.f32 %v1978, %v2134
      %v2136 = vpop.f32.mrb[0].mxu0
      %2137 = vmatprep.mubr.bf16.mxu0 0
      %2138 = vmatmul.mubr.bf16.gmra.mrb[0].mxu0 %v1223
      %v2139 = vpop.f32.mrb[0].mxu0
      %v2140 = vadd.f32 %v1983, %v2139
      %v2141 = vpop.f32.mrb[0].mxu0
      %v2142 = vpop.f32.mrb[0].mxu0
      %v2143 = vadd.f32 %v1986, %v2142
      %v2144 = vpop.f32.mrb[0].mxu0
      %2145 = vmatprep.mubr.bf16.mxu0 0
      %2146 = vmatmul.mubr.bf16.gmra.mrb[0].mxu0 %v1226
      %v2147 = vpop.f32.mrb[0].mxu0
      %v2148 = vadd.f32 %v1991, %v2147
      %v2149 = vpop.f32.mrb[0].mxu0
      %v2150 = vpop.f32.mrb[0].mxu0
      %v2151 = vadd.f32 %v1994, %v2150
      %v2152 = vpop.f32.mrb[0].mxu0
      %2153 = vmatprep.mubr.bf16.mxu0 0
      %2154 = vmatmul.mubr.bf16.gmra.mrb[0].mxu0 %v1229
      %v2155 = vpop.f32.mrb[0].mxu0
      %v2156 = vadd.f32 %v1999, %v2155
      %v2157 = vpop.f32.mrb[0].mxu0
      %v2158 = vpop.f32.mrb[0].mxu0
      %v2159 = vadd.f32 %v2002, %v2158
      %v2160 = vpop.f32.mrb[0].mxu0
      %2161 = vmatprep.mubr.bf16.mxu0 0
      %2162 = vmatmul.mubr.bf16.gmra.mrb[0].mxu0 %v1232
      %v2163 = vpop.f32.mrb[0].mxu0
      %v2164 = vadd.f32 %v2007, %v2163
      %v2165 = vpop.f32.mrb[0].mxu0
      %v2166 = vpop.f32.mrb[0].mxu0
      %v2167 = vadd.f32 %v2010, %v2166
      %v2168 = vpop.f32.mrb[0].mxu0
      %2169 = vmatprep.mubr.bf16.mxu0 0
      %2170 = vmatmul.mubr.bf16.gmra.mrb[0].mxu0 %v1235
      %v2171 = vpop.f32.mrb[0].mxu0
      %v2172 = vadd.f32 %v2015, %v2171
      %v2173 = vpop.f32.mrb[0].mxu0
      %v2174 = vpop.f32.mrb[0].mxu0
      %v2175 = vadd.f32 %v2018, %v2174
      %v2176 = vpop.f32.mrb[0].mxu0
      %2177 = vmatprep.mubr.bf16.mxu0 0
      %2178 = vmatmul.mubr.bf16.gmra.mrb[0].mxu0 %v1238
      %v2179 = vpop.f32.mrb[0].mxu0
      %v2180 = vadd.f32 %v2023, %v2179
      %v2181 = vpop.f32.mrb[0].mxu0
      %v2182 = vpop.f32.mrb[0].mxu0
      %v2183 = vadd.f32 %v2026, %v2182
      %v2184 = vpop.f32.mrb[0].mxu0
      %2185 = vdwg.mxu0
      %v2186 = vpack.c.bf16 %v1152, %v1151
      %s2187 = scalar_lea.vmem %s3, 96
      %v2188 = vld [vmem:[%s2187] sm:$0xf]
      %v2189 = vld [vmem:[%s2187 + $0x4] sm:$0xf]
      %v2190 = vld [vmem:[%s2187 + $0x8] sm:$0xf]
      %v2191 = vld [vmem:[%s2187 + $0xc] sm:$0xf]
      %v2196 = vunpack.c.l.b16 %v2188
      %v2197 = vunpack.c.l.b16 %v2189
      %v2198 = vunpack.c.l.b16 %v2190
      %v2199 = vunpack.c.l.b16 %v2191
      %v2200 = vpack.c.b16 %v2197, %v2196
      %v2201 = vpack.c.b16 %v2199, %v2198
      %v2205 = vsel %vm374, %v2186, 0
      %2207 = vmatprep.subr.bf16.mxu0 0
      %2208 = vmatpush1.bf16.msra.mxu0 %v2200
      %2209 = vmatprep.subr.bf16.mxu0 0
      %2210 = vmatpush1.bf16.msra.mxu0 %v2201
      %2211 = vmatprep.subr.bf16.mxu0 0
      %2212 = vmatpush1.bf16.msra.mxu0 0
      %2213 = vmatprep.subr.bf16.mxu0 0
      %2214 = vmatpush1.bf16.msra.mxu0 0
      %2215 = vmatprep.subr.bf16.mxu0 0
      %2216 = vmatpush1.bf16.msra.mxu0 0
      %2217 = vmatprep.subr.bf16.mxu0 0
      %2218 = vmatpush1.bf16.msra.mxu0 0
      %2219 = vmatprep.subr.bf16.mxu0 0
      %2220 = vmatpush1.bf16.msra.mxu0 0
      %2221 = vmatprep.subr.bf16.mxu0 0
      %2222 = vmatpush1.bf16.msra.mxu0 0
      %2223 = vmatprep.subr.bf16.mxu0 0
      %2224 = vmatpush1.bf16.msra.mxu0 0
      %2225 = vmatprep.subr.bf16.mxu0 0
      %2226 = vmatpush1.bf16.msra.mxu0 0
      %2227 = vmatprep.subr.bf16.mxu0 0
      %2228 = vmatpush1.bf16.msra.mxu0 0
      %2229 = vmatprep.subr.bf16.mxu0 0
      %2230 = vmatpush1.bf16.msra.mxu0 0
      %2231 = vmatprep.subr.bf16.mxu0 0
      %2232 = vmatpush1.bf16.msra.mxu0 0
      %2233 = vmatprep.subr.bf16.mxu0 0
      %2234 = vmatpush1.bf16.msra.mxu0 0
      %2235 = vmatprep.subr.bf16.mxu0 0
      %2236 = vmatpush1.bf16.msra.mxu0 0
      %2237 = vmatprep.subr.bf16.mxu0 0
      %2238 = vmatpush1.bf16.msra.mxu0 0
      %2239 = vmatprep.mubr.bf16.mxu0 0
      %2240 = vmatmul.mubr.bf16.gmra.mrb[0].mxu0 %v1205
      %v2241 = vpop.f32.mrb[0].mxu0
      %v2242 = vadd.f32 0.0, %v2241
      %v2243 = vpop.f32.mrb[0].mxu0
      %v2244 = vpop.f32.mrb[0].mxu0
      %v2245 = vadd.f32 0.0, %v2244
      %v2246 = vpop.f32.mrb[0].mxu0
      %2247 = vmatprep.mubr.bf16.mxu0 0
      %2248 = vmatmul.mubr.bf16.gmra.mrb[0].mxu0 %v1208
      %v2249 = vpop.f32.mrb[0].mxu0
      %v2250 = vadd.f32 0.0, %v2249
      %v2251 = vpop.f32.mrb[0].mxu0
      %v2252 = vpop.f32.mrb[0].mxu0
      %v2253 = vadd.f32 0.0, %v2252
      %v2254 = vpop.f32.mrb[0].mxu0
      %2255 = vmatprep.mubr.bf16.mxu0 0
      %2256 = vmatmul.mubr.bf16.gmra.mrb[0].mxu0 %v1211
      %v2257 = vpop.f32.mrb[0].mxu0
      %v2258 = vadd.f32 0.0, %v2257
      %v2259 = vpop.f32.mrb[0].mxu0
      %v2260 = vpop.f32.mrb[0].mxu0
      %v2261 = vadd.f32 0.0, %v2260
      %v2262 = vpop.f32.mrb[0].mxu0
      %2263 = vmatprep.mubr.bf16.mxu0 0
      %2264 = vmatmul.mubr.bf16.gmra.mrb[0].mxu0 %v1214
      %v2265 = vpop.f32.mrb[0].mxu0
      %v2266 = vadd.f32 0.0, %v2265
      %v2267 = vpop.f32.mrb[0].mxu0
      %v2268 = vpop.f32.mrb[0].mxu0
      %v2269 = vadd.f32 0.0, %v2268
      %v2270 = vpop.f32.mrb[0].mxu0
      %2271 = vmatprep.mubr.bf16.mxu0 0
      %2272 = vmatmul.mubr.bf16.gmra.mrb[0].mxu0 %v1217
      %v2273 = vpop.f32.mrb[0].mxu0
      %v2274 = vadd.f32 0.0, %v2273
      %v2275 = vpop.f32.mrb[0].mxu0
      %v2276 = vpop.f32.mrb[0].mxu0
      %v2277 = vadd.f32 0.0, %v2276
      %v2278 = vpop.f32.mrb[0].mxu0
      %2279 = vmatprep.mubr.bf16.mxu0 0
      %2280 = vmatmul.mubr.bf16.gmra.mrb[0].mxu0 %v1220
      %v2281 = vpop.f32.mrb[0].mxu0
      %v2282 = vadd.f32 0.0, %v2281
      %v2283 = vpop.f32.mrb[0].mxu0
      %v2284 = vpop.f32.mrb[0].mxu0
      %v2285 = vadd.f32 0.0, %v2284
      %v2286 = vpop.f32.mrb[0].mxu0
      %2287 = vmatprep.mubr.bf16.mxu0 0
      %2288 = vmatmul.mubr.bf16.gmra.mrb[0].mxu0 %v1223
      %v2289 = vpop.f32.mrb[0].mxu0
      %v2290 = vadd.f32 0.0, %v2289
      %v2291 = vpop.f32.mrb[0].mxu0
      %v2292 = vpop.f32.mrb[0].mxu0
      %v2293 = vadd.f32 0.0, %v2292
      %v2294 = vpop.f32.mrb[0].mxu0
      %2295 = vmatprep.mubr.bf16.mxu0 0
      %2296 = vmatmul.mubr.bf16.gmra.mrb[0].mxu0 %v1226
      %v2297 = vpop.f32.mrb[0].mxu0
      %v2298 = vadd.f32 0.0, %v2297
      %v2299 = vpop.f32.mrb[0].mxu0
      %v2300 = vpop.f32.mrb[0].mxu0
      %v2301 = vadd.f32 0.0, %v2300
      %v2302 = vpop.f32.mrb[0].mxu0
      %2303 = vmatprep.mubr.bf16.mxu0 0
      %2304 = vmatmul.mubr.bf16.gmra.mrb[0].mxu0 %v1229
      %v2305 = vpop.f32.mrb[0].mxu0
      %v2306 = vadd.f32 0.0, %v2305
      %v2307 = vpop.f32.mrb[0].mxu0
      %v2308 = vpop.f32.mrb[0].mxu0
      %v2309 = vadd.f32 0.0, %v2308
      %v2310 = vpop.f32.mrb[0].mxu0
      %2311 = vmatprep.mubr.bf16.mxu0 0
      %2312 = vmatmul.mubr.bf16.gmra.mrb[0].mxu0 %v1232
      %v2313 = vpop.f32.mrb[0].mxu0
      %v2314 = vadd.f32 0.0, %v2313
      %v2315 = vpop.f32.mrb[0].mxu0
      %v2316 = vpop.f32.mrb[0].mxu0
      %v2317 = vadd.f32 0.0, %v2316
      %v2318 = vpop.f32.mrb[0].mxu0
      %2319 = vmatprep.mubr.bf16.mxu0 0
      %2320 = vmatmul.mubr.bf16.gmra.mrb[0].mxu0 %v1235
      %v2321 = vpop.f32.mrb[0].mxu0
      %v2322 = vadd.f32 0.0, %v2321
      %v2323 = vpop.f32.mrb[0].mxu0
      %v2324 = vpop.f32.mrb[0].mxu0
      %v2325 = vadd.f32 0.0, %v2324
      %v2326 = vpop.f32.mrb[0].mxu0
      %2327 = vmatprep.mubr.bf16.mxu0 0
      %2328 = vmatmul.mubr.bf16.gmra.mrb[0].mxu0 %v1238
      %v2329 = vpop.f32.mrb[0].mxu0
      %v2330 = vadd.f32 0.0, %v2329
      %v2331 = vpop.f32.mrb[0].mxu0
      %v2332 = vpop.f32.mrb[0].mxu0
      %v2333 = vadd.f32 0.0, %v2332
      %v2334 = vpop.f32.mrb[0].mxu0
      %2335 = vmatprep.mubr.bf16.mxu0 0
      %2336 = vmatmul.mubr.bf16.gmra.mrb[0].mxu0 %v1241
      %v2337 = vpop.f32.mrb[0].mxu0
      %v2338 = vadd.f32 0.0, %v2337
      %v2339 = vpop.f32.mrb[0].mxu0
      %v2340 = vpop.f32.mrb[0].mxu0
      %v2341 = vadd.f32 0.0, %v2340
      %v2342 = vpop.f32.mrb[0].mxu0
      %2343 = vmatprep.mubr.bf16.mxu0 0
      %2344 = vmatmul.mubr.bf16.gmra.mrb[0].mxu0 %v2205
      %v2345 = vpop.f32.mrb[0].mxu0
      %v2346 = vadd.f32 0.0, %v2345
      %v2347 = vpop.f32.mrb[0].mxu0
      %v2348 = vpop.f32.mrb[0].mxu0
      %v2349 = vadd.f32 0.0, %v2348
      %v2350 = vpop.f32.mrb[0].mxu0
      %2351 = vdwg.mxu0
      %v2352 = vadd.f32 %v1438, %v2242
      %v2353 = vadd.f32 %v1441, %v2245
      %v2354 = vadd.f32 %v1446, %v2250
      %v2355 = vadd.f32 %v1449, %v2253
      %v2356 = vadd.f32 %v1454, %v2258
      %v2357 = vadd.f32 %v1457, %v2261
      %v2358 = vadd.f32 %v1462, %v2266
      %v2359 = vadd.f32 %v1465, %v2269
      %v2360 = vadd.f32 %v1470, %v2274
      %v2361 = vadd.f32 %v1473, %v2277
      %v2362 = vadd.f32 %v1478, %v2282
      %v2363 = vadd.f32 %v1481, %v2285
      %v2364 = vadd.f32 %v1486, %v2290
      %v2365 = vadd.f32 %v1489, %v2293
      %v2366 = vadd.f32 %v1494, %v2298
      %v2367 = vadd.f32 %v1497, %v2301
      %v2368 = vadd.f32 %v1502, %v2306
      %v2369 = vadd.f32 %v1505, %v2309
      %v2370 = vadd.f32 %v1510, %v2314
      %v2371 = vadd.f32 %v1513, %v2317
      %v2372 = vadd.f32 %v1518, %v2322
      %v2373 = vadd.f32 %v1521, %v2325
      %v2374 = vadd.f32 %v1526, %v2330
      %v2375 = vadd.f32 %v1529, %v2333
      %v2376 = vadd.f32 %v1534, %v2338
      %v2377 = vadd.f32 %v1537, %v2341
      %v2378 = vadd.f32 %v1542, %v2346
      %v2379 = vadd.f32 %v1545, %v2349
      %s2380 = scalar_lea.vmem %s3, 112
      %v2381 = vld [vmem:[%s2380] sm:$0xf]
      %v2382 = vld [vmem:[%s2380 + $0x4] sm:$0xf]
      %v2383 = vld [vmem:[%s2380 + $0x8] sm:$0xf]
      %v2384 = vld [vmem:[%s2380 + $0xc] sm:$0xf]
      %v2389 = vunpack.c.l.b16 %v2381
      %v2390 = vunpack.c.l.b16 %v2382
      %v2391 = vunpack.c.l.b16 %v2383
      %v2392 = vunpack.c.l.b16 %v2384
      %v2393 = vpack.c.b16 %v2390, %v2389
      %v2394 = vpack.c.b16 %v2392, %v2391
      %2397 = vmatprep.subr.bf16.mxu0 0
      %2398 = vmatpush1.bf16.msra.mxu0 %v2393
      %2399 = vmatprep.subr.bf16.mxu0 0
      %2400 = vmatpush1.bf16.msra.mxu0 %v2394
      %2401 = vmatprep.subr.bf16.mxu0 0
      %2402 = vmatpush1.bf16.msra.mxu0 0
      %2403 = vmatprep.subr.bf16.mxu0 0
      %2404 = vmatpush1.bf16.msra.mxu0 0
      %2405 = vmatprep.subr.bf16.mxu0 0
      %2406 = vmatpush1.bf16.msra.mxu0 0
      %2407 = vmatprep.subr.bf16.mxu0 0
      %2408 = vmatpush1.bf16.msra.mxu0 0
      %2409 = vmatprep.subr.bf16.mxu0 0
      %2410 = vmatpush1.bf16.msra.mxu0 0
      %2411 = vmatprep.subr.bf16.mxu0 0
      %2412 = vmatpush1.bf16.msra.mxu0 0
      %2413 = vmatprep.subr.bf16.mxu0 0
      %2414 = vmatpush1.bf16.msra.mxu0 0
      %2415 = vmatprep.subr.bf16.mxu0 0
      %2416 = vmatpush1.bf16.msra.mxu0 0
      %2417 = vmatprep.subr.bf16.mxu0 0
      %2418 = vmatpush1.bf16.msra.mxu0 0
      %2419 = vmatprep.subr.bf16.mxu0 0
      %2420 = vmatpush1.bf16.msra.mxu0 0
      %2421 = vmatprep.subr.bf16.mxu0 0
      %2422 = vmatpush1.bf16.msra.mxu0 0
      %2423 = vmatprep.subr.bf16.mxu0 0
      %2424 = vmatpush1.bf16.msra.mxu0 0
      %2425 = vmatprep.subr.bf16.mxu0 0
      %2426 = vmatpush1.bf16.msra.mxu0 0
      %2427 = vmatprep.subr.bf16.mxu0 0
      %2428 = vmatpush1.bf16.msra.mxu0 0
      %2429 = vmatprep.mubr.bf16.mxu0 0
      %2430 = vmatmul.mubr.bf16.gmra.mrb[0].mxu0 %v1205
      %v2431 = vpop.f32.mrb[0].mxu0
      %v2432 = vadd.f32 0.0, %v2431
      %v2433 = vpop.f32.mrb[0].mxu0
      %v2434 = vpop.f32.mrb[0].mxu0
      %v2435 = vadd.f32 0.0, %v2434
      %v2436 = vpop.f32.mrb[0].mxu0
      %2437 = vmatprep.mubr.bf16.mxu0 0
      %2438 = vmatmul.mubr.bf16.gmra.mrb[0].mxu0 %v1208
      %v2439 = vpop.f32.mrb[0].mxu0
      %v2440 = vadd.f32 0.0, %v2439
      %v2441 = vpop.f32.mrb[0].mxu0
      %v2442 = vpop.f32.mrb[0].mxu0
      %v2443 = vadd.f32 0.0, %v2442
      %v2444 = vpop.f32.mrb[0].mxu0
      %2445 = vmatprep.mubr.bf16.mxu0 0
      %2446 = vmatmul.mubr.bf16.gmra.mrb[0].mxu0 %v1211
      %v2447 = vpop.f32.mrb[0].mxu0
      %v2448 = vadd.f32 0.0, %v2447
      %v2449 = vpop.f32.mrb[0].mxu0
      %v2450 = vpop.f32.mrb[0].mxu0
      %v2451 = vadd.f32 0.0, %v2450
      %v2452 = vpop.f32.mrb[0].mxu0
      %2453 = vmatprep.mubr.bf16.mxu0 0
      %2454 = vmatmul.mubr.bf16.gmra.mrb[0].mxu0 %v1214
      %v2455 = vpop.f32.mrb[0].mxu0
      %v2456 = vadd.f32 0.0, %v2455
      %v2457 = vpop.f32.mrb[0].mxu0
      %v2458 = vpop.f32.mrb[0].mxu0
      %v2459 = vadd.f32 0.0, %v2458
      %v2460 = vpop.f32.mrb[0].mxu0
      %2461 = vmatprep.mubr.bf16.mxu0 0
      %2462 = vmatmul.mubr.bf16.gmra.mrb[0].mxu0 %v1217
      %v2463 = vpop.f32.mrb[0].mxu0
      %v2464 = vadd.f32 0.0, %v2463
      %v2465 = vpop.f32.mrb[0].mxu0
      %v2466 = vpop.f32.mrb[0].mxu0
      %v2467 = vadd.f32 0.0, %v2466
      %v2468 = vpop.f32.mrb[0].mxu0
      %2469 = vmatprep.mubr.bf16.mxu0 0
      %2470 = vmatmul.mubr.bf16.gmra.mrb[0].mxu0 %v1220
      %v2471 = vpop.f32.mrb[0].mxu0
      %v2472 = vadd.f32 0.0, %v2471
      %v2473 = vpop.f32.mrb[0].mxu0
      %v2474 = vpop.f32.mrb[0].mxu0
      %v2475 = vadd.f32 0.0, %v2474
      %v2476 = vpop.f32.mrb[0].mxu0
      %2477 = vmatprep.mubr.bf16.mxu0 0
      %2478 = vmatmul.mubr.bf16.gmra.mrb[0].mxu0 %v1223
      %v2479 = vpop.f32.mrb[0].mxu0
      %v2480 = vadd.f32 0.0, %v2479
      %v2481 = vpop.f32.mrb[0].mxu0
      %v2482 = vpop.f32.mrb[0].mxu0
      %v2483 = vadd.f32 0.0, %v2482
      %v2484 = vpop.f32.mrb[0].mxu0
      %2485 = vmatprep.mubr.bf16.mxu0 0
      %2486 = vmatmul.mubr.bf16.gmra.mrb[0].mxu0 %v1226
      %v2487 = vpop.f32.mrb[0].mxu0
      %v2488 = vadd.f32 0.0, %v2487
      %v2489 = vpop.f32.mrb[0].mxu0
      %v2490 = vpop.f32.mrb[0].mxu0
      %v2491 = vadd.f32 0.0, %v2490
      %v2492 = vpop.f32.mrb[0].mxu0
      %2493 = vmatprep.mubr.bf16.mxu0 0
      %2494 = vmatmul.mubr.bf16.gmra.mrb[0].mxu0 %v1229
      %v2495 = vpop.f32.mrb[0].mxu0
      %v2496 = vadd.f32 0.0, %v2495
      %v2497 = vpop.f32.mrb[0].mxu0
      %v2498 = vpop.f32.mrb[0].mxu0
      %v2499 = vadd.f32 0.0, %v2498
      %v2500 = vpop.f32.mrb[0].mxu0
      %2501 = vmatprep.mubr.bf16.mxu0 0
      %2502 = vmatmul.mubr.bf16.gmra.mrb[0].mxu0 %v1232
      %v2503 = vpop.f32.mrb[0].mxu0
      %v2504 = vadd.f32 0.0, %v2503
      %v2505 = vpop.f32.mrb[0].mxu0
      %v2506 = vpop.f32.mrb[0].mxu0
      %v2507 = vadd.f32 0.0, %v2506
      %v2508 = vpop.f32.mrb[0].mxu0
      %2509 = vmatprep.mubr.bf16.mxu0 0
      %2510 = vmatmul.mubr.bf16.gmra.mrb[0].mxu0 %v1235
      %v2511 = vpop.f32.mrb[0].mxu0
      %v2512 = vadd.f32 0.0, %v2511
      %v2513 = vpop.f32.mrb[0].mxu0
      %v2514 = vpop.f32.mrb[0].mxu0
      %v2515 = vadd.f32 0.0, %v2514
      %v2516 = vpop.f32.mrb[0].mxu0
      %2517 = vmatprep.mubr.bf16.mxu0 0
      %2518 = vmatmul.mubr.bf16.gmra.mrb[0].mxu0 %v1238
      %v2519 = vpop.f32.mrb[0].mxu0
      %v2520 = vadd.f32 0.0, %v2519
      %v2521 = vpop.f32.mrb[0].mxu0
      %v2522 = vpop.f32.mrb[0].mxu0
      %v2523 = vadd.f32 0.0, %v2522
      %v2524 = vpop.f32.mrb[0].mxu0
      %2525 = vmatprep.mubr.bf16.mxu0 0
      %2526 = vmatmul.mubr.bf16.gmra.mrb[0].mxu0 %v1241
      %v2527 = vpop.f32.mrb[0].mxu0
      %v2528 = vadd.f32 0.0, %v2527
      %v2529 = vpop.f32.mrb[0].mxu0
      %v2530 = vpop.f32.mrb[0].mxu0
      %v2531 = vadd.f32 0.0, %v2530
      %v2532 = vpop.f32.mrb[0].mxu0
      %2533 = vmatprep.mubr.bf16.mxu0 0
      %2534 = vmatmul.mubr.bf16.gmra.mrb[0].mxu0 %v2205
      %v2535 = vpop.f32.mrb[0].mxu0
      %v2536 = vadd.f32 0.0, %v2535
      %v2537 = vpop.f32.mrb[0].mxu0
      %v2538 = vpop.f32.mrb[0].mxu0
      %v2539 = vadd.f32 0.0, %v2538
      %v2540 = vpop.f32.mrb[0].mxu0
      %2541 = vdwg.mxu0
      %v2542 = vadd.f32 %v1757, %v2432
      %v2543 = vadd.f32 %v1760, %v2435
      %v2544 = vadd.f32 %v1765, %v2440
      %v2545 = vadd.f32 %v1768, %v2443
      %v2546 = vadd.f32 %v1773, %v2448
      %v2547 = vadd.f32 %v1776, %v2451
      %v2548 = vadd.f32 %v1781, %v2456
      %v2549 = vadd.f32 %v1784, %v2459
      %v2550 = vadd.f32 %v1789, %v2464
      %v2551 = vadd.f32 %v1792, %v2467
      %v2552 = vadd.f32 %v1797, %v2472
      %v2553 = vadd.f32 %v1800, %v2475
      %v2554 = vadd.f32 %v1805, %v2480
      %v2555 = vadd.f32 %v1808, %v2483
      %v2556 = vadd.f32 %v1813, %v2488
      %v2557 = vadd.f32 %v1816, %v2491
      %v2558 = vadd.f32 %v1821, %v2496
      %v2559 = vadd.f32 %v1824, %v2499
      %v2560 = vadd.f32 %v1829, %v2504
      %v2561 = vadd.f32 %v1832, %v2507
      %v2562 = vadd.f32 %v1837, %v2512
      %v2563 = vadd.f32 %v1840, %v2515
      %v2564 = vadd.f32 %v1845, %v2520
      %v2565 = vadd.f32 %v1848, %v2523
      %v2566 = vadd.f32 %v1853, %v2528
      %v2567 = vadd.f32 %v1856, %v2531
      %v2568 = vadd.f32 %v1861, %v2536
      %v2569 = vadd.f32 %v1864, %v2539
      %s2570 = scalar_lea.vmem %s3, 128
      %v2571 = vld [vmem:[%s2570] sm:$0xf]
      %v2572 = vld [vmem:[%s2570 + $0x4] sm:$0xf]
      %v2573 = vld [vmem:[%s2570 + $0x8] sm:$0xf]
      %v2574 = vld [vmem:[%s2570 + $0xc] sm:$0xf]
      %v2579 = vunpack.c.l.b16 %v2571
      %v2580 = vunpack.c.l.b16 %v2572
      %v2581 = vunpack.c.l.b16 %v2573
      %v2582 = vunpack.c.l.b16 %v2574
      %v2583 = vpack.c.b16 %v2580, %v2579
      %v2584 = vpack.c.b16 %v2582, %v2581
      %2587 = vmatprep.subr.bf16.mxu0 0
      %2588 = vmatpush1.bf16.msra.mxu0 %v2583
      %2589 = vmatprep.subr.bf16.mxu0 0
      %2590 = vmatpush1.bf16.msra.mxu0 %v2584
      %2591 = vmatprep.subr.bf16.mxu0 0
      %2592 = vmatpush1.bf16.msra.mxu0 0
      %2593 = vmatprep.subr.bf16.mxu0 0
      %2594 = vmatpush1.bf16.msra.mxu0 0
      %2595 = vmatprep.subr.bf16.mxu0 0
      %2596 = vmatpush1.bf16.msra.mxu0 0
      %2597 = vmatprep.subr.bf16.mxu0 0
      %2598 = vmatpush1.bf16.msra.mxu0 0
      %2599 = vmatprep.subr.bf16.mxu0 0
      %2600 = vmatpush1.bf16.msra.mxu0 0
      %2601 = vmatprep.subr.bf16.mxu0 0
      %2602 = vmatpush1.bf16.msra.mxu0 0
      %2603 = vmatprep.subr.bf16.mxu0 0
      %2604 = vmatpush1.bf16.msra.mxu0 0
      %2605 = vmatprep.subr.bf16.mxu0 0
      %2606 = vmatpush1.bf16.msra.mxu0 0
      %2607 = vmatprep.subr.bf16.mxu0 0
      %2608 = vmatpush1.bf16.msra.mxu0 0
      %2609 = vmatprep.subr.bf16.mxu0 0
      %2610 = vmatpush1.bf16.msra.mxu0 0
      %2611 = vmatprep.subr.bf16.mxu0 0
      %2612 = vmatpush1.bf16.msra.mxu0 0
      %2613 = vmatprep.subr.bf16.mxu0 0
      %2614 = vmatpush1.bf16.msra.mxu0 0
      %2615 = vmatprep.subr.bf16.mxu0 0
      %2616 = vmatpush1.bf16.msra.mxu0 0
      %2617 = vmatprep.subr.bf16.mxu0 0
      %2618 = vmatpush1.bf16.msra.mxu0 0
      %2619 = vmatprep.mubr.bf16.mxu0 0
      %2620 = vmatmul.mubr.bf16.gmra.mrb[0].mxu0 %v1205
      %v2621 = vpop.f32.mrb[0].mxu0
      %v2622 = vadd.f32 0.0, %v2621
      %v2623 = vpop.f32.mrb[0].mxu0
      %v2624 = vpop.f32.mrb[0].mxu0
      %v2625 = vadd.f32 0.0, %v2624
      %v2626 = vpop.f32.mrb[0].mxu0
      %2627 = vmatprep.mubr.bf16.mxu0 0
      %2628 = vmatmul.mubr.bf16.gmra.mrb[0].mxu0 %v1208
      %v2629 = vpop.f32.mrb[0].mxu0
      %v2630 = vadd.f32 0.0, %v2629
      %v2631 = vpop.f32.mrb[0].mxu0
      %v2632 = vpop.f32.mrb[0].mxu0
      %v2633 = vadd.f32 0.0, %v2632
      %v2634 = vpop.f32.mrb[0].mxu0
      %2635 = vmatprep.mubr.bf16.mxu0 0
      %2636 = vmatmul.mubr.bf16.gmra.mrb[0].mxu0 %v1211
      %v2637 = vpop.f32.mrb[0].mxu0
      %v2638 = vadd.f32 0.0, %v2637
      %v2639 = vpop.f32.mrb[0].mxu0
      %v2640 = vpop.f32.mrb[0].mxu0
      %v2641 = vadd.f32 0.0, %v2640
      %v2642 = vpop.f32.mrb[0].mxu0
      %2643 = vmatprep.mubr.bf16.mxu0 0
      %2644 = vmatmul.mubr.bf16.gmra.mrb[0].mxu0 %v1214
      %v2645 = vpop.f32.mrb[0].mxu0
      %v2646 = vadd.f32 0.0, %v2645
      %v2647 = vpop.f32.mrb[0].mxu0
      %v2648 = vpop.f32.mrb[0].mxu0
      %v2649 = vadd.f32 0.0, %v2648
      %v2650 = vpop.f32.mrb[0].mxu0
      %2651 = vmatprep.mubr.bf16.mxu0 0
      %2652 = vmatmul.mubr.bf16.gmra.mrb[0].mxu0 %v1217
      %v2653 = vpop.f32.mrb[0].mxu0
      %v2654 = vadd.f32 0.0, %v2653
      %v2655 = vpop.f32.mrb[0].mxu0
      %v2656 = vpop.f32.mrb[0].mxu0
      %v2657 = vadd.f32 0.0, %v2656
      %v2658 = vpop.f32.mrb[0].mxu0
      %2659 = vmatprep.mubr.bf16.mxu0 0
      %2660 = vmatmul.mubr.bf16.gmra.mrb[0].mxu0 %v1220
      %v2661 = vpop.f32.mrb[0].mxu0
      %v2662 = vadd.f32 0.0, %v2661
      %v2663 = vpop.f32.mrb[0].mxu0
      %v2664 = vpop.f32.mrb[0].mxu0
      %v2665 = vadd.f32 0.0, %v2664
      %v2666 = vpop.f32.mrb[0].mxu0
      %2667 = vmatprep.mubr.bf16.mxu0 0
      %2668 = vmatmul.mubr.bf16.gmra.mrb[0].mxu0 %v1223
      %v2669 = vpop.f32.mrb[0].mxu0
      %v2670 = vadd.f32 0.0, %v2669
      %v2671 = vpop.f32.mrb[0].mxu0
      %v2672 = vpop.f32.mrb[0].mxu0
      %v2673 = vadd.f32 0.0, %v2672
      %v2674 = vpop.f32.mrb[0].mxu0
      %2675 = vmatprep.mubr.bf16.mxu0 0
      %2676 = vmatmul.mubr.bf16.gmra.mrb[0].mxu0 %v1226
      %v2677 = vpop.f32.mrb[0].mxu0
      %v2678 = vadd.f32 0.0, %v2677
      %v2679 = vpop.f32.mrb[0].mxu0
      %v2680 = vpop.f32.mrb[0].mxu0
      %v2681 = vadd.f32 0.0, %v2680
      %v2682 = vpop.f32.mrb[0].mxu0
      %2683 = vmatprep.mubr.bf16.mxu0 0
      %2684 = vmatmul.mubr.bf16.gmra.mrb[0].mxu0 %v1229
      %v2685 = vpop.f32.mrb[0].mxu0
      %v2686 = vadd.f32 0.0, %v2685
      %v2687 = vpop.f32.mrb[0].mxu0
      %v2688 = vpop.f32.mrb[0].mxu0
      %v2689 = vadd.f32 0.0, %v2688
      %v2690 = vpop.f32.mrb[0].mxu0
      %2691 = vmatprep.mubr.bf16.mxu0 0
      %2692 = vmatmul.mubr.bf16.gmra.mrb[0].mxu0 %v1232
      %v2693 = vpop.f32.mrb[0].mxu0
      %v2694 = vadd.f32 0.0, %v2693
      %v2695 = vpop.f32.mrb[0].mxu0
      %v2696 = vpop.f32.mrb[0].mxu0
      %v2697 = vadd.f32 0.0, %v2696
      %v2698 = vpop.f32.mrb[0].mxu0
      %2699 = vmatprep.mubr.bf16.mxu0 0
      %2700 = vmatmul.mubr.bf16.gmra.mrb[0].mxu0 %v1235
      %v2701 = vpop.f32.mrb[0].mxu0
      %v2702 = vadd.f32 0.0, %v2701
      %v2703 = vpop.f32.mrb[0].mxu0
      %v2704 = vpop.f32.mrb[0].mxu0
      %v2705 = vadd.f32 0.0, %v2704
      %v2706 = vpop.f32.mrb[0].mxu0
      %2707 = vmatprep.mubr.bf16.mxu0 0
      %2708 = vmatmul.mubr.bf16.gmra.mrb[0].mxu0 %v1238
      %v2709 = vpop.f32.mrb[0].mxu0
      %v2710 = vadd.f32 0.0, %v2709
      %v2711 = vpop.f32.mrb[0].mxu0
      %v2712 = vpop.f32.mrb[0].mxu0
      %v2713 = vadd.f32 0.0, %v2712
      %v2714 = vpop.f32.mrb[0].mxu0
      %2715 = vmatprep.mubr.bf16.mxu0 0
      %2716 = vmatmul.mubr.bf16.gmra.mrb[0].mxu0 %v1241
      %v2717 = vpop.f32.mrb[0].mxu0
      %v2718 = vadd.f32 0.0, %v2717
      %v2719 = vpop.f32.mrb[0].mxu0
      %v2720 = vpop.f32.mrb[0].mxu0
      %v2721 = vadd.f32 0.0, %v2720
      %v2722 = vpop.f32.mrb[0].mxu0
      %2723 = vmatprep.mubr.bf16.mxu0 0
      %2724 = vmatmul.mubr.bf16.gmra.mrb[0].mxu0 %v2205
      %v2725 = vpop.f32.mrb[0].mxu0
      %v2726 = vadd.f32 0.0, %v2725
      %v2727 = vpop.f32.mrb[0].mxu0
      %v2728 = vpop.f32.mrb[0].mxu0
      %v2729 = vadd.f32 0.0, %v2728
      %v2730 = vpop.f32.mrb[0].mxu0
      %2731 = vdwg.mxu0
      %v2732 = vadd.f32 %v2076, %v2622
      %v2733 = vadd.f32 %v2079, %v2625
      %v2734 = vadd.f32 %v2084, %v2630
      %v2735 = vadd.f32 %v2087, %v2633
      %v2736 = vadd.f32 %v2092, %v2638
      %v2737 = vadd.f32 %v2095, %v2641
      %v2738 = vadd.f32 %v2100, %v2646
      %v2739 = vadd.f32 %v2103, %v2649
      %v2740 = vadd.f32 %v2108, %v2654
      %v2741 = vadd.f32 %v2111, %v2657
      %v2742 = vadd.f32 %v2116, %v2662
      %v2743 = vadd.f32 %v2119, %v2665
      %v2744 = vadd.f32 %v2124, %v2670
      %v2745 = vadd.f32 %v2127, %v2673
      %v2746 = vadd.f32 %v2132, %v2678
      %v2747 = vadd.f32 %v2135, %v2681
      %v2748 = vadd.f32 %v2140, %v2686
      %v2749 = vadd.f32 %v2143, %v2689
      %v2750 = vadd.f32 %v2148, %v2694
      %v2751 = vadd.f32 %v2151, %v2697
      %v2752 = vadd.f32 %v2156, %v2702
      %v2753 = vadd.f32 %v2159, %v2705
      %v2754 = vadd.f32 %v2164, %v2710
      %v2755 = vadd.f32 %v2167, %v2713
      %v2756 = vadd.f32 %v2172, %v2718
      %v2757 = vadd.f32 %v2175, %v2721
      %v2758 = vadd.f32 %v2180, %v2726
      %v2759 = vadd.f32 %v2183, %v2729
      %vm2788 = vcmask 1046528
      %v2789 = vrot.slane %v2542, 1
      %v2790 = vrot.slane %v2543, 1
      %v2791 = vsel %vm2788, %v2789, %v2790
      %v2792 = vrot.slane %v2544, 1
      %v2793 = vrot.slane %v2545, 1
      %v2794 = vsel %vm2788, %v2792, %v2793
      %v2795 = vrot.slane %v2546, 1
      %v2796 = vrot.slane %v2547, 1
      %v2797 = vsel %vm2788, %v2795, %v2796
      %v2798 = vrot.slane %v2548, 1
      %v2799 = vrot.slane %v2549, 1
      %v2800 = vsel %vm2788, %v2798, %v2799
      %v2801 = vrot.slane %v2550, 1
      %v2802 = vrot.slane %v2551, 1
      %v2803 = vsel %vm2788, %v2801, %v2802
      %v2804 = vrot.slane %v2552, 1
      %v2805 = vrot.slane %v2553, 1
      %v2806 = vsel %vm2788, %v2804, %v2805
      %v2807 = vrot.slane %v2554, 1
      %v2808 = vrot.slane %v2555, 1
      %v2809 = vsel %vm2788, %v2807, %v2808
      %v2810 = vrot.slane %v2556, 1
      %v2811 = vrot.slane %v2557, 1
      %v2812 = vsel %vm2788, %v2810, %v2811
      %v2813 = vrot.slane %v2558, 1
      %v2814 = vrot.slane %v2559, 1
      %v2815 = vsel %vm2788, %v2813, %v2814
      %v2816 = vrot.slane %v2560, 1
      %v2817 = vrot.slane %v2561, 1
      %v2818 = vsel %vm2788, %v2816, %v2817
      %v2819 = vrot.slane %v2562, 1
      %v2820 = vrot.slane %v2563, 1
      %v2821 = vsel %vm2788, %v2819, %v2820
      %v2822 = vrot.slane %v2564, 1
      %v2823 = vrot.slane %v2565, 1
      %v2824 = vsel %vm2788, %v2822, %v2823
      %v2825 = vrot.slane %v2566, 1
      %v2826 = vrot.slane %v2567, 1
      %v2827 = vsel %vm2788, %v2825, %v2826
      %v2828 = vrot.slane %v2568, 1
      %v2829 = vrot.slane %v2569, 1
      %v2830 = vsel %vm2788, %v2828, %v2829
      %v2859 = vadd.f32 %v2352, %v2791
      %v2860 = vadd.f32 %v2353, %v2790
      %v2861 = vadd.f32 %v2354, %v2794
      %v2862 = vadd.f32 %v2355, %v2793
      %v2863 = vadd.f32 %v2356, %v2797
      %v2864 = vadd.f32 %v2357, %v2796
      %v2865 = vadd.f32 %v2358, %v2800
      %v2866 = vadd.f32 %v2359, %v2799
      %v2867 = vadd.f32 %v2360, %v2803
      %v2868 = vadd.f32 %v2361, %v2802
      %v2869 = vadd.f32 %v2362, %v2806
      %v2870 = vadd.f32 %v2363, %v2805
      %v2871 = vadd.f32 %v2364, %v2809
      %v2872 = vadd.f32 %v2365, %v2808
      %v2873 = vadd.f32 %v2366, %v2812
      %v2874 = vadd.f32 %v2367, %v2811
      %v2875 = vadd.f32 %v2368, %v2815
      %v2876 = vadd.f32 %v2369, %v2814
      %v2877 = vadd.f32 %v2370, %v2818
      %v2878 = vadd.f32 %v2371, %v2817
      %v2879 = vadd.f32 %v2372, %v2821
      %v2880 = vadd.f32 %v2373, %v2820
      %v2881 = vadd.f32 %v2374, %v2824
      %v2882 = vadd.f32 %v2375, %v2823
      %v2883 = vadd.f32 %v2376, %v2827
      %v2884 = vadd.f32 %v2377, %v2826
      %v2885 = vadd.f32 %v2378, %v2830
      %v2886 = vadd.f32 %v2379, %v2829
      %vm2915 = vcmask 1045504
      %v2916 = vrot.slane %v2732, 2
      %v2917 = vrot.slane %v2733, 2
      %v2918 = vsel %vm2915, %v2916, %v2917
      %v2919 = vrot.slane %v2734, 2
      %v2920 = vrot.slane %v2735, 2
      %v2921 = vsel %vm2915, %v2919, %v2920
      %v2922 = vrot.slane %v2736, 2
      %v2923 = vrot.slane %v2737, 2
      %v2924 = vsel %vm2915, %v2922, %v2923
      %v2925 = vrot.slane %v2738, 2
      %v2926 = vrot.slane %v2739, 2
      %v2927 = vsel %vm2915, %v2925, %v2926
      %v2928 = vrot.slane %v2740, 2
      %v2929 = vrot.slane %v2741, 2
      %v2930 = vsel %vm2915, %v2928, %v2929
      %v2931 = vrot.slane %v2742, 2
      %v2932 = vrot.slane %v2743, 2
      %v2933 = vsel %vm2915, %v2931, %v2932
      %v2934 = vrot.slane %v2744, 2
      %v2935 = vrot.slane %v2745, 2
      %v2936 = vsel %vm2915, %v2934, %v2935
      %v2937 = vrot.slane %v2746, 2
      %v2938 = vrot.slane %v2747, 2
      %v2939 = vsel %vm2915, %v2937, %v2938
      %v2940 = vrot.slane %v2748, 2
      %v2941 = vrot.slane %v2749, 2
      %v2942 = vsel %vm2915, %v2940, %v2941
      %v2943 = vrot.slane %v2750, 2
      %v2944 = vrot.slane %v2751, 2
      %v2945 = vsel %vm2915, %v2943, %v2944
      %v2946 = vrot.slane %v2752, 2
      %v2947 = vrot.slane %v2753, 2
      %v2948 = vsel %vm2915, %v2946, %v2947
      %v2949 = vrot.slane %v2754, 2
      %v2950 = vrot.slane %v2755, 2
      %v2951 = vsel %vm2915, %v2949, %v2950
      %v2952 = vrot.slane %v2756, 2
      %v2953 = vrot.slane %v2757, 2
      %v2954 = vsel %vm2915, %v2952, %v2953
      %v2955 = vrot.slane %v2758, 2
      %v2956 = vrot.slane %v2759, 2
      %v2957 = vsel %vm2915, %v2955, %v2956
      %v2986 = vadd.f32 %v2859, %v2918
      %v2987 = vadd.f32 %v2860, %v2917
      %v2988 = vadd.f32 %v2861, %v2921
      %v2989 = vadd.f32 %v2862, %v2920
      %v2990 = vadd.f32 %v2863, %v2924
      %v2991 = vadd.f32 %v2864, %v2923
      %v2992 = vadd.f32 %v2865, %v2927
      %v2993 = vadd.f32 %v2866, %v2926
      %v2994 = vadd.f32 %v2867, %v2930
      %v2995 = vadd.f32 %v2868, %v2929
      %v2996 = vadd.f32 %v2869, %v2933
      %v2997 = vadd.f32 %v2870, %v2932
      %v2998 = vadd.f32 %v2871, %v2936
      %v2999 = vadd.f32 %v2872, %v2935
      %v3000 = vadd.f32 %v2873, %v2939
      %v3001 = vadd.f32 %v2874, %v2938
      %v3002 = vadd.f32 %v2875, %v2942
      %v3003 = vadd.f32 %v2876, %v2941
      %v3004 = vadd.f32 %v2877, %v2945
      %v3005 = vadd.f32 %v2878, %v2944
      %v3006 = vadd.f32 %v2879, %v2948
      %v3007 = vadd.f32 %v2880, %v2947
      %v3008 = vadd.f32 %v2881, %v2951
      %v3009 = vadd.f32 %v2882, %v2950
      %v3010 = vadd.f32 %v2883, %v2954
      %v3011 = vadd.f32 %v2884, %v2953
      %v3012 = vadd.f32 %v2885, %v2957
      %v3013 = vadd.f32 %v2886, %v2956
      %v3015 = vlaneseq
      %v3016 = vshrl.u32 %v3015, 7
      %v3017 = vsub.s32 0, %v3016
      %v3018 = vrot.slane %v1153, %v3017
      %v3020 = vmul.f32 %v2986, %v3018
      %v3021 = vmul.f32 %v2987, %v3018
      %v3022 = vmul.f32 %v2988, %v3018
      %v3023 = vmul.f32 %v2989, %v3018
      %v3024 = vmul.f32 %v2990, %v3018
      %v3025 = vmul.f32 %v2991, %v3018
      %v3026 = vmul.f32 %v2992, %v3018
      %v3027 = vmul.f32 %v2993, %v3018
      %v3028 = vmul.f32 %v2994, %v3018
      %v3029 = vmul.f32 %v2995, %v3018
      %v3030 = vmul.f32 %v2996, %v3018
      %v3031 = vmul.f32 %v2997, %v3018
      %v3032 = vmul.f32 %v2998, %v3018
      %v3033 = vmul.f32 %v2999, %v3018
      %v3034 = vmul.f32 %v3000, %v3018
      %v3035 = vmul.f32 %v3001, %v3018
      %v3036 = vmul.f32 %v3002, %v3018
      %v3037 = vmul.f32 %v3003, %v3018
      %v3038 = vmul.f32 %v3004, %v3018
      %v3039 = vmul.f32 %v3005, %v3018
      %v3040 = vmul.f32 %v3006, %v3018
      %v3041 = vmul.f32 %v3007, %v3018
      %v3042 = vmul.f32 %v3008, %v3018
      %v3043 = vmul.f32 %v3009, %v3018
      %v3044 = vmul.f32 %v3010, %v3018
      %v3045 = vmul.f32 %v3011, %v3018
      %v3046 = vmul.f32 %v3012, %v3018
      %v3047 = vmul.f32 %v3013, %v3018
      %v3049 = vlaneseq
      %v3050 = vshrl.u32 %v3049, 7
      %v3051 = vsub.s32 0, %v3050
      %v3052 = vrot.slane %v1154, %v3051
      %v3054 = vadd.f32 %v3020, %v3052
      %v3055 = vadd.f32 %v3021, %v3052
      %v3056 = vadd.f32 %v3022, %v3052
      %v3057 = vadd.f32 %v3023, %v3052
      %v3058 = vadd.f32 %v3024, %v3052
      %v3059 = vadd.f32 %v3025, %v3052
      %v3060 = vadd.f32 %v3026, %v3052
      %v3061 = vadd.f32 %v3027, %v3052
      %v3062 = vadd.f32 %v3028, %v3052
      %v3063 = vadd.f32 %v3029, %v3052
      %v3064 = vadd.f32 %v3030, %v3052
      %v3065 = vadd.f32 %v3031, %v3052
      %v3066 = vadd.f32 %v3032, %v3052
      %v3067 = vadd.f32 %v3033, %v3052
      %v3068 = vadd.f32 %v3034, %v3052
      %v3069 = vadd.f32 %v3035, %v3052
      %v3070 = vadd.f32 %v3036, %v3052
      %v3071 = vadd.f32 %v3037, %v3052
      %v3072 = vadd.f32 %v3038, %v3052
      %v3073 = vadd.f32 %v3039, %v3052
      %v3074 = vadd.f32 %v3040, %v3052
      %v3075 = vadd.f32 %v3041, %v3052
      %v3076 = vadd.f32 %v3042, %v3052
      %v3077 = vadd.f32 %v3043, %v3052
      %v3078 = vadd.f32 %v3044, %v3052
      %v3079 = vadd.f32 %v3045, %v3052
      %v3080 = vadd.f32 %v3046, %v3052
      %v3081 = vadd.f32 %v3047, %v3052
      %v3082 = vlaneseq
      %v3083 = vshrl.u32 %v3082, 7
      %v3084 = vsub.s32 0, %v3083
      %v3085 = vrot.slane %v1115, %v3084
      %v3086 = vmul.f32 %v3054, %v3085
      %v3087 = vmul.f32 %v3055, %v3085
      %v3088 = vmul.f32 %v3056, %v3085
      %v3089 = vmul.f32 %v3057, %v3085
      %v3090 = vmul.f32 %v3058, %v3085
      %v3091 = vmul.f32 %v3059, %v3085
      %v3092 = vmul.f32 %v3060, %v3085
      %v3093 = vmul.f32 %v3061, %v3085
      %v3094 = vmul.f32 %v3062, %v3085
      %v3095 = vmul.f32 %v3063, %v3085
      %v3096 = vmul.f32 %v3064, %v3085
      %v3097 = vmul.f32 %v3065, %v3085
      %v3098 = vmul.f32 %v3066, %v3085
      %v3099 = vmul.f32 %v3067, %v3085
      %v3100 = vmul.f32 %v3068, %v3085
      %v3101 = vmul.f32 %v3069, %v3085
      %v3102 = vmul.f32 %v3070, %v3085
      %v3103 = vmul.f32 %v3071, %v3085
      %v3104 = vadd.f32 %v3086, 0.0
      %v3105 = vadd.f32 %v3087, 0.0
      %v3106 = vadd.f32 %v3088, 0.0
      %v3107 = vadd.f32 %v3089, 0.0
      %v3108 = vadd.f32 %v3090, 0.0
      %v3109 = vadd.f32 %v3091, 0.0
      %v3110 = vadd.f32 %v3092, 0.0
      %v3111 = vadd.f32 %v3093, 0.0
      %v3112 = vadd.f32 %v3094, 0.0
      %v3113 = vadd.f32 %v3095, 0.0
      %v3114 = vadd.f32 %v3096, 0.0
      %v3115 = vadd.f32 %v3097, 0.0
      %v3116 = vadd.f32 %v3098, 0.0
      %v3117 = vadd.f32 %v3099, 0.0
      %v3118 = vadd.f32 %v3100, 0.0
      %v3119 = vadd.f32 %v3101, 0.0
      %v3120 = vadd.f32 %v3102, 0.0
      %v3121 = vadd.f32 %v3103, 0.0
      %v3122 = vlaneseq
      %v3123 = vshrl.u32 %v3122, 7
      %v3124 = vsub.s32 0, %v3123
      %v3125 = vrot.slane %v1116, %v3124
      %v3126 = vmul.f32 %v3056, %v3125
      %v3127 = vmul.f32 %v3057, %v3125
      %v3128 = vmul.f32 %v3058, %v3125
      %v3129 = vmul.f32 %v3059, %v3125
      %v3130 = vmul.f32 %v3060, %v3125
      %v3131 = vmul.f32 %v3061, %v3125
      %v3132 = vmul.f32 %v3062, %v3125
      %v3133 = vmul.f32 %v3063, %v3125
      %v3134 = vmul.f32 %v3064, %v3125
      %v3135 = vmul.f32 %v3065, %v3125
      %v3136 = vmul.f32 %v3066, %v3125
      %v3137 = vmul.f32 %v3067, %v3125
      %v3138 = vmul.f32 %v3068, %v3125
      %v3139 = vmul.f32 %v3069, %v3125
      %v3140 = vmul.f32 %v3070, %v3125
      %v3141 = vmul.f32 %v3071, %v3125
      %v3142 = vmul.f32 %v3072, %v3125
      %v3143 = vmul.f32 %v3073, %v3125
      %v3144 = vadd.f32 %v3104, %v3126
      %v3145 = vadd.f32 %v3105, %v3127
      %v3146 = vadd.f32 %v3106, %v3128
      %v3147 = vadd.f32 %v3107, %v3129
      %v3148 = vadd.f32 %v3108, %v3130
      %v3149 = vadd.f32 %v3109, %v3131
      %v3150 = vadd.f32 %v3110, %v3132
      %v3151 = vadd.f32 %v3111, %v3133
      %v3152 = vadd.f32 %v3112, %v3134
      %v3153 = vadd.f32 %v3113, %v3135
      %v3154 = vadd.f32 %v3114, %v3136
      %v3155 = vadd.f32 %v3115, %v3137
      %v3156 = vadd.f32 %v3116, %v3138
      %v3157 = vadd.f32 %v3117, %v3139
      %v3158 = vadd.f32 %v3118, %v3140
      %v3159 = vadd.f32 %v3119, %v3141
      %v3160 = vadd.f32 %v3120, %v3142
      %v3161 = vadd.f32 %v3121, %v3143
      %v3162 = vlaneseq
      %v3163 = vshrl.u32 %v3162, 7
      %v3164 = vsub.s32 0, %v3163
      %v3165 = vrot.slane %v1117, %v3164
      %v3166 = vmul.f32 %v3058, %v3165
      %v3167 = vmul.f32 %v3059, %v3165
      %v3168 = vmul.f32 %v3060, %v3165
      %v3169 = vmul.f32 %v3061, %v3165
      %v3170 = vmul.f32 %v3062, %v3165
      %v3171 = vmul.f32 %v3063, %v3165
      %v3172 = vmul.f32 %v3064, %v3165
      %v3173 = vmul.f32 %v3065, %v3165
      %v3174 = vmul.f32 %v3066, %v3165
      %v3175 = vmul.f32 %v3067, %v3165
      %v3176 = vmul.f32 %v3068, %v3165
      %v3177 = vmul.f32 %v3069, %v3165
      %v3178 = vmul.f32 %v3070, %v3165
      %v3179 = vmul.f32 %v3071, %v3165
      %v3180 = vmul.f32 %v3072, %v3165
      %v3181 = vmul.f32 %v3073, %v3165
      %v3182 = vmul.f32 %v3074, %v3165
      %v3183 = vmul.f32 %v3075, %v3165
      %v3184 = vadd.f32 %v3144, %v3166
      %v3185 = vadd.f32 %v3145, %v3167
      %v3186 = vadd.f32 %v3146, %v3168
      %v3187 = vadd.f32 %v3147, %v3169
      %v3188 = vadd.f32 %v3148, %v3170
      %v3189 = vadd.f32 %v3149, %v3171
      %v3190 = vadd.f32 %v3150, %v3172
      %v3191 = vadd.f32 %v3151, %v3173
      %v3192 = vadd.f32 %v3152, %v3174
      %v3193 = vadd.f32 %v3153, %v3175
      %v3194 = vadd.f32 %v3154, %v3176
      %v3195 = vadd.f32 %v3155, %v3177
      %v3196 = vadd.f32 %v3156, %v3178
      %v3197 = vadd.f32 %v3157, %v3179
      %v3198 = vadd.f32 %v3158, %v3180
      %v3199 = vadd.f32 %v3159, %v3181
      %v3200 = vadd.f32 %v3160, %v3182
      %v3201 = vadd.f32 %v3161, %v3183
      %v3202 = vlaneseq
      %v3203 = vshrl.u32 %v3202, 7
      %v3204 = vsub.s32 0, %v3203
      %v3205 = vrot.slane %v1118, %v3204
      %v3206 = vmul.f32 %v3060, %v3205
      %v3207 = vmul.f32 %v3061, %v3205
      %v3208 = vmul.f32 %v3062, %v3205
      %v3209 = vmul.f32 %v3063, %v3205
      %v3210 = vmul.f32 %v3064, %v3205
      %v3211 = vmul.f32 %v3065, %v3205
      %v3212 = vmul.f32 %v3066, %v3205
      %v3213 = vmul.f32 %v3067, %v3205
      %v3214 = vmul.f32 %v3068, %v3205
      %v3215 = vmul.f32 %v3069, %v3205
      %v3216 = vmul.f32 %v3070, %v3205
      %v3217 = vmul.f32 %v3071, %v3205
      %v3218 = vmul.f32 %v3072, %v3205
      %v3219 = vmul.f32 %v3073, %v3205
      %v3220 = vmul.f32 %v3074, %v3205
      %v3221 = vmul.f32 %v3075, %v3205
      %v3222 = vmul.f32 %v3076, %v3205
      %v3223 = vmul.f32 %v3077, %v3205
      %v3224 = vadd.f32 %v3184, %v3206
      %v3225 = vadd.f32 %v3185, %v3207
      %v3226 = vadd.f32 %v3186, %v3208
      %v3227 = vadd.f32 %v3187, %v3209
      %v3228 = vadd.f32 %v3188, %v3210
      %v3229 = vadd.f32 %v3189, %v3211
      %v3230 = vadd.f32 %v3190, %v3212
      %v3231 = vadd.f32 %v3191, %v3213
      %v3232 = vadd.f32 %v3192, %v3214
      %v3233 = vadd.f32 %v3193, %v3215
      %v3234 = vadd.f32 %v3194, %v3216
      %v3235 = vadd.f32 %v3195, %v3217
      %v3236 = vadd.f32 %v3196, %v3218
      %v3237 = vadd.f32 %v3197, %v3219
      %v3238 = vadd.f32 %v3198, %v3220
      %v3239 = vadd.f32 %v3199, %v3221
      %v3240 = vadd.f32 %v3200, %v3222
      %v3241 = vadd.f32 %v3201, %v3223
      %v3242 = vlaneseq
      %v3243 = vshrl.u32 %v3242, 7
      %v3244 = vsub.s32 0, %v3243
      %v3245 = vrot.slane %v1119, %v3244
      %v3246 = vmul.f32 %v3062, %v3245
      %v3247 = vmul.f32 %v3063, %v3245
      %v3248 = vmul.f32 %v3064, %v3245
      %v3249 = vmul.f32 %v3065, %v3245
      %v3250 = vmul.f32 %v3066, %v3245
      %v3251 = vmul.f32 %v3067, %v3245
      %v3252 = vmul.f32 %v3068, %v3245
      %v3253 = vmul.f32 %v3069, %v3245
      %v3254 = vmul.f32 %v3070, %v3245
      %v3255 = vmul.f32 %v3071, %v3245
      %v3256 = vmul.f32 %v3072, %v3245
      %v3257 = vmul.f32 %v3073, %v3245
      %v3258 = vmul.f32 %v3074, %v3245
      %v3259 = vmul.f32 %v3075, %v3245
      %v3260 = vmul.f32 %v3076, %v3245
      %v3261 = vmul.f32 %v3077, %v3245
      %v3262 = vmul.f32 %v3078, %v3245
      %v3263 = vmul.f32 %v3079, %v3245
      %v3264 = vadd.f32 %v3224, %v3246
      %v3265 = vadd.f32 %v3225, %v3247
      %v3266 = vadd.f32 %v3226, %v3248
      %v3267 = vadd.f32 %v3227, %v3249
      %v3268 = vadd.f32 %v3228, %v3250
      %v3269 = vadd.f32 %v3229, %v3251
      %v3270 = vadd.f32 %v3230, %v3252
      %v3271 = vadd.f32 %v3231, %v3253
      %v3272 = vadd.f32 %v3232, %v3254
      %v3273 = vadd.f32 %v3233, %v3255
      %v3274 = vadd.f32 %v3234, %v3256
      %v3275 = vadd.f32 %v3235, %v3257
      %v3276 = vadd.f32 %v3236, %v3258
      %v3277 = vadd.f32 %v3237, %v3259
      %v3278 = vadd.f32 %v3238, %v3260
      %v3279 = vadd.f32 %v3239, %v3261
      %v3280 = vadd.f32 %v3240, %v3262
      %v3281 = vadd.f32 %v3241, %v3263
      %v3282 = vlaneseq
      %v3283 = vshrl.u32 %v3282, 7
      %v3284 = vsub.s32 0, %v3283
      %v3285 = vrot.slane %v1120, %v3284
      %v3286 = vmul.f32 %v3064, %v3285
      %v3287 = vmul.f32 %v3065, %v3285
      %v3288 = vmul.f32 %v3066, %v3285
      %v3289 = vmul.f32 %v3067, %v3285
      %v3290 = vmul.f32 %v3068, %v3285
      %v3291 = vmul.f32 %v3069, %v3285
      %v3292 = vmul.f32 %v3070, %v3285
      %v3293 = vmul.f32 %v3071, %v3285
      %v3294 = vmul.f32 %v3072, %v3285
      %v3295 = vmul.f32 %v3073, %v3285
      %v3296 = vmul.f32 %v3074, %v3285
      %v3297 = vmul.f32 %v3075, %v3285
      %v3298 = vmul.f32 %v3076, %v3285
      %v3299 = vmul.f32 %v3077, %v3285
      %v3300 = vmul.f32 %v3078, %v3285
      %v3301 = vmul.f32 %v3079, %v3285
      %v3302 = vmul.f32 %v3080, %v3285
      %v3303 = vmul.f32 %v3081, %v3285
      %v3304 = vadd.f32 %v3264, %v3286
      %v3305 = vadd.f32 %v3265, %v3287
      %v3306 = vadd.f32 %v3266, %v3288
      %v3307 = vadd.f32 %v3267, %v3289
      %v3308 = vadd.f32 %v3268, %v3290
      %v3309 = vadd.f32 %v3269, %v3291
      %v3310 = vadd.f32 %v3270, %v3292
      %v3311 = vadd.f32 %v3271, %v3293
      %v3312 = vadd.f32 %v3272, %v3294
      %v3313 = vadd.f32 %v3273, %v3295
      %v3314 = vadd.f32 %v3274, %v3296
      %v3315 = vadd.f32 %v3275, %v3297
      %v3316 = vadd.f32 %v3276, %v3298
      %v3317 = vadd.f32 %v3277, %v3299
      %v3318 = vadd.f32 %v3278, %v3300
      %v3319 = vadd.f32 %v3279, %v3301
      %v3320 = vadd.f32 %v3280, %v3302
      %v3321 = vadd.f32 %v3281, %v3303
      %v3322 = vlaneseq
      %v3323 = vshrl.u32 %v3322, 7
      %v3324 = vsub.s32 1, %v3323
      %v3325 = vrot.slane %v1115, %v3324
      %v3326 = vmul.f32 %v3054, %v3325
      %v3327 = vmul.f32 %v3055, %v3325
      %v3328 = vmul.f32 %v3056, %v3325
      %v3329 = vmul.f32 %v3057, %v3325
      %v3330 = vmul.f32 %v3058, %v3325
      %v3331 = vmul.f32 %v3059, %v3325
      %v3332 = vmul.f32 %v3060, %v3325
      %v3333 = vmul.f32 %v3061, %v3325
      %v3334 = vmul.f32 %v3062, %v3325
      %v3335 = vmul.f32 %v3063, %v3325
      %v3336 = vmul.f32 %v3064, %v3325
      %v3337 = vmul.f32 %v3065, %v3325
      %v3338 = vmul.f32 %v3066, %v3325
      %v3339 = vmul.f32 %v3067, %v3325
      %v3340 = vmul.f32 %v3068, %v3325
      %v3341 = vmul.f32 %v3069, %v3325
      %v3342 = vmul.f32 %v3070, %v3325
      %v3343 = vmul.f32 %v3071, %v3325
      %v3362 = vrot.slane %v3326, 1
      %v3363 = vrot.slane %v3327, 1
      %v3364 = vsel %vm2788, %v3362, %v3363
      %v3365 = vrot.slane %v3328, 1
      %v3366 = vrot.slane %v3329, 1
      %v3367 = vsel %vm2788, %v3365, %v3366
      %v3368 = vrot.slane %v3330, 1
      %v3369 = vrot.slane %v3331, 1
      %v3370 = vsel %vm2788, %v3368, %v3369
      %v3371 = vrot.slane %v3332, 1
      %v3372 = vrot.slane %v3333, 1
      %v3373 = vsel %vm2788, %v3371, %v3372
      %v3374 = vrot.slane %v3334, 1
      %v3375 = vrot.slane %v3335, 1
      %v3376 = vsel %vm2788, %v3374, %v3375
      %v3377 = vrot.slane %v3336, 1
      %v3378 = vrot.slane %v3337, 1
      %v3379 = vsel %vm2788, %v3377, %v3378
      %v3380 = vrot.slane %v3338, 1
      %v3381 = vrot.slane %v3339, 1
      %v3382 = vsel %vm2788, %v3380, %v3381
      %v3383 = vrot.slane %v3340, 1
      %v3384 = vrot.slane %v3341, 1
      %v3385 = vsel %vm2788, %v3383, %v3384
      %v3386 = vrot.slane %v3342, 1
      %v3387 = vrot.slane %v3343, 1
      %v3388 = vsel %vm2788, %v3386, %v3387
      %v3407 = vadd.f32 %v3304, %v3364
      %v3408 = vadd.f32 %v3305, %v3363
      %v3409 = vadd.f32 %v3306, %v3367
      %v3410 = vadd.f32 %v3307, %v3366
      %v3411 = vadd.f32 %v3308, %v3370
      %v3412 = vadd.f32 %v3309, %v3369
      %v3413 = vadd.f32 %v3310, %v3373
      %v3414 = vadd.f32 %v3311, %v3372
      %v3415 = vadd.f32 %v3312, %v3376
      %v3416 = vadd.f32 %v3313, %v3375
      %v3417 = vadd.f32 %v3314, %v3379
      %v3418 = vadd.f32 %v3315, %v3378
      %v3419 = vadd.f32 %v3316, %v3382
      %v3420 = vadd.f32 %v3317, %v3381
      %v3421 = vadd.f32 %v3318, %v3385
      %v3422 = vadd.f32 %v3319, %v3384
      %v3423 = vadd.f32 %v3320, %v3388
      %v3424 = vadd.f32 %v3321, %v3387
      %v3425 = vlaneseq
      %v3426 = vshrl.u32 %v3425, 7
      %v3427 = vsub.s32 1, %v3426
      %v3428 = vrot.slane %v1116, %v3427
      %v3429 = vmul.f32 %v3056, %v3428
      %v3430 = vmul.f32 %v3057, %v3428
      %v3431 = vmul.f32 %v3058, %v3428
      %v3432 = vmul.f32 %v3059, %v3428
      %v3433 = vmul.f32 %v3060, %v3428
      %v3434 = vmul.f32 %v3061, %v3428
      %v3435 = vmul.f32 %v3062, %v3428
      %v3436 = vmul.f32 %v3063, %v3428
      %v3437 = vmul.f32 %v3064, %v3428
      %v3438 = vmul.f32 %v3065, %v3428
      %v3439 = vmul.f32 %v3066, %v3428
      %v3440 = vmul.f32 %v3067, %v3428
      %v3441 = vmul.f32 %v3068, %v3428
      %v3442 = vmul.f32 %v3069, %v3428
      %v3443 = vmul.f32 %v3070, %v3428
      %v3444 = vmul.f32 %v3071, %v3428
      %v3445 = vmul.f32 %v3072, %v3428
      %v3446 = vmul.f32 %v3073, %v3428
      %v3465 = vrot.slane %v3429, 1
      %v3466 = vrot.slane %v3430, 1
      %v3467 = vsel %vm2788, %v3465, %v3466
      %v3468 = vrot.slane %v3431, 1
      %v3469 = vrot.slane %v3432, 1
      %v3470 = vsel %vm2788, %v3468, %v3469
      %v3471 = vrot.slane %v3433, 1
      %v3472 = vrot.slane %v3434, 1
      %v3473 = vsel %vm2788, %v3471, %v3472
      %v3474 = vrot.slane %v3435, 1
      %v3475 = vrot.slane %v3436, 1
      %v3476 = vsel %vm2788, %v3474, %v3475
      %v3477 = vrot.slane %v3437, 1
      %v3478 = vrot.slane %v3438, 1
      %v3479 = vsel %vm2788, %v3477, %v3478
      %v3480 = vrot.slane %v3439, 1
      %v3481 = vrot.slane %v3440, 1
      %v3482 = vsel %vm2788, %v3480, %v3481
      %v3483 = vrot.slane %v3441, 1
      %v3484 = vrot.slane %v3442, 1
      %v3485 = vsel %vm2788, %v3483, %v3484
      %v3486 = vrot.slane %v3443, 1
      %v3487 = vrot.slane %v3444, 1
      %v3488 = vsel %vm2788, %v3486, %v3487
      %v3489 = vrot.slane %v3445, 1
      %v3490 = vrot.slane %v3446, 1
      %v3491 = vsel %vm2788, %v3489, %v3490
      %v3510 = vadd.f32 %v3407, %v3467
      %v3511 = vadd.f32 %v3408, %v3466
      %v3512 = vadd.f32 %v3409, %v3470
      %v3513 = vadd.f32 %v3410, %v3469
      %v3514 = vadd.f32 %v3411, %v3473
      %v3515 = vadd.f32 %v3412, %v3472
      %v3516 = vadd.f32 %v3413, %v3476
      %v3517 = vadd.f32 %v3414, %v3475
      %v3518 = vadd.f32 %v3415, %v3479
      %v3519 = vadd.f32 %v3416, %v3478
      %v3520 = vadd.f32 %v3417, %v3482
      %v3521 = vadd.f32 %v3418, %v3481
      %v3522 = vadd.f32 %v3419, %v3485
      %v3523 = vadd.f32 %v3420, %v3484
      %v3524 = vadd.f32 %v3421, %v3488
      %v3525 = vadd.f32 %v3422, %v3487
      %v3526 = vadd.f32 %v3423, %v3491
      %v3527 = vadd.f32 %v3424, %v3490
      %v3528 = vlaneseq
      %v3529 = vshrl.u32 %v3528, 7
      %v3530 = vsub.s32 1, %v3529
      %v3531 = vrot.slane %v1117, %v3530
      %v3532 = vmul.f32 %v3058, %v3531
      %v3533 = vmul.f32 %v3059, %v3531
      %v3534 = vmul.f32 %v3060, %v3531
      %v3535 = vmul.f32 %v3061, %v3531
      %v3536 = vmul.f32 %v3062, %v3531
      %v3537 = vmul.f32 %v3063, %v3531
      %v3538 = vmul.f32 %v3064, %v3531
      %v3539 = vmul.f32 %v3065, %v3531
      %v3540 = vmul.f32 %v3066, %v3531
      %v3541 = vmul.f32 %v3067, %v3531
      %v3542 = vmul.f32 %v3068, %v3531
      %v3543 = vmul.f32 %v3069, %v3531
      %v3544 = vmul.f32 %v3070, %v3531
      %v3545 = vmul.f32 %v3071, %v3531
      %v3546 = vmul.f32 %v3072, %v3531
      %v3547 = vmul.f32 %v3073, %v3531
      %v3548 = vmul.f32 %v3074, %v3531
      %v3549 = vmul.f32 %v3075, %v3531
      %v3568 = vrot.slane %v3532, 1
      %v3569 = vrot.slane %v3533, 1
      %v3570 = vsel %vm2788, %v3568, %v3569
      %v3571 = vrot.slane %v3534, 1
      %v3572 = vrot.slane %v3535, 1
      %v3573 = vsel %vm2788, %v3571, %v3572
      %v3574 = vrot.slane %v3536, 1
      %v3575 = vrot.slane %v3537, 1
      %v3576 = vsel %vm2788, %v3574, %v3575
      %v3577 = vrot.slane %v3538, 1
      %v3578 = vrot.slane %v3539, 1
      %v3579 = vsel %vm2788, %v3577, %v3578
      %v3580 = vrot.slane %v3540, 1
      %v3581 = vrot.slane %v3541, 1
      %v3582 = vsel %vm2788, %v3580, %v3581
      %v3583 = vrot.slane %v3542, 1
      %v3584 = vrot.slane %v3543, 1
      %v3585 = vsel %vm2788, %v3583, %v3584
      %v3586 = vrot.slane %v3544, 1
      %v3587 = vrot.slane %v3545, 1
      %v3588 = vsel %vm2788, %v3586, %v3587
      %v3589 = vrot.slane %v3546, 1
      %v3590 = vrot.slane %v3547, 1
      %v3591 = vsel %vm2788, %v3589, %v3590
      %v3592 = vrot.slane %v3548, 1
      %v3593 = vrot.slane %v3549, 1
      %v3594 = vsel %vm2788, %v3592, %v3593
      %v3613 = vadd.f32 %v3510, %v3570
      %v3614 = vadd.f32 %v3511, %v3569
      %v3615 = vadd.f32 %v3512, %v3573
      %v3616 = vadd.f32 %v3513, %v3572
      %v3617 = vadd.f32 %v3514, %v3576
      %v3618 = vadd.f32 %v3515, %v3575
      %v3619 = vadd.f32 %v3516, %v3579
      %v3620 = vadd.f32 %v3517, %v3578
      %v3621 = vadd.f32 %v3518, %v3582
      %v3622 = vadd.f32 %v3519, %v3581
      %v3623 = vadd.f32 %v3520, %v3585
      %v3624 = vadd.f32 %v3521, %v3584
      %v3625 = vadd.f32 %v3522, %v3588
      %v3626 = vadd.f32 %v3523, %v3587
      %v3627 = vadd.f32 %v3524, %v3591
      %v3628 = vadd.f32 %v3525, %v3590
      %v3629 = vadd.f32 %v3526, %v3594
      %v3630 = vadd.f32 %v3527, %v3593
      %v3631 = vlaneseq
      %v3632 = vshrl.u32 %v3631, 7
      %v3633 = vsub.s32 1, %v3632
      %v3634 = vrot.slane %v1118, %v3633
      %v3635 = vmul.f32 %v3060, %v3634
      %v3636 = vmul.f32 %v3061, %v3634
      %v3637 = vmul.f32 %v3062, %v3634
      %v3638 = vmul.f32 %v3063, %v3634
      %v3639 = vmul.f32 %v3064, %v3634
      %v3640 = vmul.f32 %v3065, %v3634
      %v3641 = vmul.f32 %v3066, %v3634
      %v3642 = vmul.f32 %v3067, %v3634
      %v3643 = vmul.f32 %v3068, %v3634
      %v3644 = vmul.f32 %v3069, %v3634
      %v3645 = vmul.f32 %v3070, %v3634
      %v3646 = vmul.f32 %v3071, %v3634
      %v3647 = vmul.f32 %v3072, %v3634
      %v3648 = vmul.f32 %v3073, %v3634
      %v3649 = vmul.f32 %v3074, %v3634
      %v3650 = vmul.f32 %v3075, %v3634
      %v3651 = vmul.f32 %v3076, %v3634
      %v3652 = vmul.f32 %v3077, %v3634
      %v3671 = vrot.slane %v3635, 1
      %v3672 = vrot.slane %v3636, 1
      %v3673 = vsel %vm2788, %v3671, %v3672
      %v3674 = vrot.slane %v3637, 1
      %v3675 = vrot.slane %v3638, 1
      %v3676 = vsel %vm2788, %v3674, %v3675
      %v3677 = vrot.slane %v3639, 1
      %v3678 = vrot.slane %v3640, 1
      %v3679 = vsel %vm2788, %v3677, %v3678
      %v3680 = vrot.slane %v3641, 1
      %v3681 = vrot.slane %v3642, 1
      %v3682 = vsel %vm2788, %v3680, %v3681
      %v3683 = vrot.slane %v3643, 1
      %v3684 = vrot.slane %v3644, 1
      %v3685 = vsel %vm2788, %v3683, %v3684
      %v3686 = vrot.slane %v3645, 1
      %v3687 = vrot.slane %v3646, 1
      %v3688 = vsel %vm2788, %v3686, %v3687
      %v3689 = vrot.slane %v3647, 1
      %v3690 = vrot.slane %v3648, 1
      %v3691 = vsel %vm2788, %v3689, %v3690
      %v3692 = vrot.slane %v3649, 1
      %v3693 = vrot.slane %v3650, 1
      %v3694 = vsel %vm2788, %v3692, %v3693
      %v3695 = vrot.slane %v3651, 1
      %v3696 = vrot.slane %v3652, 1
      %v3697 = vsel %vm2788, %v3695, %v3696
      %v3716 = vadd.f32 %v3613, %v3673
      %v3717 = vadd.f32 %v3614, %v3672
      %v3718 = vadd.f32 %v3615, %v3676
      %v3719 = vadd.f32 %v3616, %v3675
      %v3720 = vadd.f32 %v3617, %v3679
      %v3721 = vadd.f32 %v3618, %v3678
      %v3722 = vadd.f32 %v3619, %v3682
      %v3723 = vadd.f32 %v3620, %v3681
      %v3724 = vadd.f32 %v3621, %v3685
      %v3725 = vadd.f32 %v3622, %v3684
      %v3726 = vadd.f32 %v3623, %v3688
      %v3727 = vadd.f32 %v3624, %v3687
      %v3728 = vadd.f32 %v3625, %v3691
      %v3729 = vadd.f32 %v3626, %v3690
      %v3730 = vadd.f32 %v3627, %v3694
      %v3731 = vadd.f32 %v3628, %v3693
      %v3732 = vadd.f32 %v3629, %v3697
      %v3733 = vadd.f32 %v3630, %v3696
      %v3734 = vlaneseq
      %v3735 = vshrl.u32 %v3734, 7
      %v3736 = vsub.s32 1, %v3735
      %v3737 = vrot.slane %v1119, %v3736
      %v3738 = vmul.f32 %v3062, %v3737
      %v3739 = vmul.f32 %v3063, %v3737
      %v3740 = vmul.f32 %v3064, %v3737
      %v3741 = vmul.f32 %v3065, %v3737
      %v3742 = vmul.f32 %v3066, %v3737
      %v3743 = vmul.f32 %v3067, %v3737
      %v3744 = vmul.f32 %v3068, %v3737
      %v3745 = vmul.f32 %v3069, %v3737
      %v3746 = vmul.f32 %v3070, %v3737
      %v3747 = vmul.f32 %v3071, %v3737
      %v3748 = vmul.f32 %v3072, %v3737
      %v3749 = vmul.f32 %v3073, %v3737
      %v3750 = vmul.f32 %v3074, %v3737
      %v3751 = vmul.f32 %v3075, %v3737
      %v3752 = vmul.f32 %v3076, %v3737
      %v3753 = vmul.f32 %v3077, %v3737
      %v3754 = vmul.f32 %v3078, %v3737
      %v3755 = vmul.f32 %v3079, %v3737
      %v3774 = vrot.slane %v3738, 1
      %v3775 = vrot.slane %v3739, 1
      %v3776 = vsel %vm2788, %v3774, %v3775
      %v3777 = vrot.slane %v3740, 1
      %v3778 = vrot.slane %v3741, 1
      %v3779 = vsel %vm2788, %v3777, %v3778
      %v3780 = vrot.slane %v3742, 1
      %v3781 = vrot.slane %v3743, 1
      %v3782 = vsel %vm2788, %v3780, %v3781
      %v3783 = vrot.slane %v3744, 1
      %v3784 = vrot.slane %v3745, 1
      %v3785 = vsel %vm2788, %v3783, %v3784
      %v3786 = vrot.slane %v3746, 1
      %v3787 = vrot.slane %v3747, 1
      %v3788 = vsel %vm2788, %v3786, %v3787
      %v3789 = vrot.slane %v3748, 1
      %v3790 = vrot.slane %v3749, 1
      %v3791 = vsel %vm2788, %v3789, %v3790
      %v3792 = vrot.slane %v3750, 1
      %v3793 = vrot.slane %v3751, 1
      %v3794 = vsel %vm2788, %v3792, %v3793
      %v3795 = vrot.slane %v3752, 1
      %v3796 = vrot.slane %v3753, 1
      %v3797 = vsel %vm2788, %v3795, %v3796
      %v3798 = vrot.slane %v3754, 1
      %v3799 = vrot.slane %v3755, 1
      %v3800 = vsel %vm2788, %v3798, %v3799
      %v3819 = vadd.f32 %v3716, %v3776
      %v3820 = vadd.f32 %v3717, %v3775
      %v3821 = vadd.f32 %v3718, %v3779
      %v3822 = vadd.f32 %v3719, %v3778
      %v3823 = vadd.f32 %v3720, %v3782
      %v3824 = vadd.f32 %v3721, %v3781
      %v3825 = vadd.f32 %v3722, %v3785
      %v3826 = vadd.f32 %v3723, %v3784
      %v3827 = vadd.f32 %v3724, %v3788
      %v3828 = vadd.f32 %v3725, %v3787
      %v3829 = vadd.f32 %v3726, %v3791
      %v3830 = vadd.f32 %v3727, %v3790
      %v3831 = vadd.f32 %v3728, %v3794
      %v3832 = vadd.f32 %v3729, %v3793
      %v3833 = vadd.f32 %v3730, %v3797
      %v3834 = vadd.f32 %v3731, %v3796
      %v3835 = vadd.f32 %v3732, %v3800
      %v3836 = vadd.f32 %v3733, %v3799
      %v3837 = vlaneseq
      %v3838 = vshrl.u32 %v3837, 7
      %v3839 = vsub.s32 1, %v3838
      %v3840 = vrot.slane %v1120, %v3839
      %v3841 = vmul.f32 %v3064, %v3840
      %v3842 = vmul.f32 %v3065, %v3840
      %v3843 = vmul.f32 %v3066, %v3840
      %v3844 = vmul.f32 %v3067, %v3840
      %v3845 = vmul.f32 %v3068, %v3840
      %v3846 = vmul.f32 %v3069, %v3840
      %v3847 = vmul.f32 %v3070, %v3840
      %v3848 = vmul.f32 %v3071, %v3840
      %v3849 = vmul.f32 %v3072, %v3840
      %v3850 = vmul.f32 %v3073, %v3840
      %v3851 = vmul.f32 %v3074, %v3840
      %v3852 = vmul.f32 %v3075, %v3840
      %v3853 = vmul.f32 %v3076, %v3840
      %v3854 = vmul.f32 %v3077, %v3840
      %v3855 = vmul.f32 %v3078, %v3840
      %v3856 = vmul.f32 %v3079, %v3840
      %v3857 = vmul.f32 %v3080, %v3840
      %v3858 = vmul.f32 %v3081, %v3840
      %v3877 = vrot.slane %v3841, 1
      %v3878 = vrot.slane %v3842, 1
      %v3879 = vsel %vm2788, %v3877, %v3878
      %v3880 = vrot.slane %v3843, 1
      %v3881 = vrot.slane %v3844, 1
      %v3882 = vsel %vm2788, %v3880, %v3881
      %v3883 = vrot.slane %v3845, 1
      %v3884 = vrot.slane %v3846, 1
      %v3885 = vsel %vm2788, %v3883, %v3884
      %v3886 = vrot.slane %v3847, 1
      %v3887 = vrot.slane %v3848, 1
      %v3888 = vsel %vm2788, %v3886, %v3887
      %v3889 = vrot.slane %v3849, 1
      %v3890 = vrot.slane %v3850, 1
      %v3891 = vsel %vm2788, %v3889, %v3890
      %v3892 = vrot.slane %v3851, 1
      %v3893 = vrot.slane %v3852, 1
      %v3894 = vsel %vm2788, %v3892, %v3893
      %v3895 = vrot.slane %v3853, 1
      %v3896 = vrot.slane %v3854, 1
      %v3897 = vsel %vm2788, %v3895, %v3896
      %v3898 = vrot.slane %v3855, 1
      %v3899 = vrot.slane %v3856, 1
      %v3900 = vsel %vm2788, %v3898, %v3899
      %v3901 = vrot.slane %v3857, 1
      %v3902 = vrot.slane %v3858, 1
      %v3903 = vsel %vm2788, %v3901, %v3902
      %v3922 = vadd.f32 %v3819, %v3879
      %v3923 = vadd.f32 %v3820, %v3878
      %v3924 = vadd.f32 %v3821, %v3882
      %v3925 = vadd.f32 %v3822, %v3881
      %v3926 = vadd.f32 %v3823, %v3885
      %v3927 = vadd.f32 %v3824, %v3884
      %v3928 = vadd.f32 %v3825, %v3888
      %v3929 = vadd.f32 %v3826, %v3887
      %v3930 = vadd.f32 %v3827, %v3891
      %v3931 = vadd.f32 %v3828, %v3890
      %v3932 = vadd.f32 %v3829, %v3894
      %v3933 = vadd.f32 %v3830, %v3893
      %v3934 = vadd.f32 %v3831, %v3897
      %v3935 = vadd.f32 %v3832, %v3896
      %v3936 = vadd.f32 %v3833, %v3900
      %v3937 = vadd.f32 %v3834, %v3899
      %v3938 = vadd.f32 %v3835, %v3903
      %v3939 = vadd.f32 %v3836, %v3902
      %v3940 = vlaneseq
      %v3941 = vshrl.u32 %v3940, 7
      %v3942 = vsub.s32 2, %v3941
      %v3943 = vrot.slane %v1115, %v3942
      %v3944 = vmul.f32 %v3054, %v3943
      %v3945 = vmul.f32 %v3055, %v3943
      %v3946 = vmul.f32 %v3056, %v3943
      %v3947 = vmul.f32 %v3057, %v3943
      %v3948 = vmul.f32 %v3058, %v3943
      %v3949 = vmul.f32 %v3059, %v3943
      %v3950 = vmul.f32 %v3060, %v3943
      %v3951 = vmul.f32 %v3061, %v3943
      %v3952 = vmul.f32 %v3062, %v3943
      %v3953 = vmul.f32 %v3063, %v3943
      %v3954 = vmul.f32 %v3064, %v3943
      %v3955 = vmul.f32 %v3065, %v3943
      %v3956 = vmul.f32 %v3066, %v3943
      %v3957 = vmul.f32 %v3067, %v3943
      %v3958 = vmul.f32 %v3068, %v3943
      %v3959 = vmul.f32 %v3069, %v3943
      %v3960 = vmul.f32 %v3070, %v3943
      %v3961 = vmul.f32 %v3071, %v3943
      %v3980 = vrot.slane %v3944, 2
      %v3981 = vrot.slane %v3945, 2
      %v3982 = vsel %vm2915, %v3980, %v3981
      %v3983 = vrot.slane %v3946, 2
      %v3984 = vrot.slane %v3947, 2
      %v3985 = vsel %vm2915, %v3983, %v3984
      %v3986 = vrot.slane %v3948, 2
      %v3987 = vrot.slane %v3949, 2
      %v3988 = vsel %vm2915, %v3986, %v3987
      %v3989 = vrot.slane %v3950, 2
      %v3990 = vrot.slane %v3951, 2
      %v3991 = vsel %vm2915, %v3989, %v3990
      %v3992 = vrot.slane %v3952, 2
      %v3993 = vrot.slane %v3953, 2
      %v3994 = vsel %vm2915, %v3992, %v3993
      %v3995 = vrot.slane %v3954, 2
      %v3996 = vrot.slane %v3955, 2
      %v3997 = vsel %vm2915, %v3995, %v3996
      %v3998 = vrot.slane %v3956, 2
      %v3999 = vrot.slane %v3957, 2
      %v4000 = vsel %vm2915, %v3998, %v3999
      %v4001 = vrot.slane %v3958, 2
      %v4002 = vrot.slane %v3959, 2
      %v4003 = vsel %vm2915, %v4001, %v4002
      %v4004 = vrot.slane %v3960, 2
      %v4005 = vrot.slane %v3961, 2
      %v4006 = vsel %vm2915, %v4004, %v4005
      %v4025 = vadd.f32 %v3922, %v3982
      %v4026 = vadd.f32 %v3923, %v3981
      %v4027 = vadd.f32 %v3924, %v3985
      %v4028 = vadd.f32 %v3925, %v3984
      %v4029 = vadd.f32 %v3926, %v3988
      %v4030 = vadd.f32 %v3927, %v3987
      %v4031 = vadd.f32 %v3928, %v3991
      %v4032 = vadd.f32 %v3929, %v3990
      %v4033 = vadd.f32 %v3930, %v3994
      %v4034 = vadd.f32 %v3931, %v3993
      %v4035 = vadd.f32 %v3932, %v3997
      %v4036 = vadd.f32 %v3933, %v3996
      %v4037 = vadd.f32 %v3934, %v4000
      %v4038 = vadd.f32 %v3935, %v3999
      %v4039 = vadd.f32 %v3936, %v4003
      %v4040 = vadd.f32 %v3937, %v4002
      %v4041 = vadd.f32 %v3938, %v4006
      %v4042 = vadd.f32 %v3939, %v4005
      %v4043 = vlaneseq
      %v4044 = vshrl.u32 %v4043, 7
      %v4045 = vsub.s32 2, %v4044
      %v4046 = vrot.slane %v1116, %v4045
      %v4047 = vmul.f32 %v3056, %v4046
      %v4048 = vmul.f32 %v3057, %v4046
      %v4049 = vmul.f32 %v3058, %v4046
      %v4050 = vmul.f32 %v3059, %v4046
      %v4051 = vmul.f32 %v3060, %v4046
      %v4052 = vmul.f32 %v3061, %v4046
      %v4053 = vmul.f32 %v3062, %v4046
      %v4054 = vmul.f32 %v3063, %v4046
      %v4055 = vmul.f32 %v3064, %v4046
      %v4056 = vmul.f32 %v3065, %v4046
      %v4057 = vmul.f32 %v3066, %v4046
      %v4058 = vmul.f32 %v3067, %v4046
      %v4059 = vmul.f32 %v3068, %v4046
      %v4060 = vmul.f32 %v3069, %v4046
      %v4061 = vmul.f32 %v3070, %v4046
      %v4062 = vmul.f32 %v3071, %v4046
      %v4063 = vmul.f32 %v3072, %v4046
      %v4064 = vmul.f32 %v3073, %v4046
      %v4083 = vrot.slane %v4047, 2
      %v4084 = vrot.slane %v4048, 2
      %v4085 = vsel %vm2915, %v4083, %v4084
      %v4086 = vrot.slane %v4049, 2
      %v4087 = vrot.slane %v4050, 2
      %v4088 = vsel %vm2915, %v4086, %v4087
      %v4089 = vrot.slane %v4051, 2
      %v4090 = vrot.slane %v4052, 2
      %v4091 = vsel %vm2915, %v4089, %v4090
      %v4092 = vrot.slane %v4053, 2
      %v4093 = vrot.slane %v4054, 2
      %v4094 = vsel %vm2915, %v4092, %v4093
      %v4095 = vrot.slane %v4055, 2
      %v4096 = vrot.slane %v4056, 2
      %v4097 = vsel %vm2915, %v4095, %v4096
      %v4098 = vrot.slane %v4057, 2
      %v4099 = vrot.slane %v4058, 2
      %v4100 = vsel %vm2915, %v4098, %v4099
      %v4101 = vrot.slane %v4059, 2
      %v4102 = vrot.slane %v4060, 2
      %v4103 = vsel %vm2915, %v4101, %v4102
      %v4104 = vrot.slane %v4061, 2
      %v4105 = vrot.slane %v4062, 2
      %v4106 = vsel %vm2915, %v4104, %v4105
      %v4107 = vrot.slane %v4063, 2
      %v4108 = vrot.slane %v4064, 2
      %v4109 = vsel %vm2915, %v4107, %v4108
      %v4128 = vadd.f32 %v4025, %v4085
      %v4129 = vadd.f32 %v4026, %v4084
      %v4130 = vadd.f32 %v4027, %v4088
      %v4131 = vadd.f32 %v4028, %v4087
      %v4132 = vadd.f32 %v4029, %v4091
      %v4133 = vadd.f32 %v4030, %v4090
      %v4134 = vadd.f32 %v4031, %v4094
      %v4135 = vadd.f32 %v4032, %v4093
      %v4136 = vadd.f32 %v4033, %v4097
      %v4137 = vadd.f32 %v4034, %v4096
      %v4138 = vadd.f32 %v4035, %v4100
      %v4139 = vadd.f32 %v4036, %v4099
      %v4140 = vadd.f32 %v4037, %v4103
      %v4141 = vadd.f32 %v4038, %v4102
      %v4142 = vadd.f32 %v4039, %v4106
      %v4143 = vadd.f32 %v4040, %v4105
      %v4144 = vadd.f32 %v4041, %v4109
      %v4145 = vadd.f32 %v4042, %v4108
      %v4146 = vlaneseq
      %v4147 = vshrl.u32 %v4146, 7
      %v4148 = vsub.s32 2, %v4147
      %v4149 = vrot.slane %v1117, %v4148
      %v4150 = vmul.f32 %v3058, %v4149
      %v4151 = vmul.f32 %v3059, %v4149
      %v4152 = vmul.f32 %v3060, %v4149
      %v4153 = vmul.f32 %v3061, %v4149
      %v4154 = vmul.f32 %v3062, %v4149
      %v4155 = vmul.f32 %v3063, %v4149
      %v4156 = vmul.f32 %v3064, %v4149
      %v4157 = vmul.f32 %v3065, %v4149
      %v4158 = vmul.f32 %v3066, %v4149
      %v4159 = vmul.f32 %v3067, %v4149
      %v4160 = vmul.f32 %v3068, %v4149
      %v4161 = vmul.f32 %v3069, %v4149
      %v4162 = vmul.f32 %v3070, %v4149
      %v4163 = vmul.f32 %v3071, %v4149
      %v4164 = vmul.f32 %v3072, %v4149
      %v4165 = vmul.f32 %v3073, %v4149
      %v4166 = vmul.f32 %v3074, %v4149
      %v4167 = vmul.f32 %v3075, %v4149
      %v4186 = vrot.slane %v4150, 2
      %v4187 = vrot.slane %v4151, 2
      %v4188 = vsel %vm2915, %v4186, %v4187
      %v4189 = vrot.slane %v4152, 2
      %v4190 = vrot.slane %v4153, 2
      %v4191 = vsel %vm2915, %v4189, %v4190
      %v4192 = vrot.slane %v4154, 2
      %v4193 = vrot.slane %v4155, 2
      %v4194 = vsel %vm2915, %v4192, %v4193
      %v4195 = vrot.slane %v4156, 2
      %v4196 = vrot.slane %v4157, 2
      %v4197 = vsel %vm2915, %v4195, %v4196
      %v4198 = vrot.slane %v4158, 2
      %v4199 = vrot.slane %v4159, 2
      %v4200 = vsel %vm2915, %v4198, %v4199
      %v4201 = vrot.slane %v4160, 2
      %v4202 = vrot.slane %v4161, 2
      %v4203 = vsel %vm2915, %v4201, %v4202
      %v4204 = vrot.slane %v4162, 2
      %v4205 = vrot.slane %v4163, 2
      %v4206 = vsel %vm2915, %v4204, %v4205
      %v4207 = vrot.slane %v4164, 2
      %v4208 = vrot.slane %v4165, 2
      %v4209 = vsel %vm2915, %v4207, %v4208
      %v4210 = vrot.slane %v4166, 2
      %v4211 = vrot.slane %v4167, 2
      %v4212 = vsel %vm2915, %v4210, %v4211
      %v4231 = vadd.f32 %v4128, %v4188
      %v4232 = vadd.f32 %v4129, %v4187
      %v4233 = vadd.f32 %v4130, %v4191
      %v4234 = vadd.f32 %v4131, %v4190
      %v4235 = vadd.f32 %v4132, %v4194
      %v4236 = vadd.f32 %v4133, %v4193
      %v4237 = vadd.f32 %v4134, %v4197
      %v4238 = vadd.f32 %v4135, %v4196
      %v4239 = vadd.f32 %v4136, %v4200
      %v4240 = vadd.f32 %v4137, %v4199
      %v4241 = vadd.f32 %v4138, %v4203
      %v4242 = vadd.f32 %v4139, %v4202
      %v4243 = vadd.f32 %v4140, %v4206
      %v4244 = vadd.f32 %v4141, %v4205
      %v4245 = vadd.f32 %v4142, %v4209
      %v4246 = vadd.f32 %v4143, %v4208
      %v4247 = vadd.f32 %v4144, %v4212
      %v4248 = vadd.f32 %v4145, %v4211
      %v4249 = vlaneseq
      %v4250 = vshrl.u32 %v4249, 7
      %v4251 = vsub.s32 2, %v4250
      %v4252 = vrot.slane %v1118, %v4251
      %v4253 = vmul.f32 %v3060, %v4252
      %v4254 = vmul.f32 %v3061, %v4252
      %v4255 = vmul.f32 %v3062, %v4252
      %v4256 = vmul.f32 %v3063, %v4252
      %v4257 = vmul.f32 %v3064, %v4252
      %v4258 = vmul.f32 %v3065, %v4252
      %v4259 = vmul.f32 %v3066, %v4252
      %v4260 = vmul.f32 %v3067, %v4252
      %v4261 = vmul.f32 %v3068, %v4252
      %v4262 = vmul.f32 %v3069, %v4252
      %v4263 = vmul.f32 %v3070, %v4252
      %v4264 = vmul.f32 %v3071, %v4252
      %v4265 = vmul.f32 %v3072, %v4252
      %v4266 = vmul.f32 %v3073, %v4252
      %v4267 = vmul.f32 %v3074, %v4252
      %v4268 = vmul.f32 %v3075, %v4252
      %v4269 = vmul.f32 %v3076, %v4252
      %v4270 = vmul.f32 %v3077, %v4252
      %v4289 = vrot.slane %v4253, 2
      %v4290 = vrot.slane %v4254, 2
      %v4291 = vsel %vm2915, %v4289, %v4290
      %v4292 = vrot.slane %v4255, 2
      %v4293 = vrot.slane %v4256, 2
      %v4294 = vsel %vm2915, %v4292, %v4293
      %v4295 = vrot.slane %v4257, 2
      %v4296 = vrot.slane %v4258, 2
      %v4297 = vsel %vm2915, %v4295, %v4296
      %v4298 = vrot.slane %v4259, 2
      %v4299 = vrot.slane %v4260, 2
      %v4300 = vsel %vm2915, %v4298, %v4299
      %v4301 = vrot.slane %v4261, 2
      %v4302 = vrot.slane %v4262, 2
      %v4303 = vsel %vm2915, %v4301, %v4302
      %v4304 = vrot.slane %v4263, 2
      %v4305 = vrot.slane %v4264, 2
      %v4306 = vsel %vm2915, %v4304, %v4305
      %v4307 = vrot.slane %v4265, 2
      %v4308 = vrot.slane %v4266, 2
      %v4309 = vsel %vm2915, %v4307, %v4308
      %v4310 = vrot.slane %v4267, 2
      %v4311 = vrot.slane %v4268, 2
      %v4312 = vsel %vm2915, %v4310, %v4311
      %v4313 = vrot.slane %v4269, 2
      %v4314 = vrot.slane %v4270, 2
      %v4315 = vsel %vm2915, %v4313, %v4314
      %v4334 = vadd.f32 %v4231, %v4291
      %v4335 = vadd.f32 %v4232, %v4290
      %v4336 = vadd.f32 %v4233, %v4294
      %v4337 = vadd.f32 %v4234, %v4293
      %v4338 = vadd.f32 %v4235, %v4297
      %v4339 = vadd.f32 %v4236, %v4296
      %v4340 = vadd.f32 %v4237, %v4300
      %v4341 = vadd.f32 %v4238, %v4299
      %v4342 = vadd.f32 %v4239, %v4303
      %v4343 = vadd.f32 %v4240, %v4302
      %v4344 = vadd.f32 %v4241, %v4306
      %v4345 = vadd.f32 %v4242, %v4305
      %v4346 = vadd.f32 %v4243, %v4309
      %v4347 = vadd.f32 %v4244, %v4308
      %v4348 = vadd.f32 %v4245, %v4312
      %v4349 = vadd.f32 %v4246, %v4311
      %v4350 = vadd.f32 %v4247, %v4315
      %v4351 = vadd.f32 %v4248, %v4314
      %v4352 = vlaneseq
      %v4353 = vshrl.u32 %v4352, 7
      %v4354 = vsub.s32 2, %v4353
      %v4355 = vrot.slane %v1119, %v4354
      %v4356 = vmul.f32 %v3062, %v4355
      %v4357 = vmul.f32 %v3063, %v4355
      %v4358 = vmul.f32 %v3064, %v4355
      %v4359 = vmul.f32 %v3065, %v4355
      %v4360 = vmul.f32 %v3066, %v4355
      %v4361 = vmul.f32 %v3067, %v4355
      %v4362 = vmul.f32 %v3068, %v4355
      %v4363 = vmul.f32 %v3069, %v4355
      %v4364 = vmul.f32 %v3070, %v4355
      %v4365 = vmul.f32 %v3071, %v4355
      %v4366 = vmul.f32 %v3072, %v4355
      %v4367 = vmul.f32 %v3073, %v4355
      %v4368 = vmul.f32 %v3074, %v4355
      %v4369 = vmul.f32 %v3075, %v4355
      %v4370 = vmul.f32 %v3076, %v4355
      %v4371 = vmul.f32 %v3077, %v4355
      %v4372 = vmul.f32 %v3078, %v4355
      %v4373 = vmul.f32 %v3079, %v4355
      %v4392 = vrot.slane %v4356, 2
      %v4393 = vrot.slane %v4357, 2
      %v4394 = vsel %vm2915, %v4392, %v4393
      %v4395 = vrot.slane %v4358, 2
      %v4396 = vrot.slane %v4359, 2
      %v4397 = vsel %vm2915, %v4395, %v4396
      %v4398 = vrot.slane %v4360, 2
      %v4399 = vrot.slane %v4361, 2
      %v4400 = vsel %vm2915, %v4398, %v4399
      %v4401 = vrot.slane %v4362, 2
      %v4402 = vrot.slane %v4363, 2
      %v4403 = vsel %vm2915, %v4401, %v4402
      %v4404 = vrot.slane %v4364, 2
      %v4405 = vrot.slane %v4365, 2
      %v4406 = vsel %vm2915, %v4404, %v4405
      %v4407 = vrot.slane %v4366, 2
      %v4408 = vrot.slane %v4367, 2
      %v4409 = vsel %vm2915, %v4407, %v4408
      %v4410 = vrot.slane %v4368, 2
      %v4411 = vrot.slane %v4369, 2
      %v4412 = vsel %vm2915, %v4410, %v4411
      %v4413 = vrot.slane %v4370, 2
      %v4414 = vrot.slane %v4371, 2
      %v4415 = vsel %vm2915, %v4413, %v4414
      %v4416 = vrot.slane %v4372, 2
      %v4417 = vrot.slane %v4373, 2
      %v4418 = vsel %vm2915, %v4416, %v4417
      %v4437 = vadd.f32 %v4334, %v4394
      %v4438 = vadd.f32 %v4335, %v4393
      %v4439 = vadd.f32 %v4336, %v4397
      %v4440 = vadd.f32 %v4337, %v4396
      %v4441 = vadd.f32 %v4338, %v4400
      %v4442 = vadd.f32 %v4339, %v4399
      %v4443 = vadd.f32 %v4340, %v4403
      %v4444 = vadd.f32 %v4341, %v4402
      %v4445 = vadd.f32 %v4342, %v4406
      %v4446 = vadd.f32 %v4343, %v4405
      %v4447 = vadd.f32 %v4344, %v4409
      %v4448 = vadd.f32 %v4345, %v4408
      %v4449 = vadd.f32 %v4346, %v4412
      %v4450 = vadd.f32 %v4347, %v4411
      %v4451 = vadd.f32 %v4348, %v4415
      %v4452 = vadd.f32 %v4349, %v4414
      %v4453 = vadd.f32 %v4350, %v4418
      %v4454 = vadd.f32 %v4351, %v4417
      %v4455 = vlaneseq
      %v4456 = vshrl.u32 %v4455, 7
      %v4457 = vsub.s32 2, %v4456
      %v4458 = vrot.slane %v1120, %v4457
      %v4459 = vmul.f32 %v3064, %v4458
      %v4460 = vmul.f32 %v3065, %v4458
      %v4461 = vmul.f32 %v3066, %v4458
      %v4462 = vmul.f32 %v3067, %v4458
      %v4463 = vmul.f32 %v3068, %v4458
      %v4464 = vmul.f32 %v3069, %v4458
      %v4465 = vmul.f32 %v3070, %v4458
      %v4466 = vmul.f32 %v3071, %v4458
      %v4467 = vmul.f32 %v3072, %v4458
      %v4468 = vmul.f32 %v3073, %v4458
      %v4469 = vmul.f32 %v3074, %v4458
      %v4470 = vmul.f32 %v3075, %v4458
      %v4471 = vmul.f32 %v3076, %v4458
      %v4472 = vmul.f32 %v3077, %v4458
      %v4473 = vmul.f32 %v3078, %v4458
      %v4474 = vmul.f32 %v3079, %v4458
      %v4475 = vmul.f32 %v3080, %v4458
      %v4476 = vmul.f32 %v3081, %v4458
      %v4495 = vrot.slane %v4459, 2
      %v4496 = vrot.slane %v4460, 2
      %v4497 = vsel %vm2915, %v4495, %v4496
      %v4498 = vrot.slane %v4461, 2
      %v4499 = vrot.slane %v4462, 2
      %v4500 = vsel %vm2915, %v4498, %v4499
      %v4501 = vrot.slane %v4463, 2
      %v4502 = vrot.slane %v4464, 2
      %v4503 = vsel %vm2915, %v4501, %v4502
      %v4504 = vrot.slane %v4465, 2
      %v4505 = vrot.slane %v4466, 2
      %v4506 = vsel %vm2915, %v4504, %v4505
      %v4507 = vrot.slane %v4467, 2
      %v4508 = vrot.slane %v4468, 2
      %v4509 = vsel %vm2915, %v4507, %v4508
      %v4510 = vrot.slane %v4469, 2
      %v4511 = vrot.slane %v4470, 2
      %v4512 = vsel %vm2915, %v4510, %v4511
      %v4513 = vrot.slane %v4471, 2
      %v4514 = vrot.slane %v4472, 2
      %v4515 = vsel %vm2915, %v4513, %v4514
      %v4516 = vrot.slane %v4473, 2
      %v4517 = vrot.slane %v4474, 2
      %v4518 = vsel %vm2915, %v4516, %v4517
      %v4519 = vrot.slane %v4475, 2
      %v4520 = vrot.slane %v4476, 2
      %v4521 = vsel %vm2915, %v4519, %v4520
      %v4540 = vadd.f32 %v4437, %v4497
      %v4541 = vadd.f32 %v4438, %v4496
      %v4542 = vadd.f32 %v4439, %v4500
      %v4543 = vadd.f32 %v4440, %v4499
      %v4544 = vadd.f32 %v4441, %v4503
      %v4545 = vadd.f32 %v4442, %v4502
      %v4546 = vadd.f32 %v4443, %v4506
      %v4547 = vadd.f32 %v4444, %v4505
      %v4548 = vadd.f32 %v4445, %v4509
      %v4549 = vadd.f32 %v4446, %v4508
      %v4550 = vadd.f32 %v4447, %v4512
      %v4551 = vadd.f32 %v4448, %v4511
      %v4552 = vadd.f32 %v4449, %v4515
      %v4553 = vadd.f32 %v4450, %v4514
      %v4554 = vadd.f32 %v4451, %v4518
      %v4555 = vadd.f32 %v4452, %v4517
      %v4556 = vadd.f32 %v4453, %v4521
      %v4557 = vadd.f32 %v4454, %v4520
      %v4558 = vlaneseq
      %v4559 = vshrl.u32 %v4558, 7
      %v4560 = vsub.s32 3, %v4559
      %v4561 = vrot.slane %v1115, %v4560
      %v4562 = vmul.f32 %v3054, %v4561
      %v4563 = vmul.f32 %v3055, %v4561
      %v4564 = vmul.f32 %v3056, %v4561
      %v4565 = vmul.f32 %v3057, %v4561
      %v4566 = vmul.f32 %v3058, %v4561
      %v4567 = vmul.f32 %v3059, %v4561
      %v4568 = vmul.f32 %v3060, %v4561
      %v4569 = vmul.f32 %v3061, %v4561
      %v4570 = vmul.f32 %v3062, %v4561
      %v4571 = vmul.f32 %v3063, %v4561
      %v4572 = vmul.f32 %v3064, %v4561
      %v4573 = vmul.f32 %v3065, %v4561
      %v4574 = vmul.f32 %v3066, %v4561
      %v4575 = vmul.f32 %v3067, %v4561
      %v4576 = vmul.f32 %v3068, %v4561
      %v4577 = vmul.f32 %v3069, %v4561
      %v4578 = vmul.f32 %v3070, %v4561
      %v4579 = vmul.f32 %v3071, %v4561
      %vm4598 = vcmask 1044480
      %v4599 = vrot.slane %v4562, 3
      %v4600 = vrot.slane %v4563, 3
      %v4601 = vsel %vm4598, %v4599, %v4600
      %v4602 = vrot.slane %v4564, 3
      %v4603 = vrot.slane %v4565, 3
      %v4604 = vsel %vm4598, %v4602, %v4603
      %v4605 = vrot.slane %v4566, 3
      %v4606 = vrot.slane %v4567, 3
      %v4607 = vsel %vm4598, %v4605, %v4606
      %v4608 = vrot.slane %v4568, 3
      %v4609 = vrot.slane %v4569, 3
      %v4610 = vsel %vm4598, %v4608, %v4609
      %v4611 = vrot.slane %v4570, 3
      %v4612 = vrot.slane %v4571, 3
      %v4613 = vsel %vm4598, %v4611, %v4612
      %v4614 = vrot.slane %v4572, 3
      %v4615 = vrot.slane %v4573, 3
      %v4616 = vsel %vm4598, %v4614, %v4615
      %v4617 = vrot.slane %v4574, 3
      %v4618 = vrot.slane %v4575, 3
      %v4619 = vsel %vm4598, %v4617, %v4618
      %v4620 = vrot.slane %v4576, 3
      %v4621 = vrot.slane %v4577, 3
      %v4622 = vsel %vm4598, %v4620, %v4621
      %v4623 = vrot.slane %v4578, 3
      %v4624 = vrot.slane %v4579, 3
      %v4625 = vsel %vm4598, %v4623, %v4624
      %v4644 = vadd.f32 %v4540, %v4601
      %v4645 = vadd.f32 %v4541, %v4600
      %v4646 = vadd.f32 %v4542, %v4604
      %v4647 = vadd.f32 %v4543, %v4603
      %v4648 = vadd.f32 %v4544, %v4607
      %v4649 = vadd.f32 %v4545, %v4606
      %v4650 = vadd.f32 %v4546, %v4610
      %v4651 = vadd.f32 %v4547, %v4609
      %v4652 = vadd.f32 %v4548, %v4613
      %v4653 = vadd.f32 %v4549, %v4612
      %v4654 = vadd.f32 %v4550, %v4616
      %v4655 = vadd.f32 %v4551, %v4615
      %v4656 = vadd.f32 %v4552, %v4619
      %v4657 = vadd.f32 %v4553, %v4618
      %v4658 = vadd.f32 %v4554, %v4622
      %v4659 = vadd.f32 %v4555, %v4621
      %v4660 = vadd.f32 %v4556, %v4625
      %v4661 = vadd.f32 %v4557, %v4624
      %v4662 = vlaneseq
      %v4663 = vshrl.u32 %v4662, 7
      %v4664 = vsub.s32 3, %v4663
      %v4665 = vrot.slane %v1116, %v4664
      %v4666 = vmul.f32 %v3056, %v4665
      %v4667 = vmul.f32 %v3057, %v4665
      %v4668 = vmul.f32 %v3058, %v4665
      %v4669 = vmul.f32 %v3059, %v4665
      %v4670 = vmul.f32 %v3060, %v4665
      %v4671 = vmul.f32 %v3061, %v4665
      %v4672 = vmul.f32 %v3062, %v4665
      %v4673 = vmul.f32 %v3063, %v4665
      %v4674 = vmul.f32 %v3064, %v4665
      %v4675 = vmul.f32 %v3065, %v4665
      %v4676 = vmul.f32 %v3066, %v4665
      %v4677 = vmul.f32 %v3067, %v4665
      %v4678 = vmul.f32 %v3068, %v4665
      %v4679 = vmul.f32 %v3069, %v4665
      %v4680 = vmul.f32 %v3070, %v4665
      %v4681 = vmul.f32 %v3071, %v4665
      %v4682 = vmul.f32 %v3072, %v4665
      %v4683 = vmul.f32 %v3073, %v4665
      %v4702 = vrot.slane %v4666, 3
      %v4703 = vrot.slane %v4667, 3
      %v4704 = vsel %vm4598, %v4702, %v4703
      %v4705 = vrot.slane %v4668, 3
      %v4706 = vrot.slane %v4669, 3
      %v4707 = vsel %vm4598, %v4705, %v4706
      %v4708 = vrot.slane %v4670, 3
      %v4709 = vrot.slane %v4671, 3
      %v4710 = vsel %vm4598, %v4708, %v4709
      %v4711 = vrot.slane %v4672, 3
      %v4712 = vrot.slane %v4673, 3
      %v4713 = vsel %vm4598, %v4711, %v4712
      %v4714 = vrot.slane %v4674, 3
      %v4715 = vrot.slane %v4675, 3
      %v4716 = vsel %vm4598, %v4714, %v4715
      %v4717 = vrot.slane %v4676, 3
      %v4718 = vrot.slane %v4677, 3
      %v4719 = vsel %vm4598, %v4717, %v4718
      %v4720 = vrot.slane %v4678, 3
      %v4721 = vrot.slane %v4679, 3
      %v4722 = vsel %vm4598, %v4720, %v4721
      %v4723 = vrot.slane %v4680, 3
      %v4724 = vrot.slane %v4681, 3
      %v4725 = vsel %vm4598, %v4723, %v4724
      %v4726 = vrot.slane %v4682, 3
      %v4727 = vrot.slane %v4683, 3
      %v4728 = vsel %vm4598, %v4726, %v4727
      %v4747 = vadd.f32 %v4644, %v4704
      %v4748 = vadd.f32 %v4645, %v4703
      %v4749 = vadd.f32 %v4646, %v4707
      %v4750 = vadd.f32 %v4647, %v4706
      %v4751 = vadd.f32 %v4648, %v4710
      %v4752 = vadd.f32 %v4649, %v4709
      %v4753 = vadd.f32 %v4650, %v4713
      %v4754 = vadd.f32 %v4651, %v4712
      %v4755 = vadd.f32 %v4652, %v4716
      %v4756 = vadd.f32 %v4653, %v4715
      %v4757 = vadd.f32 %v4654, %v4719
      %v4758 = vadd.f32 %v4655, %v4718
      %v4759 = vadd.f32 %v4656, %v4722
      %v4760 = vadd.f32 %v4657, %v4721
      %v4761 = vadd.f32 %v4658, %v4725
      %v4762 = vadd.f32 %v4659, %v4724
      %v4763 = vadd.f32 %v4660, %v4728
      %v4764 = vadd.f32 %v4661, %v4727
      %v4765 = vlaneseq
      %v4766 = vshrl.u32 %v4765, 7
      %v4767 = vsub.s32 3, %v4766
      %v4768 = vrot.slane %v1117, %v4767
      %v4769 = vmul.f32 %v3058, %v4768
      %v4770 = vmul.f32 %v3059, %v4768
      %v4771 = vmul.f32 %v3060, %v4768
      %v4772 = vmul.f32 %v3061, %v4768
      %v4773 = vmul.f32 %v3062, %v4768
      %v4774 = vmul.f32 %v3063, %v4768
      %v4775 = vmul.f32 %v3064, %v4768
      %v4776 = vmul.f32 %v3065, %v4768
      %v4777 = vmul.f32 %v3066, %v4768
      %v4778 = vmul.f32 %v3067, %v4768
      %v4779 = vmul.f32 %v3068, %v4768
      %v4780 = vmul.f32 %v3069, %v4768
      %v4781 = vmul.f32 %v3070, %v4768
      %v4782 = vmul.f32 %v3071, %v4768
      %v4783 = vmul.f32 %v3072, %v4768
      %v4784 = vmul.f32 %v3073, %v4768
      %v4785 = vmul.f32 %v3074, %v4768
      %v4786 = vmul.f32 %v3075, %v4768
      %v4805 = vrot.slane %v4769, 3
      %v4806 = vrot.slane %v4770, 3
      %v4807 = vsel %vm4598, %v4805, %v4806
      %v4808 = vrot.slane %v4771, 3
      %v4809 = vrot.slane %v4772, 3
      %v4810 = vsel %vm4598, %v4808, %v4809
      %v4811 = vrot.slane %v4773, 3
      %v4812 = vrot.slane %v4774, 3
      %v4813 = vsel %vm4598, %v4811, %v4812
      %v4814 = vrot.slane %v4775, 3
      %v4815 = vrot.slane %v4776, 3
      %v4816 = vsel %vm4598, %v4814, %v4815
      %v4817 = vrot.slane %v4777, 3
      %v4818 = vrot.slane %v4778, 3
      %v4819 = vsel %vm4598, %v4817, %v4818
      %v4820 = vrot.slane %v4779, 3
      %v4821 = vrot.slane %v4780, 3
      %v4822 = vsel %vm4598, %v4820, %v4821
      %v4823 = vrot.slane %v4781, 3
      %v4824 = vrot.slane %v4782, 3
      %v4825 = vsel %vm4598, %v4823, %v4824
      %v4826 = vrot.slane %v4783, 3
      %v4827 = vrot.slane %v4784, 3
      %v4828 = vsel %vm4598, %v4826, %v4827
      %v4829 = vrot.slane %v4785, 3
      %v4830 = vrot.slane %v4786, 3
      %v4831 = vsel %vm4598, %v4829, %v4830
      %v4850 = vadd.f32 %v4747, %v4807
      %v4851 = vadd.f32 %v4748, %v4806
      %v4852 = vadd.f32 %v4749, %v4810
      %v4853 = vadd.f32 %v4750, %v4809
      %v4854 = vadd.f32 %v4751, %v4813
      %v4855 = vadd.f32 %v4752, %v4812
      %v4856 = vadd.f32 %v4753, %v4816
      %v4857 = vadd.f32 %v4754, %v4815
      %v4858 = vadd.f32 %v4755, %v4819
      %v4859 = vadd.f32 %v4756, %v4818
      %v4860 = vadd.f32 %v4757, %v4822
      %v4861 = vadd.f32 %v4758, %v4821
      %v4862 = vadd.f32 %v4759, %v4825
      %v4863 = vadd.f32 %v4760, %v4824
      %v4864 = vadd.f32 %v4761, %v4828
      %v4865 = vadd.f32 %v4762, %v4827
      %v4866 = vadd.f32 %v4763, %v4831
      %v4867 = vadd.f32 %v4764, %v4830
      %v4868 = vlaneseq
      %v4869 = vshrl.u32 %v4868, 7
      %v4870 = vsub.s32 3, %v4869
      %v4871 = vrot.slane %v1118, %v4870
      %v4872 = vmul.f32 %v3060, %v4871
      %v4873 = vmul.f32 %v3061, %v4871
      %v4874 = vmul.f32 %v3062, %v4871
      %v4875 = vmul.f32 %v3063, %v4871
      %v4876 = vmul.f32 %v3064, %v4871
      %v4877 = vmul.f32 %v3065, %v4871
      %v4878 = vmul.f32 %v3066, %v4871
      %v4879 = vmul.f32 %v3067, %v4871
      %v4880 = vmul.f32 %v3068, %v4871
      %v4881 = vmul.f32 %v3069, %v4871
      %v4882 = vmul.f32 %v3070, %v4871
      %v4883 = vmul.f32 %v3071, %v4871
      %v4884 = vmul.f32 %v3072, %v4871
      %v4885 = vmul.f32 %v3073, %v4871
      %v4886 = vmul.f32 %v3074, %v4871
      %v4887 = vmul.f32 %v3075, %v4871
      %v4888 = vmul.f32 %v3076, %v4871
      %v4889 = vmul.f32 %v3077, %v4871
      %v4908 = vrot.slane %v4872, 3
      %v4909 = vrot.slane %v4873, 3
      %v4910 = vsel %vm4598, %v4908, %v4909
      %v4911 = vrot.slane %v4874, 3
      %v4912 = vrot.slane %v4875, 3
      %v4913 = vsel %vm4598, %v4911, %v4912
      %v4914 = vrot.slane %v4876, 3
      %v4915 = vrot.slane %v4877, 3
      %v4916 = vsel %vm4598, %v4914, %v4915
      %v4917 = vrot.slane %v4878, 3
      %v4918 = vrot.slane %v4879, 3
      %v4919 = vsel %vm4598, %v4917, %v4918
      %v4920 = vrot.slane %v4880, 3
      %v4921 = vrot.slane %v4881, 3
      %v4922 = vsel %vm4598, %v4920, %v4921
      %v4923 = vrot.slane %v4882, 3
      %v4924 = vrot.slane %v4883, 3
      %v4925 = vsel %vm4598, %v4923, %v4924
      %v4926 = vrot.slane %v4884, 3
      %v4927 = vrot.slane %v4885, 3
      %v4928 = vsel %vm4598, %v4926, %v4927
      %v4929 = vrot.slane %v4886, 3
      %v4930 = vrot.slane %v4887, 3
      %v4931 = vsel %vm4598, %v4929, %v4930
      %v4932 = vrot.slane %v4888, 3
      %v4933 = vrot.slane %v4889, 3
      %v4934 = vsel %vm4598, %v4932, %v4933
      %v4953 = vadd.f32 %v4850, %v4910
      %v4954 = vadd.f32 %v4851, %v4909
      %v4955 = vadd.f32 %v4852, %v4913
      %v4956 = vadd.f32 %v4853, %v4912
      %v4957 = vadd.f32 %v4854, %v4916
      %v4958 = vadd.f32 %v4855, %v4915
      %v4959 = vadd.f32 %v4856, %v4919
      %v4960 = vadd.f32 %v4857, %v4918
      %v4961 = vadd.f32 %v4858, %v4922
      %v4962 = vadd.f32 %v4859, %v4921
      %v4963 = vadd.f32 %v4860, %v4925
      %v4964 = vadd.f32 %v4861, %v4924
      %v4965 = vadd.f32 %v4862, %v4928
      %v4966 = vadd.f32 %v4863, %v4927
      %v4967 = vadd.f32 %v4864, %v4931
      %v4968 = vadd.f32 %v4865, %v4930
      %v4969 = vadd.f32 %v4866, %v4934
      %v4970 = vadd.f32 %v4867, %v4933
      %v4971 = vlaneseq
      %v4972 = vshrl.u32 %v4971, 7
      %v4973 = vsub.s32 3, %v4972
      %v4974 = vrot.slane %v1119, %v4973
      %v4975 = vmul.f32 %v3062, %v4974
      %v4976 = vmul.f32 %v3063, %v4974
      %v4977 = vmul.f32 %v3064, %v4974
      %v4978 = vmul.f32 %v3065, %v4974
      %v4979 = vmul.f32 %v3066, %v4974
      %v4980 = vmul.f32 %v3067, %v4974
      %v4981 = vmul.f32 %v3068, %v4974
      %v4982 = vmul.f32 %v3069, %v4974
      %v4983 = vmul.f32 %v3070, %v4974
      %v4984 = vmul.f32 %v3071, %v4974
      %v4985 = vmul.f32 %v3072, %v4974
      %v4986 = vmul.f32 %v3073, %v4974
      %v4987 = vmul.f32 %v3074, %v4974
      %v4988 = vmul.f32 %v3075, %v4974
      %v4989 = vmul.f32 %v3076, %v4974
      %v4990 = vmul.f32 %v3077, %v4974
      %v4991 = vmul.f32 %v3078, %v4974
      %v4992 = vmul.f32 %v3079, %v4974
      %v5011 = vrot.slane %v4975, 3
      %v5012 = vrot.slane %v4976, 3
      %v5013 = vsel %vm4598, %v5011, %v5012
      %v5014 = vrot.slane %v4977, 3
      %v5015 = vrot.slane %v4978, 3
      %v5016 = vsel %vm4598, %v5014, %v5015
      %v5017 = vrot.slane %v4979, 3
      %v5018 = vrot.slane %v4980, 3
      %v5019 = vsel %vm4598, %v5017, %v5018
      %v5020 = vrot.slane %v4981, 3
      %v5021 = vrot.slane %v4982, 3
      %v5022 = vsel %vm4598, %v5020, %v5021
      %v5023 = vrot.slane %v4983, 3
      %v5024 = vrot.slane %v4984, 3
      %v5025 = vsel %vm4598, %v5023, %v5024
      %v5026 = vrot.slane %v4985, 3
      %v5027 = vrot.slane %v4986, 3
      %v5028 = vsel %vm4598, %v5026, %v5027
      %v5029 = vrot.slane %v4987, 3
      %v5030 = vrot.slane %v4988, 3
      %v5031 = vsel %vm4598, %v5029, %v5030
      %v5032 = vrot.slane %v4989, 3
      %v5033 = vrot.slane %v4990, 3
      %v5034 = vsel %vm4598, %v5032, %v5033
      %v5035 = vrot.slane %v4991, 3
      %v5036 = vrot.slane %v4992, 3
      %v5037 = vsel %vm4598, %v5035, %v5036
      %v5056 = vadd.f32 %v4953, %v5013
      %v5057 = vadd.f32 %v4954, %v5012
      %v5058 = vadd.f32 %v4955, %v5016
      %v5059 = vadd.f32 %v4956, %v5015
      %v5060 = vadd.f32 %v4957, %v5019
      %v5061 = vadd.f32 %v4958, %v5018
      %v5062 = vadd.f32 %v4959, %v5022
      %v5063 = vadd.f32 %v4960, %v5021
      %v5064 = vadd.f32 %v4961, %v5025
      %v5065 = vadd.f32 %v4962, %v5024
      %v5066 = vadd.f32 %v4963, %v5028
      %v5067 = vadd.f32 %v4964, %v5027
      %v5068 = vadd.f32 %v4965, %v5031
      %v5069 = vadd.f32 %v4966, %v5030
      %v5070 = vadd.f32 %v4967, %v5034
      %v5071 = vadd.f32 %v4968, %v5033
      %v5072 = vadd.f32 %v4969, %v5037
      %v5073 = vadd.f32 %v4970, %v5036
      %v5074 = vlaneseq
      %v5075 = vshrl.u32 %v5074, 7
      %v5076 = vsub.s32 3, %v5075
      %v5077 = vrot.slane %v1120, %v5076
      %v5078 = vmul.f32 %v3064, %v5077
      %v5079 = vmul.f32 %v3065, %v5077
      %v5080 = vmul.f32 %v3066, %v5077
      %v5081 = vmul.f32 %v3067, %v5077
      %v5082 = vmul.f32 %v3068, %v5077
      %v5083 = vmul.f32 %v3069, %v5077
      %v5084 = vmul.f32 %v3070, %v5077
      %v5085 = vmul.f32 %v3071, %v5077
      %v5086 = vmul.f32 %v3072, %v5077
      %v5087 = vmul.f32 %v3073, %v5077
      %v5088 = vmul.f32 %v3074, %v5077
      %v5089 = vmul.f32 %v3075, %v5077
      %v5090 = vmul.f32 %v3076, %v5077
      %v5091 = vmul.f32 %v3077, %v5077
      %v5092 = vmul.f32 %v3078, %v5077
      %v5093 = vmul.f32 %v3079, %v5077
      %v5094 = vmul.f32 %v3080, %v5077
      %v5095 = vmul.f32 %v3081, %v5077
      %v5114 = vrot.slane %v5078, 3
      %v5115 = vrot.slane %v5079, 3
      %v5116 = vsel %vm4598, %v5114, %v5115
      %v5117 = vrot.slane %v5080, 3
      %v5118 = vrot.slane %v5081, 3
      %v5119 = vsel %vm4598, %v5117, %v5118
      %v5120 = vrot.slane %v5082, 3
      %v5121 = vrot.slane %v5083, 3
      %v5122 = vsel %vm4598, %v5120, %v5121
      %v5123 = vrot.slane %v5084, 3
      %v5124 = vrot.slane %v5085, 3
      %v5125 = vsel %vm4598, %v5123, %v5124
      %v5126 = vrot.slane %v5086, 3
      %v5127 = vrot.slane %v5087, 3
      %v5128 = vsel %vm4598, %v5126, %v5127
      %v5129 = vrot.slane %v5088, 3
      %v5130 = vrot.slane %v5089, 3
      %v5131 = vsel %vm4598, %v5129, %v5130
      %v5132 = vrot.slane %v5090, 3
      %v5133 = vrot.slane %v5091, 3
      %v5134 = vsel %vm4598, %v5132, %v5133
      %v5135 = vrot.slane %v5092, 3
      %v5136 = vrot.slane %v5093, 3
      %v5137 = vsel %vm4598, %v5135, %v5136
      %v5138 = vrot.slane %v5094, 3
      %v5139 = vrot.slane %v5095, 3
      %v5140 = vsel %vm4598, %v5138, %v5139
      %v5159 = vadd.f32 %v5056, %v5116
      %v5160 = vadd.f32 %v5057, %v5115
      %v5161 = vadd.f32 %v5058, %v5119
      %v5162 = vadd.f32 %v5059, %v5118
      %v5163 = vadd.f32 %v5060, %v5122
      %v5164 = vadd.f32 %v5061, %v5121
      %v5165 = vadd.f32 %v5062, %v5125
      %v5166 = vadd.f32 %v5063, %v5124
      %v5167 = vadd.f32 %v5064, %v5128
      %v5168 = vadd.f32 %v5065, %v5127
      %v5169 = vadd.f32 %v5066, %v5131
      %v5170 = vadd.f32 %v5067, %v5130
      %v5171 = vadd.f32 %v5068, %v5134
      %v5172 = vadd.f32 %v5069, %v5133
      %v5173 = vadd.f32 %v5070, %v5137
      %v5174 = vadd.f32 %v5071, %v5136
      %v5175 = vadd.f32 %v5072, %v5140
      %v5176 = vadd.f32 %v5073, %v5139
      %v5177 = vlaneseq
      %v5178 = vshrl.u32 %v5177, 7
      %v5179 = vsub.s32 4, %v5178
      %v5180 = vrot.slane %v1115, %v5179
      %v5181 = vmul.f32 %v3054, %v5180
      %v5182 = vmul.f32 %v3055, %v5180
      %v5183 = vmul.f32 %v3056, %v5180
      %v5184 = vmul.f32 %v3057, %v5180
      %v5185 = vmul.f32 %v3058, %v5180
      %v5186 = vmul.f32 %v3059, %v5180
      %v5187 = vmul.f32 %v3060, %v5180
      %v5188 = vmul.f32 %v3061, %v5180
      %v5189 = vmul.f32 %v3062, %v5180
      %v5190 = vmul.f32 %v3063, %v5180
      %v5191 = vmul.f32 %v3064, %v5180
      %v5192 = vmul.f32 %v3065, %v5180
      %v5193 = vmul.f32 %v3066, %v5180
      %v5194 = vmul.f32 %v3067, %v5180
      %v5195 = vmul.f32 %v3068, %v5180
      %v5196 = vmul.f32 %v3069, %v5180
      %v5197 = vmul.f32 %v3070, %v5180
      %v5198 = vmul.f32 %v3071, %v5180
      %vm5217 = vcmask 1043456
      %v5218 = vrot.slane %v5181, 4
      %v5219 = vrot.slane %v5182, 4
      %v5220 = vsel %vm5217, %v5218, %v5219
      %v5221 = vrot.slane %v5183, 4
      %v5222 = vrot.slane %v5184, 4
      %v5223 = vsel %vm5217, %v5221, %v5222
      %v5224 = vrot.slane %v5185, 4
      %v5225 = vrot.slane %v5186, 4
      %v5226 = vsel %vm5217, %v5224, %v5225
      %v5227 = vrot.slane %v5187, 4
      %v5228 = vrot.slane %v5188, 4
      %v5229 = vsel %vm5217, %v5227, %v5228
      %v5230 = vrot.slane %v5189, 4
      %v5231 = vrot.slane %v5190, 4
      %v5232 = vsel %vm5217, %v5230, %v5231
      %v5233 = vrot.slane %v5191, 4
      %v5234 = vrot.slane %v5192, 4
      %v5235 = vsel %vm5217, %v5233, %v5234
      %v5236 = vrot.slane %v5193, 4
      %v5237 = vrot.slane %v5194, 4
      %v5238 = vsel %vm5217, %v5236, %v5237
      %v5239 = vrot.slane %v5195, 4
      %v5240 = vrot.slane %v5196, 4
      %v5241 = vsel %vm5217, %v5239, %v5240
      %v5242 = vrot.slane %v5197, 4
      %v5243 = vrot.slane %v5198, 4
      %v5244 = vsel %vm5217, %v5242, %v5243
      %v5263 = vadd.f32 %v5159, %v5220
      %v5264 = vadd.f32 %v5160, %v5219
      %v5265 = vadd.f32 %v5161, %v5223
      %v5266 = vadd.f32 %v5162, %v5222
      %v5267 = vadd.f32 %v5163, %v5226
      %v5268 = vadd.f32 %v5164, %v5225
      %v5269 = vadd.f32 %v5165, %v5229
      %v5270 = vadd.f32 %v5166, %v5228
      %v5271 = vadd.f32 %v5167, %v5232
      %v5272 = vadd.f32 %v5168, %v5231
      %v5273 = vadd.f32 %v5169, %v5235
      %v5274 = vadd.f32 %v5170, %v5234
      %v5275 = vadd.f32 %v5171, %v5238
      %v5276 = vadd.f32 %v5172, %v5237
      %v5277 = vadd.f32 %v5173, %v5241
      %v5278 = vadd.f32 %v5174, %v5240
      %v5279 = vadd.f32 %v5175, %v5244
      %v5280 = vadd.f32 %v5176, %v5243
      %v5281 = vlaneseq
      %v5282 = vshrl.u32 %v5281, 7
      %v5283 = vsub.s32 4, %v5282
      %v5284 = vrot.slane %v1116, %v5283
      %v5285 = vmul.f32 %v3056, %v5284
      %v5286 = vmul.f32 %v3057, %v5284
      %v5287 = vmul.f32 %v3058, %v5284
      %v5288 = vmul.f32 %v3059, %v5284
      %v5289 = vmul.f32 %v3060, %v5284
      %v5290 = vmul.f32 %v3061, %v5284
      %v5291 = vmul.f32 %v3062, %v5284
      %v5292 = vmul.f32 %v3063, %v5284
      %v5293 = vmul.f32 %v3064, %v5284
      %v5294 = vmul.f32 %v3065, %v5284
      %v5295 = vmul.f32 %v3066, %v5284
      %v5296 = vmul.f32 %v3067, %v5284
      %v5297 = vmul.f32 %v3068, %v5284
      %v5298 = vmul.f32 %v3069, %v5284
      %v5299 = vmul.f32 %v3070, %v5284
      %v5300 = vmul.f32 %v3071, %v5284
      %v5301 = vmul.f32 %v3072, %v5284
      %v5302 = vmul.f32 %v3073, %v5284
      %v5321 = vrot.slane %v5285, 4
      %v5322 = vrot.slane %v5286, 4
      %v5323 = vsel %vm5217, %v5321, %v5322
      %v5324 = vrot.slane %v5287, 4
      %v5325 = vrot.slane %v5288, 4
      %v5326 = vsel %vm5217, %v5324, %v5325
      %v5327 = vrot.slane %v5289, 4
      %v5328 = vrot.slane %v5290, 4
      %v5329 = vsel %vm5217, %v5327, %v5328
      %v5330 = vrot.slane %v5291, 4
      %v5331 = vrot.slane %v5292, 4
      %v5332 = vsel %vm5217, %v5330, %v5331
      %v5333 = vrot.slane %v5293, 4
      %v5334 = vrot.slane %v5294, 4
      %v5335 = vsel %vm5217, %v5333, %v5334
      %v5336 = vrot.slane %v5295, 4
      %v5337 = vrot.slane %v5296, 4
      %v5338 = vsel %vm5217, %v5336, %v5337
      %v5339 = vrot.slane %v5297, 4
      %v5340 = vrot.slane %v5298, 4
      %v5341 = vsel %vm5217, %v5339, %v5340
      %v5342 = vrot.slane %v5299, 4
      %v5343 = vrot.slane %v5300, 4
      %v5344 = vsel %vm5217, %v5342, %v5343
      %v5345 = vrot.slane %v5301, 4
      %v5346 = vrot.slane %v5302, 4
      %v5347 = vsel %vm5217, %v5345, %v5346
      %v5366 = vadd.f32 %v5263, %v5323
      %v5367 = vadd.f32 %v5264, %v5322
      %v5368 = vadd.f32 %v5265, %v5326
      %v5369 = vadd.f32 %v5266, %v5325
      %v5370 = vadd.f32 %v5267, %v5329
      %v5371 = vadd.f32 %v5268, %v5328
      %v5372 = vadd.f32 %v5269, %v5332
      %v5373 = vadd.f32 %v5270, %v5331
      %v5374 = vadd.f32 %v5271, %v5335
      %v5375 = vadd.f32 %v5272, %v5334
      %v5376 = vadd.f32 %v5273, %v5338
      %v5377 = vadd.f32 %v5274, %v5337
      %v5378 = vadd.f32 %v5275, %v5341
      %v5379 = vadd.f32 %v5276, %v5340
      %v5380 = vadd.f32 %v5277, %v5344
      %v5381 = vadd.f32 %v5278, %v5343
      %v5382 = vadd.f32 %v5279, %v5347
      %v5383 = vadd.f32 %v5280, %v5346
      %v5384 = vlaneseq
      %v5385 = vshrl.u32 %v5384, 7
      %v5386 = vsub.s32 4, %v5385
      %v5387 = vrot.slane %v1117, %v5386
      %v5388 = vmul.f32 %v3058, %v5387
      %v5389 = vmul.f32 %v3059, %v5387
      %v5390 = vmul.f32 %v3060, %v5387
      %v5391 = vmul.f32 %v3061, %v5387
      %v5392 = vmul.f32 %v3062, %v5387
      %v5393 = vmul.f32 %v3063, %v5387
      %v5394 = vmul.f32 %v3064, %v5387
      %v5395 = vmul.f32 %v3065, %v5387
      %v5396 = vmul.f32 %v3066, %v5387
      %v5397 = vmul.f32 %v3067, %v5387
      %v5398 = vmul.f32 %v3068, %v5387
      %v5399 = vmul.f32 %v3069, %v5387
      %v5400 = vmul.f32 %v3070, %v5387
      %v5401 = vmul.f32 %v3071, %v5387
      %v5402 = vmul.f32 %v3072, %v5387
      %v5403 = vmul.f32 %v3073, %v5387
      %v5404 = vmul.f32 %v3074, %v5387
      %v5405 = vmul.f32 %v3075, %v5387
      %v5424 = vrot.slane %v5388, 4
      %v5425 = vrot.slane %v5389, 4
      %v5426 = vsel %vm5217, %v5424, %v5425
      %v5427 = vrot.slane %v5390, 4
      %v5428 = vrot.slane %v5391, 4
      %v5429 = vsel %vm5217, %v5427, %v5428
      %v5430 = vrot.slane %v5392, 4
      %v5431 = vrot.slane %v5393, 4
      %v5432 = vsel %vm5217, %v5430, %v5431
      %v5433 = vrot.slane %v5394, 4
      %v5434 = vrot.slane %v5395, 4
      %v5435 = vsel %vm5217, %v5433, %v5434
      %v5436 = vrot.slane %v5396, 4
      %v5437 = vrot.slane %v5397, 4
      %v5438 = vsel %vm5217, %v5436, %v5437
      %v5439 = vrot.slane %v5398, 4
      %v5440 = vrot.slane %v5399, 4
      %v5441 = vsel %vm5217, %v5439, %v5440
      %v5442 = vrot.slane %v5400, 4
      %v5443 = vrot.slane %v5401, 4
      %v5444 = vsel %vm5217, %v5442, %v5443
      %v5445 = vrot.slane %v5402, 4
      %v5446 = vrot.slane %v5403, 4
      %v5447 = vsel %vm5217, %v5445, %v5446
      %v5448 = vrot.slane %v5404, 4
      %v5449 = vrot.slane %v5405, 4
      %v5450 = vsel %vm5217, %v5448, %v5449
      %v5469 = vadd.f32 %v5366, %v5426
      %v5470 = vadd.f32 %v5367, %v5425
      %v5471 = vadd.f32 %v5368, %v5429
      %v5472 = vadd.f32 %v5369, %v5428
      %v5473 = vadd.f32 %v5370, %v5432
      %v5474 = vadd.f32 %v5371, %v5431
      %v5475 = vadd.f32 %v5372, %v5435
      %v5476 = vadd.f32 %v5373, %v5434
      %v5477 = vadd.f32 %v5374, %v5438
      %v5478 = vadd.f32 %v5375, %v5437
      %v5479 = vadd.f32 %v5376, %v5441
      %v5480 = vadd.f32 %v5377, %v5440
      %v5481 = vadd.f32 %v5378, %v5444
      %v5482 = vadd.f32 %v5379, %v5443
      %v5483 = vadd.f32 %v5380, %v5447
      %v5484 = vadd.f32 %v5381, %v5446
      %v5485 = vadd.f32 %v5382, %v5450
      %v5486 = vadd.f32 %v5383, %v5449
      %v5487 = vlaneseq
      %v5488 = vshrl.u32 %v5487, 7
      %v5489 = vsub.s32 4, %v5488
      %v5490 = vrot.slane %v1118, %v5489
      %v5491 = vmul.f32 %v3060, %v5490
      %v5492 = vmul.f32 %v3061, %v5490
      %v5493 = vmul.f32 %v3062, %v5490
      %v5494 = vmul.f32 %v3063, %v5490
      %v5495 = vmul.f32 %v3064, %v5490
      %v5496 = vmul.f32 %v3065, %v5490
      %v5497 = vmul.f32 %v3066, %v5490
      %v5498 = vmul.f32 %v3067, %v5490
      %v5499 = vmul.f32 %v3068, %v5490
      %v5500 = vmul.f32 %v3069, %v5490
      %v5501 = vmul.f32 %v3070, %v5490
      %v5502 = vmul.f32 %v3071, %v5490
      %v5503 = vmul.f32 %v3072, %v5490
      %v5504 = vmul.f32 %v3073, %v5490
      %v5505 = vmul.f32 %v3074, %v5490
      %v5506 = vmul.f32 %v3075, %v5490
      %v5507 = vmul.f32 %v3076, %v5490
      %v5508 = vmul.f32 %v3077, %v5490
      %v5527 = vrot.slane %v5491, 4
      %v5528 = vrot.slane %v5492, 4
      %v5529 = vsel %vm5217, %v5527, %v5528
      %v5530 = vrot.slane %v5493, 4
      %v5531 = vrot.slane %v5494, 4
      %v5532 = vsel %vm5217, %v5530, %v5531
      %v5533 = vrot.slane %v5495, 4
      %v5534 = vrot.slane %v5496, 4
      %v5535 = vsel %vm5217, %v5533, %v5534
      %v5536 = vrot.slane %v5497, 4
      %v5537 = vrot.slane %v5498, 4
      %v5538 = vsel %vm5217, %v5536, %v5537
      %v5539 = vrot.slane %v5499, 4
      %v5540 = vrot.slane %v5500, 4
      %v5541 = vsel %vm5217, %v5539, %v5540
      %v5542 = vrot.slane %v5501, 4
      %v5543 = vrot.slane %v5502, 4
      %v5544 = vsel %vm5217, %v5542, %v5543
      %v5545 = vrot.slane %v5503, 4
      %v5546 = vrot.slane %v5504, 4
      %v5547 = vsel %vm5217, %v5545, %v5546
      %v5548 = vrot.slane %v5505, 4
      %v5549 = vrot.slane %v5506, 4
      %v5550 = vsel %vm5217, %v5548, %v5549
      %v5551 = vrot.slane %v5507, 4
      %v5552 = vrot.slane %v5508, 4
      %v5553 = vsel %vm5217, %v5551, %v5552
      %v5572 = vadd.f32 %v5469, %v5529
      %v5573 = vadd.f32 %v5470, %v5528
      %v5574 = vadd.f32 %v5471, %v5532
      %v5575 = vadd.f32 %v5472, %v5531
      %v5576 = vadd.f32 %v5473, %v5535
      %v5577 = vadd.f32 %v5474, %v5534
      %v5578 = vadd.f32 %v5475, %v5538
      %v5579 = vadd.f32 %v5476, %v5537
      %v5580 = vadd.f32 %v5477, %v5541
      %v5581 = vadd.f32 %v5478, %v5540
      %v5582 = vadd.f32 %v5479, %v5544
      %v5583 = vadd.f32 %v5480, %v5543
      %v5584 = vadd.f32 %v5481, %v5547
      %v5585 = vadd.f32 %v5482, %v5546
      %v5586 = vadd.f32 %v5483, %v5550
      %v5587 = vadd.f32 %v5484, %v5549
      %v5588 = vadd.f32 %v5485, %v5553
      %v5589 = vadd.f32 %v5486, %v5552
      %v5590 = vlaneseq
      %v5591 = vshrl.u32 %v5590, 7
      %v5592 = vsub.s32 4, %v5591
      %v5593 = vrot.slane %v1119, %v5592
      %v5594 = vmul.f32 %v3062, %v5593
      %v5595 = vmul.f32 %v3063, %v5593
      %v5596 = vmul.f32 %v3064, %v5593
      %v5597 = vmul.f32 %v3065, %v5593
      %v5598 = vmul.f32 %v3066, %v5593
      %v5599 = vmul.f32 %v3067, %v5593
      %v5600 = vmul.f32 %v3068, %v5593
      %v5601 = vmul.f32 %v3069, %v5593
      %v5602 = vmul.f32 %v3070, %v5593
      %v5603 = vmul.f32 %v3071, %v5593
      %v5604 = vmul.f32 %v3072, %v5593
      %v5605 = vmul.f32 %v3073, %v5593
      %v5606 = vmul.f32 %v3074, %v5593
      %v5607 = vmul.f32 %v3075, %v5593
      %v5608 = vmul.f32 %v3076, %v5593
      %v5609 = vmul.f32 %v3077, %v5593
      %v5610 = vmul.f32 %v3078, %v5593
      %v5611 = vmul.f32 %v3079, %v5593
      %v5630 = vrot.slane %v5594, 4
      %v5631 = vrot.slane %v5595, 4
      %v5632 = vsel %vm5217, %v5630, %v5631
      %v5633 = vrot.slane %v5596, 4
      %v5634 = vrot.slane %v5597, 4
      %v5635 = vsel %vm5217, %v5633, %v5634
      %v5636 = vrot.slane %v5598, 4
      %v5637 = vrot.slane %v5599, 4
      %v5638 = vsel %vm5217, %v5636, %v5637
      %v5639 = vrot.slane %v5600, 4
      %v5640 = vrot.slane %v5601, 4
      %v5641 = vsel %vm5217, %v5639, %v5640
      %v5642 = vrot.slane %v5602, 4
      %v5643 = vrot.slane %v5603, 4
      %v5644 = vsel %vm5217, %v5642, %v5643
      %v5645 = vrot.slane %v5604, 4
      %v5646 = vrot.slane %v5605, 4
      %v5647 = vsel %vm5217, %v5645, %v5646
      %v5648 = vrot.slane %v5606, 4
      %v5649 = vrot.slane %v5607, 4
      %v5650 = vsel %vm5217, %v5648, %v5649
      %v5651 = vrot.slane %v5608, 4
      %v5652 = vrot.slane %v5609, 4
      %v5653 = vsel %vm5217, %v5651, %v5652
      %v5654 = vrot.slane %v5610, 4
      %v5655 = vrot.slane %v5611, 4
      %v5656 = vsel %vm5217, %v5654, %v5655
      %v5675 = vadd.f32 %v5572, %v5632
      %v5676 = vadd.f32 %v5573, %v5631
      %v5677 = vadd.f32 %v5574, %v5635
      %v5678 = vadd.f32 %v5575, %v5634
      %v5679 = vadd.f32 %v5576, %v5638
      %v5680 = vadd.f32 %v5577, %v5637
      %v5681 = vadd.f32 %v5578, %v5641
      %v5682 = vadd.f32 %v5579, %v5640
      %v5683 = vadd.f32 %v5580, %v5644
      %v5684 = vadd.f32 %v5581, %v5643
      %v5685 = vadd.f32 %v5582, %v5647
      %v5686 = vadd.f32 %v5583, %v5646
      %v5687 = vadd.f32 %v5584, %v5650
      %v5688 = vadd.f32 %v5585, %v5649
      %v5689 = vadd.f32 %v5586, %v5653
      %v5690 = vadd.f32 %v5587, %v5652
      %v5691 = vadd.f32 %v5588, %v5656
      %v5692 = vadd.f32 %v5589, %v5655
      %v5693 = vlaneseq
      %v5694 = vshrl.u32 %v5693, 7
      %v5695 = vsub.s32 4, %v5694
      %v5696 = vrot.slane %v1120, %v5695
      %v5697 = vmul.f32 %v3064, %v5696
      %v5698 = vmul.f32 %v3065, %v5696
      %v5699 = vmul.f32 %v3066, %v5696
      %v5700 = vmul.f32 %v3067, %v5696
      %v5701 = vmul.f32 %v3068, %v5696
      %v5702 = vmul.f32 %v3069, %v5696
      %v5703 = vmul.f32 %v3070, %v5696
      %v5704 = vmul.f32 %v3071, %v5696
      %v5705 = vmul.f32 %v3072, %v5696
      %v5706 = vmul.f32 %v3073, %v5696
      %v5707 = vmul.f32 %v3074, %v5696
      %v5708 = vmul.f32 %v3075, %v5696
      %v5709 = vmul.f32 %v3076, %v5696
      %v5710 = vmul.f32 %v3077, %v5696
      %v5711 = vmul.f32 %v3078, %v5696
      %v5712 = vmul.f32 %v3079, %v5696
      %v5713 = vmul.f32 %v3080, %v5696
      %v5714 = vmul.f32 %v3081, %v5696
      %v5733 = vrot.slane %v5697, 4
      %v5734 = vrot.slane %v5698, 4
      %v5735 = vsel %vm5217, %v5733, %v5734
      %v5736 = vrot.slane %v5699, 4
      %v5737 = vrot.slane %v5700, 4
      %v5738 = vsel %vm5217, %v5736, %v5737
      %v5739 = vrot.slane %v5701, 4
      %v5740 = vrot.slane %v5702, 4
      %v5741 = vsel %vm5217, %v5739, %v5740
      %v5742 = vrot.slane %v5703, 4
      %v5743 = vrot.slane %v5704, 4
      %v5744 = vsel %vm5217, %v5742, %v5743
      %v5745 = vrot.slane %v5705, 4
      %v5746 = vrot.slane %v5706, 4
      %v5747 = vsel %vm5217, %v5745, %v5746
      %v5748 = vrot.slane %v5707, 4
      %v5749 = vrot.slane %v5708, 4
      %v5750 = vsel %vm5217, %v5748, %v5749
      %v5751 = vrot.slane %v5709, 4
      %v5752 = vrot.slane %v5710, 4
      %v5753 = vsel %vm5217, %v5751, %v5752
      %v5754 = vrot.slane %v5711, 4
      %v5755 = vrot.slane %v5712, 4
      %v5756 = vsel %vm5217, %v5754, %v5755
      %v5757 = vrot.slane %v5713, 4
      %v5758 = vrot.slane %v5714, 4
      %v5759 = vsel %vm5217, %v5757, %v5758
      %v5778 = vadd.f32 %v5675, %v5735
      %v5779 = vadd.f32 %v5676, %v5734
      %v5780 = vadd.f32 %v5677, %v5738
      %v5781 = vadd.f32 %v5678, %v5737
      %v5782 = vadd.f32 %v5679, %v5741
      %v5783 = vadd.f32 %v5680, %v5740
      %v5784 = vadd.f32 %v5681, %v5744
      %v5785 = vadd.f32 %v5682, %v5743
      %v5786 = vadd.f32 %v5683, %v5747
      %v5787 = vadd.f32 %v5684, %v5746
      %v5788 = vadd.f32 %v5685, %v5750
      %v5789 = vadd.f32 %v5686, %v5749
      %v5790 = vadd.f32 %v5687, %v5753
      %v5791 = vadd.f32 %v5688, %v5752
      %v5792 = vadd.f32 %v5689, %v5756
      %v5793 = vadd.f32 %v5690, %v5755
      %v5794 = vadd.f32 %v5691, %v5759
      %v5795 = vadd.f32 %v5692, %v5758
      %v5796 = vlaneseq
      %v5797 = vshrl.u32 %v5796, 7
      %v5798 = vsub.s32 5, %v5797
      %v5799 = vrot.slane %v1115, %v5798
      %v5800 = vmul.f32 %v3054, %v5799
      %v5801 = vmul.f32 %v3055, %v5799
      %v5802 = vmul.f32 %v3056, %v5799
      %v5803 = vmul.f32 %v3057, %v5799
      %v5804 = vmul.f32 %v3058, %v5799
      %v5805 = vmul.f32 %v3059, %v5799
      %v5806 = vmul.f32 %v3060, %v5799
      %v5807 = vmul.f32 %v3061, %v5799
      %v5808 = vmul.f32 %v3062, %v5799
      %v5809 = vmul.f32 %v3063, %v5799
      %v5810 = vmul.f32 %v3064, %v5799
      %v5811 = vmul.f32 %v3065, %v5799
      %v5812 = vmul.f32 %v3066, %v5799
      %v5813 = vmul.f32 %v3067, %v5799
      %v5814 = vmul.f32 %v3068, %v5799
      %v5815 = vmul.f32 %v3069, %v5799
      %v5816 = vmul.f32 %v3070, %v5799
      %v5817 = vmul.f32 %v3071, %v5799
      %vm5836 = vcmask 1042432
      %v5837 = vrot.slane %v5800, 5
      %v5838 = vrot.slane %v5801, 5
      %v5839 = vsel %vm5836, %v5837, %v5838
      %v5840 = vrot.slane %v5802, 5
      %v5841 = vrot.slane %v5803, 5
      %v5842 = vsel %vm5836, %v5840, %v5841
      %v5843 = vrot.slane %v5804, 5
      %v5844 = vrot.slane %v5805, 5
      %v5845 = vsel %vm5836, %v5843, %v5844
      %v5846 = vrot.slane %v5806, 5
      %v5847 = vrot.slane %v5807, 5
      %v5848 = vsel %vm5836, %v5846, %v5847
      %v5849 = vrot.slane %v5808, 5
      %v5850 = vrot.slane %v5809, 5
      %v5851 = vsel %vm5836, %v5849, %v5850
      %v5852 = vrot.slane %v5810, 5
      %v5853 = vrot.slane %v5811, 5
      %v5854 = vsel %vm5836, %v5852, %v5853
      %v5855 = vrot.slane %v5812, 5
      %v5856 = vrot.slane %v5813, 5
      %v5857 = vsel %vm5836, %v5855, %v5856
      %v5858 = vrot.slane %v5814, 5
      %v5859 = vrot.slane %v5815, 5
      %v5860 = vsel %vm5836, %v5858, %v5859
      %v5861 = vrot.slane %v5816, 5
      %v5862 = vrot.slane %v5817, 5
      %v5863 = vsel %vm5836, %v5861, %v5862
      %v5882 = vadd.f32 %v5778, %v5839
      %v5883 = vadd.f32 %v5779, %v5838
      %v5884 = vadd.f32 %v5780, %v5842
      %v5885 = vadd.f32 %v5781, %v5841
      %v5886 = vadd.f32 %v5782, %v5845
      %v5887 = vadd.f32 %v5783, %v5844
      %v5888 = vadd.f32 %v5784, %v5848
      %v5889 = vadd.f32 %v5785, %v5847
      %v5890 = vadd.f32 %v5786, %v5851
      %v5891 = vadd.f32 %v5787, %v5850
      %v5892 = vadd.f32 %v5788, %v5854
      %v5893 = vadd.f32 %v5789, %v5853
      %v5894 = vadd.f32 %v5790, %v5857
      %v5895 = vadd.f32 %v5791, %v5856
      %v5896 = vadd.f32 %v5792, %v5860
      %v5897 = vadd.f32 %v5793, %v5859
      %v5898 = vadd.f32 %v5794, %v5863
      %v5899 = vadd.f32 %v5795, %v5862
      %v5900 = vlaneseq
      %v5901 = vshrl.u32 %v5900, 7
      %v5902 = vsub.s32 5, %v5901
      %v5903 = vrot.slane %v1116, %v5902
      %v5904 = vmul.f32 %v3056, %v5903
      %v5905 = vmul.f32 %v3057, %v5903
      %v5906 = vmul.f32 %v3058, %v5903
      %v5907 = vmul.f32 %v3059, %v5903
      %v5908 = vmul.f32 %v3060, %v5903
      %v5909 = vmul.f32 %v3061, %v5903
      %v5910 = vmul.f32 %v3062, %v5903
      %v5911 = vmul.f32 %v3063, %v5903
      %v5912 = vmul.f32 %v3064, %v5903
      %v5913 = vmul.f32 %v3065, %v5903
      %v5914 = vmul.f32 %v3066, %v5903
      %v5915 = vmul.f32 %v3067, %v5903
      %v5916 = vmul.f32 %v3068, %v5903
      %v5917 = vmul.f32 %v3069, %v5903
      %v5918 = vmul.f32 %v3070, %v5903
      %v5919 = vmul.f32 %v3071, %v5903
      %v5920 = vmul.f32 %v3072, %v5903
      %v5921 = vmul.f32 %v3073, %v5903
      %v5940 = vrot.slane %v5904, 5
      %v5941 = vrot.slane %v5905, 5
      %v5942 = vsel %vm5836, %v5940, %v5941
      %v5943 = vrot.slane %v5906, 5
      %v5944 = vrot.slane %v5907, 5
      %v5945 = vsel %vm5836, %v5943, %v5944
      %v5946 = vrot.slane %v5908, 5
      %v5947 = vrot.slane %v5909, 5
      %v5948 = vsel %vm5836, %v5946, %v5947
      %v5949 = vrot.slane %v5910, 5
      %v5950 = vrot.slane %v5911, 5
      %v5951 = vsel %vm5836, %v5949, %v5950
      %v5952 = vrot.slane %v5912, 5
      %v5953 = vrot.slane %v5913, 5
      %v5954 = vsel %vm5836, %v5952, %v5953
      %v5955 = vrot.slane %v5914, 5
      %v5956 = vrot.slane %v5915, 5
      %v5957 = vsel %vm5836, %v5955, %v5956
      %v5958 = vrot.slane %v5916, 5
      %v5959 = vrot.slane %v5917, 5
      %v5960 = vsel %vm5836, %v5958, %v5959
      %v5961 = vrot.slane %v5918, 5
      %v5962 = vrot.slane %v5919, 5
      %v5963 = vsel %vm5836, %v5961, %v5962
      %v5964 = vrot.slane %v5920, 5
      %v5965 = vrot.slane %v5921, 5
      %v5966 = vsel %vm5836, %v5964, %v5965
      %v5985 = vadd.f32 %v5882, %v5942
      %v5986 = vadd.f32 %v5883, %v5941
      %v5987 = vadd.f32 %v5884, %v5945
      %v5988 = vadd.f32 %v5885, %v5944
      %v5989 = vadd.f32 %v5886, %v5948
      %v5990 = vadd.f32 %v5887, %v5947
      %v5991 = vadd.f32 %v5888, %v5951
      %v5992 = vadd.f32 %v5889, %v5950
      %v5993 = vadd.f32 %v5890, %v5954
      %v5994 = vadd.f32 %v5891, %v5953
      %v5995 = vadd.f32 %v5892, %v5957
      %v5996 = vadd.f32 %v5893, %v5956
      %v5997 = vadd.f32 %v5894, %v5960
      %v5998 = vadd.f32 %v5895, %v5959
      %v5999 = vadd.f32 %v5896, %v5963
      %v6000 = vadd.f32 %v5897, %v5962
      %v6001 = vadd.f32 %v5898, %v5966
      %v6002 = vadd.f32 %v5899, %v5965
      %v6003 = vlaneseq
      %v6004 = vshrl.u32 %v6003, 7
      %v6005 = vsub.s32 5, %v6004
      %v6006 = vrot.slane %v1117, %v6005
      %v6007 = vmul.f32 %v3058, %v6006
      %v6008 = vmul.f32 %v3059, %v6006
      %v6009 = vmul.f32 %v3060, %v6006
      %v6010 = vmul.f32 %v3061, %v6006
      %v6011 = vmul.f32 %v3062, %v6006
      %v6012 = vmul.f32 %v3063, %v6006
      %v6013 = vmul.f32 %v3064, %v6006
      %v6014 = vmul.f32 %v3065, %v6006
      %v6015 = vmul.f32 %v3066, %v6006
      %v6016 = vmul.f32 %v3067, %v6006
      %v6017 = vmul.f32 %v3068, %v6006
      %v6018 = vmul.f32 %v3069, %v6006
      %v6019 = vmul.f32 %v3070, %v6006
      %v6020 = vmul.f32 %v3071, %v6006
      %v6021 = vmul.f32 %v3072, %v6006
      %v6022 = vmul.f32 %v3073, %v6006
      %v6023 = vmul.f32 %v3074, %v6006
      %v6024 = vmul.f32 %v3075, %v6006
      %v6043 = vrot.slane %v6007, 5
      %v6044 = vrot.slane %v6008, 5
      %v6045 = vsel %vm5836, %v6043, %v6044
      %v6046 = vrot.slane %v6009, 5
      %v6047 = vrot.slane %v6010, 5
      %v6048 = vsel %vm5836, %v6046, %v6047
      %v6049 = vrot.slane %v6011, 5
      %v6050 = vrot.slane %v6012, 5
      %v6051 = vsel %vm5836, %v6049, %v6050
      %v6052 = vrot.slane %v6013, 5
      %v6053 = vrot.slane %v6014, 5
      %v6054 = vsel %vm5836, %v6052, %v6053
      %v6055 = vrot.slane %v6015, 5
      %v6056 = vrot.slane %v6016, 5
      %v6057 = vsel %vm5836, %v6055, %v6056
      %v6058 = vrot.slane %v6017, 5
      %v6059 = vrot.slane %v6018, 5
      %v6060 = vsel %vm5836, %v6058, %v6059
      %v6061 = vrot.slane %v6019, 5
      %v6062 = vrot.slane %v6020, 5
      %v6063 = vsel %vm5836, %v6061, %v6062
      %v6064 = vrot.slane %v6021, 5
      %v6065 = vrot.slane %v6022, 5
      %v6066 = vsel %vm5836, %v6064, %v6065
      %v6067 = vrot.slane %v6023, 5
      %v6068 = vrot.slane %v6024, 5
      %v6069 = vsel %vm5836, %v6067, %v6068
      %v6088 = vadd.f32 %v5985, %v6045
      %v6089 = vadd.f32 %v5986, %v6044
      %v6090 = vadd.f32 %v5987, %v6048
      %v6091 = vadd.f32 %v5988, %v6047
      %v6092 = vadd.f32 %v5989, %v6051
      %v6093 = vadd.f32 %v5990, %v6050
      %v6094 = vadd.f32 %v5991, %v6054
      %v6095 = vadd.f32 %v5992, %v6053
      %v6096 = vadd.f32 %v5993, %v6057
      %v6097 = vadd.f32 %v5994, %v6056
      %v6098 = vadd.f32 %v5995, %v6060
      %v6099 = vadd.f32 %v5996, %v6059
      %v6100 = vadd.f32 %v5997, %v6063
      %v6101 = vadd.f32 %v5998, %v6062
      %v6102 = vadd.f32 %v5999, %v6066
      %v6103 = vadd.f32 %v6000, %v6065
      %v6104 = vadd.f32 %v6001, %v6069
      %v6105 = vadd.f32 %v6002, %v6068
      %v6106 = vlaneseq
      %v6107 = vshrl.u32 %v6106, 7
      %v6108 = vsub.s32 5, %v6107
      %v6109 = vrot.slane %v1118, %v6108
      %v6110 = vmul.f32 %v3060, %v6109
      %v6111 = vmul.f32 %v3061, %v6109
      %v6112 = vmul.f32 %v3062, %v6109
      %v6113 = vmul.f32 %v3063, %v6109
      %v6114 = vmul.f32 %v3064, %v6109
      %v6115 = vmul.f32 %v3065, %v6109
      %v6116 = vmul.f32 %v3066, %v6109
      %v6117 = vmul.f32 %v3067, %v6109
      %v6118 = vmul.f32 %v3068, %v6109
      %v6119 = vmul.f32 %v3069, %v6109
      %v6120 = vmul.f32 %v3070, %v6109
      %v6121 = vmul.f32 %v3071, %v6109
      %v6122 = vmul.f32 %v3072, %v6109
      %v6123 = vmul.f32 %v3073, %v6109
      %v6124 = vmul.f32 %v3074, %v6109
      %v6125 = vmul.f32 %v3075, %v6109
      %v6126 = vmul.f32 %v3076, %v6109
      %v6127 = vmul.f32 %v3077, %v6109
      %v6146 = vrot.slane %v6110, 5
      %v6147 = vrot.slane %v6111, 5
      %v6148 = vsel %vm5836, %v6146, %v6147
      %v6149 = vrot.slane %v6112, 5
      %v6150 = vrot.slane %v6113, 5
      %v6151 = vsel %vm5836, %v6149, %v6150
      %v6152 = vrot.slane %v6114, 5
      %v6153 = vrot.slane %v6115, 5
      %v6154 = vsel %vm5836, %v6152, %v6153
      %v6155 = vrot.slane %v6116, 5
      %v6156 = vrot.slane %v6117, 5
      %v6157 = vsel %vm5836, %v6155, %v6156
      %v6158 = vrot.slane %v6118, 5
      %v6159 = vrot.slane %v6119, 5
      %v6160 = vsel %vm5836, %v6158, %v6159
      %v6161 = vrot.slane %v6120, 5
      %v6162 = vrot.slane %v6121, 5
      %v6163 = vsel %vm5836, %v6161, %v6162
      %v6164 = vrot.slane %v6122, 5
      %v6165 = vrot.slane %v6123, 5
      %v6166 = vsel %vm5836, %v6164, %v6165
      %v6167 = vrot.slane %v6124, 5
      %v6168 = vrot.slane %v6125, 5
      %v6169 = vsel %vm5836, %v6167, %v6168
      %v6170 = vrot.slane %v6126, 5
      %v6171 = vrot.slane %v6127, 5
      %v6172 = vsel %vm5836, %v6170, %v6171
      %v6191 = vadd.f32 %v6088, %v6148
      %v6192 = vadd.f32 %v6089, %v6147
      %v6193 = vadd.f32 %v6090, %v6151
      %v6194 = vadd.f32 %v6091, %v6150
      %v6195 = vadd.f32 %v6092, %v6154
      %v6196 = vadd.f32 %v6093, %v6153
      %v6197 = vadd.f32 %v6094, %v6157
      %v6198 = vadd.f32 %v6095, %v6156
      %v6199 = vadd.f32 %v6096, %v6160
      %v6200 = vadd.f32 %v6097, %v6159
      %v6201 = vadd.f32 %v6098, %v6163
      %v6202 = vadd.f32 %v6099, %v6162
      %v6203 = vadd.f32 %v6100, %v6166
      %v6204 = vadd.f32 %v6101, %v6165
      %v6205 = vadd.f32 %v6102, %v6169
      %v6206 = vadd.f32 %v6103, %v6168
      %v6207 = vadd.f32 %v6104, %v6172
      %v6208 = vadd.f32 %v6105, %v6171
      %v6209 = vlaneseq
      %v6210 = vshrl.u32 %v6209, 7
      %v6211 = vsub.s32 5, %v6210
      %v6212 = vrot.slane %v1119, %v6211
      %v6213 = vmul.f32 %v3062, %v6212
      %v6214 = vmul.f32 %v3063, %v6212
      %v6215 = vmul.f32 %v3064, %v6212
      %v6216 = vmul.f32 %v3065, %v6212
      %v6217 = vmul.f32 %v3066, %v6212
      %v6218 = vmul.f32 %v3067, %v6212
      %v6219 = vmul.f32 %v3068, %v6212
      %v6220 = vmul.f32 %v3069, %v6212
      %v6221 = vmul.f32 %v3070, %v6212
      %v6222 = vmul.f32 %v3071, %v6212
      %v6223 = vmul.f32 %v3072, %v6212
      %v6224 = vmul.f32 %v3073, %v6212
      %v6225 = vmul.f32 %v3074, %v6212
      %v6226 = vmul.f32 %v3075, %v6212
      %v6227 = vmul.f32 %v3076, %v6212
      %v6228 = vmul.f32 %v3077, %v6212
      %v6229 = vmul.f32 %v3078, %v6212
      %v6230 = vmul.f32 %v3079, %v6212
      %v6249 = vrot.slane %v6213, 5
      %v6250 = vrot.slane %v6214, 5
      %v6251 = vsel %vm5836, %v6249, %v6250
      %v6252 = vrot.slane %v6215, 5
      %v6253 = vrot.slane %v6216, 5
      %v6254 = vsel %vm5836, %v6252, %v6253
      %v6255 = vrot.slane %v6217, 5
      %v6256 = vrot.slane %v6218, 5
      %v6257 = vsel %vm5836, %v6255, %v6256
      %v6258 = vrot.slane %v6219, 5
      %v6259 = vrot.slane %v6220, 5
      %v6260 = vsel %vm5836, %v6258, %v6259
      %v6261 = vrot.slane %v6221, 5
      %v6262 = vrot.slane %v6222, 5
      %v6263 = vsel %vm5836, %v6261, %v6262
      %v6264 = vrot.slane %v6223, 5
      %v6265 = vrot.slane %v6224, 5
      %v6266 = vsel %vm5836, %v6264, %v6265
      %v6267 = vrot.slane %v6225, 5
      %v6268 = vrot.slane %v6226, 5
      %v6269 = vsel %vm5836, %v6267, %v6268
      %v6270 = vrot.slane %v6227, 5
      %v6271 = vrot.slane %v6228, 5
      %v6272 = vsel %vm5836, %v6270, %v6271
      %v6273 = vrot.slane %v6229, 5
      %v6274 = vrot.slane %v6230, 5
      %v6275 = vsel %vm5836, %v6273, %v6274
      %v6294 = vadd.f32 %v6191, %v6251
      %v6295 = vadd.f32 %v6192, %v6250
      %v6296 = vadd.f32 %v6193, %v6254
      %v6297 = vadd.f32 %v6194, %v6253
      %v6298 = vadd.f32 %v6195, %v6257
      %v6299 = vadd.f32 %v6196, %v6256
      %v6300 = vadd.f32 %v6197, %v6260
      %v6301 = vadd.f32 %v6198, %v6259
      %v6302 = vadd.f32 %v6199, %v6263
      %v6303 = vadd.f32 %v6200, %v6262
      %v6304 = vadd.f32 %v6201, %v6266
      %v6305 = vadd.f32 %v6202, %v6265
      %v6306 = vadd.f32 %v6203, %v6269
      %v6307 = vadd.f32 %v6204, %v6268
      %v6308 = vadd.f32 %v6205, %v6272
      %v6309 = vadd.f32 %v6206, %v6271
      %v6310 = vadd.f32 %v6207, %v6275
      %v6311 = vadd.f32 %v6208, %v6274
      %v6312 = vlaneseq
      %v6313 = vshrl.u32 %v6312, 7
      %v6314 = vsub.s32 5, %v6313
      %v6315 = vrot.slane %v1120, %v6314
      %v6316 = vmul.f32 %v3064, %v6315
      %v6317 = vmul.f32 %v3065, %v6315
      %v6318 = vmul.f32 %v3066, %v6315
      %v6319 = vmul.f32 %v3067, %v6315
      %v6320 = vmul.f32 %v3068, %v6315
      %v6321 = vmul.f32 %v3069, %v6315
      %v6322 = vmul.f32 %v3070, %v6315
      %v6323 = vmul.f32 %v3071, %v6315
      %v6324 = vmul.f32 %v3072, %v6315
      %v6325 = vmul.f32 %v3073, %v6315
      %v6326 = vmul.f32 %v3074, %v6315
      %v6327 = vmul.f32 %v3075, %v6315
      %v6328 = vmul.f32 %v3076, %v6315
      %v6329 = vmul.f32 %v3077, %v6315
      %v6330 = vmul.f32 %v3078, %v6315
      %v6331 = vmul.f32 %v3079, %v6315
      %v6332 = vmul.f32 %v3080, %v6315
      %v6333 = vmul.f32 %v3081, %v6315
      %v6352 = vrot.slane %v6316, 5
      %v6353 = vrot.slane %v6317, 5
      %v6354 = vsel %vm5836, %v6352, %v6353
      %v6355 = vrot.slane %v6318, 5
      %v6356 = vrot.slane %v6319, 5
      %v6357 = vsel %vm5836, %v6355, %v6356
      %v6358 = vrot.slane %v6320, 5
      %v6359 = vrot.slane %v6321, 5
      %v6360 = vsel %vm5836, %v6358, %v6359
      %v6361 = vrot.slane %v6322, 5
      %v6362 = vrot.slane %v6323, 5
      %v6363 = vsel %vm5836, %v6361, %v6362
      %v6364 = vrot.slane %v6324, 5
      %v6365 = vrot.slane %v6325, 5
      %v6366 = vsel %vm5836, %v6364, %v6365
      %v6367 = vrot.slane %v6326, 5
      %v6368 = vrot.slane %v6327, 5
      %v6369 = vsel %vm5836, %v6367, %v6368
      %v6370 = vrot.slane %v6328, 5
      %v6371 = vrot.slane %v6329, 5
      %v6372 = vsel %vm5836, %v6370, %v6371
      %v6373 = vrot.slane %v6330, 5
      %v6374 = vrot.slane %v6331, 5
      %v6375 = vsel %vm5836, %v6373, %v6374
      %v6376 = vrot.slane %v6332, 5
      %v6377 = vrot.slane %v6333, 5
      %v6378 = vsel %vm5836, %v6376, %v6377
      %v6397 = vadd.f32 %v6294, %v6354
      %v6398 = vadd.f32 %v6295, %v6353
      %v6399 = vadd.f32 %v6296, %v6357
      %v6400 = vadd.f32 %v6297, %v6356
      %v6401 = vadd.f32 %v6298, %v6360
      %v6402 = vadd.f32 %v6299, %v6359
      %v6403 = vadd.f32 %v6300, %v6363
      %v6404 = vadd.f32 %v6301, %v6362
      %v6405 = vadd.f32 %v6302, %v6366
      %v6406 = vadd.f32 %v6303, %v6365
      %v6407 = vadd.f32 %v6304, %v6369
      %v6408 = vadd.f32 %v6305, %v6368
      %v6409 = vadd.f32 %v6306, %v6372
      %v6410 = vadd.f32 %v6307, %v6371
      %v6411 = vadd.f32 %v6308, %v6375
      %v6412 = vadd.f32 %v6309, %v6374
      %v6413 = vadd.f32 %v6310, %v6378
      %v6414 = vadd.f32 %v6311, %v6377
      %vm6415 = vcmask 523264
      %6416 = vst.msk [vmem:[%s325] sm:$0xff] %vm6415, %v6397
      %vm6417 = vcmask 516096
      %6418 = vst.msk [vmem:[%s325 + $0x8] sm:$0x1] %vm6417, %v6398
      %6419 = vst.msk [vmem:[%s325 + $0x10] sm:$0xff] %vm6415, %v6399
      %6420 = vst.msk [vmem:[%s325 + $0x18] sm:$0x1] %vm6417, %v6400
      %6421 = vst.msk [vmem:[%s325 + $0x20] sm:$0xff] %vm6415, %v6401
      %6422 = vst.msk [vmem:[%s325 + $0x28] sm:$0x1] %vm6417, %v6402
      %6423 = vst.msk [vmem:[%s325 + $0x30] sm:$0xff] %vm6415, %v6403
      %6424 = vst.msk [vmem:[%s325 + $0x38] sm:$0x1] %vm6417, %v6404
      %6425 = vst.msk [vmem:[%s325 + $0x40] sm:$0xff] %vm6415, %v6405
      %6426 = vst.msk [vmem:[%s325 + $0x48] sm:$0x1] %vm6417, %v6406
      %6427 = vst.msk [vmem:[%s325 + $0x50] sm:$0xff] %vm6415, %v6407
      %6428 = vst.msk [vmem:[%s325 + $0x58] sm:$0x1] %vm6417, %v6408
      %6429 = vst.msk [vmem:[%s325 + $0x60] sm:$0xff] %vm6415, %v6409
      %6430 = vst.msk [vmem:[%s325 + $0x68] sm:$0x1] %vm6417, %v6410
      %6431 = vst.msk [vmem:[%s325 + $0x70] sm:$0xff] %vm6415, %v6411
      %6432 = vst.msk [vmem:[%s325 + $0x78] sm:$0x1] %vm6417, %v6412
      %6433 = vst.msk [vmem:[%s325 + $0x80] sm:$0xff] %vm6415, %v6413
      %6434 = vst.msk [vmem:[%s325 + $0x88] sm:$0x1] %vm6417, %v6414
      %p6435 = scmp.lt.s32.totalorder %s19, 1
      %s6436 = scalar_select %p6435, %s19, 1
      %s6437 = smul.addr %s6436, 18
      %s6438 = smul.addr %s6437, 8
      %s6439 = scalar_lea.vmem %s8, %s6438
      // Predicated region
      $region53: #{siamfcpp_neck.1} parent=51 // pred_check
        %p6440 = pneg %p215
      $region54: #{siamfcpp_neck.1} parent=51 // pred_check_branch
        %6442 = sbr.rel (%p6440) target = $region56
      $region55: #{siamfcpp_neck.1} parent=51 // pred_region
        _
      $region56: #{siamfcpp_neck.1} parent=51 // pred_fallthru
        _
    $region52: #{siamfcpp_neck.1} parent=5 // pred_fallthru
      _
    %p6443 = scmp.le.s32.totalorder 2, %s14
    // Predicated region
    $region57: #{siamfcpp_neck.1} parent=5 // pred_check
      %p6444 = pneg %p6443
    $region58: #{siamfcpp_neck.1} parent=5 // pred_check_branch
      %6446 = sbr.rel (%p6444) target = $region60
    $region59: #{siamfcpp_neck.1} parent=5 // pred_region
      %s6447 = ssub.s32 %s14, 2
      // Predicated region
      $region61: #{siamfcpp_neck.1} parent=59 // pred_check
        %p6448 = pneg %p221
      $region62: #{siamfcpp_neck.1} parent=59 // pred_check_branch
        %6450 = sbr.rel (%p6448) target = $region64
      $region63: #{siamfcpp_neck.1} parent=59 // pred_region
        %p6451 = scmp.lt.s32.totalorder %s20, 1
        %s6452 = scalar_select %p6451, %s20, 1
        %s6453 = smul.addr %s6452, 18
        %s6454 = smul.addr %s6453, 8
        %s6455 = scalar_lea.vmem %s8, %s6454
      $region64: #{siamfcpp_neck.1} parent=59 // pred_fallthru
        _
    $region60: #{siamfcpp_neck.1} parent=5 // pred_fallthru
      _
  $region6: #{siamfcpp_neck.1} parent=0 // loop_footer
    %s18 = sadd.s32 1, %s14
  $region7: #{siamfcpp_neck.1} parent=0 // loop_footer_branch
    %13 = sbr.rel target = $region3
  $region8: #{siamfcpp_neck.1} parent=0 // loop_exit
    _

</llo_original>
